<compile_context>
chip_gen: v7x
topology: tpu7x:2x2x1
jax: 0.10.0
libtpu: 0.0.40
codegen_flags: <defaults>
</compile_context>

<pallas_src>
import functools

import jax
import jax.numpy as jnp
from jax import lax
from jax.experimental import pallas as pl
from jax.experimental.pallas import tpu as pltpu

GEM_P = 3.0
GEM_EPS = 1e-6
LANE = 128
SUBLANE = 8


def cloud_model_kernel(x_ref, w1_ref, b1_ref, w2_ref, b2_ref, o_ref, *, d_real):
    Bt, N, Cp = x_ref.shape          # Bt clouds of N points, Cp = input channels padded to 128
    Hp = w1_ref.shape[1]             # hidden channels, padded to 128 lanes
    Dp = w2_ref.shape[1]             # descriptor channels, padded to 128 lanes

    # Backbone layer 1 (point-wise conv): single lane-dense MXU matmul.  Rows 4..127
    # of w1 are zero, so the zero-padded input lanes are inert -- no in-kernel mask.
    x2 = x_ref[...].reshape(Bt * N, Cp)                                  # (Bt*N, 128)
    h = jnp.maximum(
        jnp.dot(x2, w1_ref[...], preferred_element_type=jnp.float32) + b1_ref[...],
        0.0,
    )                                                                    # (Bt*N, Hp)

    # Backbone layer 2 (point-wise conv): lane-dense 128x128 MXU matmul, f32 accumulate.
    f = jnp.dot(h, w2_ref[...], preferred_element_type=jnp.float32) + b2_ref[...]

    # Head: GeM pooling (p=3) over points + L2 normalization.
    # ReLU folded into the clamp: max(max(f,0), eps) == max(f, eps).
    # Cube via two VPU muls; the transcendental 1/p root touches only the (Bt, Dp) tile.
    fc = jnp.maximum(f, GEM_EPS)                                         # (Bt*N, Dp)
    fc3 = (fc * fc * fc).reshape(Bt, N, Dp)
    pooled = jnp.mean(fc3, axis=1) ** (1.0 / GEM_P)                      # (Bt, Dp)

    # Padded descriptor lanes hold eps**(1) after the clamp; zero them so the L2 norm
    # is computed over the real D channels only.
    lane = lax.broadcasted_iota(jnp.int32, pooled.shape, 1)
    pooled = jnp.where(lane < d_real, pooled, 0.0)
    inv_norm = lax.rsqrt(jnp.sum(pooled * pooled, axis=-1, keepdims=True) + 1e-12)
    o_ref[...] = pooled * inv_norm                                       # lane-dense store


def _round_up(x, m):
    return ((x + m - 1) // m) * m


def _pick_schedule(batch):
    """Single serial grid step on 1-TC parts (v5e/v6e); split batch across v7x's 2 TCs."""
    try:
        kind = jax.devices()[0].device_kind.lower()
    except Exception:
        kind = ""
    if "v7" in kind and batch >= 2:
        return 2, (pltpu.CORE_PARALLEL,)
    return 1, ("arbitrary",)


def cloud_model_forward(feats, coords, w1, b1, w2, b2, *, grid_steps=None, dim_semantics=None):
    """feats: [B, N, C_in] f32; coords: [B, N, 3] (unused by the dense point-wise backbone)."""
    del coords
    B, N, C = feats.shape
    H = w1.shape[1]
    D = w2.shape[1]

    if grid_steps is None or dim_semantics is None:
        grid_steps, dim_semantics = _pick_schedule(B)

    # Lane-dense zero padding of every channel dim (costs nothing on-chip: a 4- or
    # 32-lane f32 array already occupies full vregs) -> unmasked (8,128) input DMAs,
    # dense MXU contractions, unmasked output stores.  Zero rows/cols keep math exact.
    Cp = _round_up(C, LANE)
    Hp = _round_up(H, LANE)
    Dp = _round_up(D, LANE)
    feats_p = jnp.pad(feats, ((0, 0), (0, 0), (0, Cp - C)))
    w1p = jnp.pad(w1, ((0, Cp - C), (0, Hp - H)))
    b1p = jnp.pad(b1, ((0, 0), (0, Hp - H)))
    w2p = jnp.pad(w2, ((0, Hp - H), (0, Dp - D)))
    b2p = jnp.pad(b2, ((0, 0), (0, Dp - D)))

    # Pad the batch so every grid step gets an identical sublane-aligned (Bt, .) block;
    # padded (all-zero) clouds are sliced off at the end.
    Bt = _round_up(pl.cdiv(B, grid_steps), SUBLANE)
    B_pad = Bt * grid_steps
    if B_pad != B:
        feats_p = jnp.pad(feats_p, ((0, B_pad - B), (0, 0), (0, 0)))

    kernel = functools.partial(cloud_model_kernel, d_real=D)

    def call(steps, semantics, x):
        bt = x.shape[0] // steps
        return pl.pallas_call(
            kernel,
            out_shape=jax.ShapeDtypeStruct((x.shape[0], Dp), jnp.float32),
            grid_spec=pltpu.PrefetchScalarGridSpec(
                num_scalar_prefetch=0,
                grid=(steps,),
                in_specs=[
                    pl.BlockSpec((bt, N, Cp), lambda b: (b, 0, 0)),   # bt clouds per step
                    pl.BlockSpec((Cp, Hp), lambda b: (0, 0)),          # constant index_maps ->
                    pl.BlockSpec((1, Hp), lambda b: (0, 0)),           #   weights stay resident,
                    pl.BlockSpec((Hp, Dp), lambda b: (0, 0)),          #   no per-step re-DMA
                    pl.BlockSpec((1, Dp), lambda b: (0, 0)),
                ],
                out_specs=pl.BlockSpec((bt, Dp), lambda b: (b, 0)),    # (8,128)-aligned slab
            ),
            compiler_params=pltpu.CompilerParams(dimension_semantics=semantics),
        )(x, w1p, b1p, w2p, b2p)

    try:
        desc_padded = call(grid_steps, dim_semantics, feats_p)
    except Exception:
        # If the multi-core (v7x CORE_PARALLEL) schedule does not lower, fall back to
        # one serial grid step, which is correct and near-optimal on 1-TC parts.
        desc_padded = call(1, ("arbitrary",), feats_p)

    # Slice off padded batch rows and padded descriptor lanes outside the kernel.
    return {"final_descriptor": desc_padded[:B, :D]}


def reference_forward(feats, w1, b1, w2, b2):
    h = jnp.maximum(feats @ w1 + b1, 0.0)
    f = jnp.maximum(h @ w2 + b2, 0.0)
    fc = jnp.maximum(f, GEM_EPS)
    pooled = jnp.mean(fc ** GEM_P, axis=1) ** (1.0 / GEM_P)
    return pooled / jnp.sqrt(jnp.sum(pooled * pooled, axis=-1, keepdims=True) + 1e-12)


if __name__ == "__main__":
    B, N, C_IN, HIDDEN, DESC = 16, 64, 4, 32, 32

    key = jax.random.PRNGKey(0)
    k_feats, k_coords, k_w1, k_b1, k_w2, k_b2 = jax.random.split(key, 6)

    # batch = {'pointclouds_lidar_feats': [B, N, C_in], 'pointclouds_lidar_coords': [B, N, 3]}
    feats = jax.random.normal(k_feats, (B, N, C_IN), dtype=jnp.float32)
    coords = jax.random.randint(k_coords, (B, N, 3), minval=0, maxval=128).astype(jnp.int32)

    # Deterministic synthetic parameters (backbone: C_in -> H -> D point-wise layers).
    w1 = 0.1 * jax.random.normal(k_w1, (C_IN, HIDDEN), dtype=jnp.float32)
    b1 = 0.01 * jax.random.normal(k_b1, (1, HIDDEN), dtype=jnp.float32)
    w2 = 0.1 * jax.random.normal(k_w2, (HIDDEN, DESC), dtype=jnp.float32)
    b2 = 0.01 * jax.random.normal(k_b2, (1, DESC), dtype=jnp.float32)

    out = cloud_model_forward(feats, coords, w1, b1, w2, b2)
    desc = jax.block_until_ready(out["final_descriptor"])

    ref = reference_forward(feats, w1, b1, w2, b2)
    assert desc.shape == (B, DESC)
    assert jnp.allclose(desc, ref, atol=1e-4, rtol=1e-4), "mismatch vs pure-JAX reference"

    print("KERNEL_OK")
</pallas_src>

<mosaic_0001>
module attributes {stable_mosaic.version = 11 : i64} {
  func.func @cloud_model_kernel(%arg0: i32, %arg1: memref<16x64x128xf32, #tpu.memory_space<vmem>>, %arg2: memref<128x128xf32, #tpu.memory_space<vmem>>, %arg3: memref<1x128xf32, #tpu.memory_space<vmem>>, %arg4: memref<128x128xf32, #tpu.memory_space<vmem>>, %arg5: memref<1x128xf32, #tpu.memory_space<vmem>>, %arg6: memref<16x128xf32, #tpu.memory_space<vmem>>) attributes {dimension_semantics = [#tpu.dimension_semantics<arbitrary>], iteration_bounds = array<i64: 1>, scalar_prefetch = 0 : i64, scratch_operands = 0 : i64, tpu.core_type = #tpu.core_type<tc>, window_params = [{transform_indices = @transform_0, window_bounds = array<i64: 16, 64, 128>}, {pipeline_mode = #tpu.pipeline_mode<synchronous>, transform_indices = @transform_1, window_bounds = array<i64: 128, 128>}, {pipeline_mode = #tpu.pipeline_mode<synchronous>, transform_indices = @transform_2, window_bounds = array<i64: 1, 128>}, {pipeline_mode = #tpu.pipeline_mode<synchronous>, transform_indices = @transform_3, window_bounds = array<i64: 128, 128>}, {pipeline_mode = #tpu.pipeline_mode<synchronous>, transform_indices = @transform_4, window_bounds = array<i64: 1, 128>}, {transform_indices = @transform_5, window_bounds = array<i64: 16, 128>}]} {
    %c0 = arith.constant 0 : index
    %c0_0 = arith.constant 0 : index
    %c0_1 = arith.constant 0 : index
    %0 = vector.load %arg1[%c0, %c0_0, %c0_1] : memref<16x64x128xf32, #tpu.memory_space<vmem>>, vector<16x64x128xf32>
    %1 = vector.shape_cast %0 : vector<16x64x128xf32> to vector<1024x128xf32>
    %c0_2 = arith.constant 0 : index
    %c0_3 = arith.constant 0 : index
    %2 = vector.load %arg2[%c0_2, %c0_3] : memref<128x128xf32, #tpu.memory_space<vmem>>, vector<128x128xf32>
    %cst = arith.constant dense<0.000000e+00> : vector<1024x128xf32>
    %3 = tpu.matmul %1, %2, %cst {dimension_numbers = #tpu.dot_dimension_numbers<[1], [0], [0], [1], [0, 0, 1, 1], [], []>} : vector<1024x128xf32>, vector<128x128xf32>, vector<1024x128xf32> -> vector<1024x128xf32>
    %c0_4 = arith.constant 0 : index
    %c0_5 = arith.constant 0 : index
    %4 = vector.load %arg3[%c0_4, %c0_5] : memref<1x128xf32, #tpu.memory_space<vmem>>, vector<1x128xf32>
    %5 = vector.broadcast %4 : vector<1x128xf32> to vector<1024x128xf32>
    %6 = arith.addf %3, %5 : vector<1024x128xf32>
    %cst_6 = arith.constant 0.000000e+00 : f32
    %7 = vector.broadcast %cst_6 : f32 to vector<1024x128xf32>
    %8 = arith.maximumf %6, %7 : vector<1024x128xf32>
    %c0_7 = arith.constant 0 : index
    %c0_8 = arith.constant 0 : index
    %9 = vector.load %arg4[%c0_7, %c0_8] : memref<128x128xf32, #tpu.memory_space<vmem>>, vector<128x128xf32>
    %cst_9 = arith.constant dense<0.000000e+00> : vector<1024x128xf32>
    %10 = tpu.matmul %8, %9, %cst_9 {dimension_numbers = #tpu.dot_dimension_numbers<[1], [0], [0], [1], [0, 0, 1, 1], [], []>} : vector<1024x128xf32>, vector<128x128xf32>, vector<1024x128xf32> -> vector<1024x128xf32>
    %c0_10 = arith.constant 0 : index
    %c0_11 = arith.constant 0 : index
    %11 = vector.load %arg5[%c0_10, %c0_11] : memref<1x128xf32, #tpu.memory_space<vmem>>, vector<1x128xf32>
    %12 = vector.broadcast %11 : vector<1x128xf32> to vector<1024x128xf32>
    %13 = arith.addf %10, %12 : vector<1024x128xf32>
    %cst_12 = arith.constant 9.99999997E-7 : f32
    %14 = vector.broadcast %cst_12 : f32 to vector<1024x128xf32>
    %15 = arith.maximumf %13, %14 : vector<1024x128xf32>
    %16 = arith.mulf %15, %15 : vector<1024x128xf32>
    %17 = arith.mulf %16, %15 : vector<1024x128xf32>
    %18 = vector.shape_cast %17 : vector<1024x128xf32> to vector<16x64x128xf32>
    %cst_13 = arith.constant dense<0.000000e+00> : vector<16x128xf32>
    %19 = vector.multi_reduction <add>, %18, %cst_13 [1] : vector<16x64x128xf32> to vector<16x128xf32>
    %cst_14 = arith.constant 6.400000e+01 : f32
    %20 = vector.broadcast %cst_14 : f32 to vector<16x128xf32>
    %21 = arith.divf %19, %20 : vector<16x128xf32>
    %cst_15 = arith.constant 0.333333343 : f32
    %22 = vector.broadcast %cst_15 : f32 to vector<16x128xf32>
    %23 = math.powf %21, %22 : vector<16x128xf32>
    %24 = tpu.iota {dimensions = array<i32: 1>} : vector<16x128xi32>
    %c32_i32 = arith.constant 32 : i32
    %25 = vector.broadcast %c32_i32 : i32 to vector<16x128xi32>
    %26 = arith.cmpi slt, %24, %25 : vector<16x128xi32>
    %cst_16 = arith.constant 0.000000e+00 : f32
    %27 = vector.broadcast %cst_16 : f32 to vector<16x128xf32>
    %28 = arith.select %26, %23, %27 : vector<16x128xi1>, vector<16x128xf32>
    %29 = arith.mulf %28, %28 : vector<16x128xf32>
    %cst_17 = arith.constant dense<0.000000e+00> : vector<16xf32>
    %30 = vector.multi_reduction <add>, %29, %cst_17 [1] : vector<16x128xf32> to vector<16xf32>
    %31 = vector.shape_cast %30 : vector<16xf32> to vector<16x1xf32>
    %cst_18 = arith.constant 9.99999996E-13 : f32
    %32 = vector.broadcast %cst_18 : f32 to vector<16x1xf32>
    %33 = arith.addf %31, %32 : vector<16x1xf32>
    %34 = math.rsqrt %33 : vector<16x1xf32>
    %35 = vector.broadcast %34 : vector<16x1xf32> to vector<16x128xf32>
    %36 = arith.mulf %28, %35 : vector<16x128xf32>
    %c0_19 = arith.constant 0 : index
    %c0_20 = arith.constant 0 : index
    %37 = vector.load %arg6[%c0_19, %c0_20] : memref<16x128xf32, #tpu.memory_space<vmem>>, vector<16x128xf32>
    tpu.vector_store %arg6[%c0_19, %c0_20], %36 {strides = array<i32>} : memref<16x128xf32, #tpu.memory_space<vmem>>, vector<16x128xf32>,
    return
  }
  func.func @transform_0(%arg0: i32) -> (i32, i32, i32) {
    %c0_i32 = arith.constant 0 : i32
    %c0_i32_0 = arith.constant 0 : i32
    %c0_i32_1 = arith.constant 0 : i32
    return %arg0, %c0_i32, %c0_i32_0 : i32, i32, i32
  }
  func.func @transform_1(%arg0: i32) -> (i32, i32) {
    %c0_i32 = arith.constant 0 : i32
    %c0_i32_0 = arith.constant 0 : i32
    %c0_i32_1 = arith.constant 0 : i32
    return %c0_i32, %c0_i32_0 : i32, i32
  }
  func.func @transform_2(%arg0: i32) -> (i32, i32) {
    %c0_i32 = arith.constant 0 : i32
    %c0_i32_0 = arith.constant 0 : i32
    %c0_i32_1 = arith.constant 0 : i32
    return %c0_i32, %c0_i32_0 : i32, i32
  }
  func.func @transform_3(%arg0: i32) -> (i32, i32) {
    %c0_i32 = arith.constant 0 : i32
    %c0_i32_0 = arith.constant 0 : i32
    %c0_i32_1 = arith.constant 0 : i32
    return %c0_i32, %c0_i32_0 : i32, i32
  }
  func.func @transform_4(%arg0: i32) -> (i32, i32) {
    %c0_i32 = arith.constant 0 : i32
    %c0_i32_0 = arith.constant 0 : i32
    %c0_i32_1 = arith.constant 0 : i32
    return %c0_i32, %c0_i32_0 : i32, i32
  }
  func.func @transform_5(%arg0: i32) -> (i32, i32) {
    %c0_i32 = arith.constant 0 : i32
    %c0_i32_0 = arith.constant 0 : i32
    return %arg0, %c0_i32 : i32, i32
  }
}

module attributes {stable_mosaic.version = 11 : i64} {
  func.func @cloud_model_kernel(%arg0: i32, %arg1: memref<16x64x128xf32, #tpu.memory_space<vmem>>, %arg2: memref<128x128xf32, #tpu.memory_space<vmem>>, %arg3: memref<1x128xf32, #tpu.memory_space<vmem>>, %arg4: memref<128x128xf32, #tpu.memory_space<vmem>>, %arg5: memref<1x128xf32, #tpu.memory_space<vmem>>, %arg6: memref<16x128xf32, #tpu.memory_space<vmem>>) attributes {dimension_semantics = [#tpu.dimension_semantics<arbitrary>], iteration_bounds = array<i64: 1>, scalar_prefetch = 0 : i64, scratch_operands = 0 : i64, tpu.core_type = #tpu.core_type<tc>, window_params = [{transform_indices = @transform_0, window_bounds = array<i64: 16, 64, 128>}, {pipeline_mode = #tpu.pipeline_mode<synchronous>, transform_indices = @transform_1, window_bounds = array<i64: 128, 128>}, {pipeline_mode = #tpu.pipeline_mode<synchronous>, transform_indices = @transform_2, window_bounds = array<i64: 1, 128>}, {pipeline_mode = #tpu.pipeline_mode<synchronous>, transform_indices = @transform_3, window_bounds = array<i64: 128, 128>}, {pipeline_mode = #tpu.pipeline_mode<synchronous>, transform_indices = @transform_4, window_bounds = array<i64: 1, 128>}, {transform_indices = @transform_5, window_bounds = array<i64: 16, 128>}]} {
    %c0 = arith.constant 0 : index
    %c0_0 = arith.constant 0 : index
    %c0_1 = arith.constant 0 : index
    %0 = vector.load %arg1[%c0, %c0_0, %c0_1] : memref<16x64x128xf32, #tpu.memory_space<vmem>>, vector<16x64x128xf32>
    %1 = vector.shape_cast %0 : vector<16x64x128xf32> to vector<1024x128xf32>
    %c0_2 = arith.constant 0 : index
    %c0_3 = arith.constant 0 : index
    %2 = vector.load %arg2[%c0_2, %c0_3] : memref<128x128xf32, #tpu.memory_space<vmem>>, vector<128x128xf32>
    %cst = arith.constant dense<0.000000e+00> : vector<1024x128xf32>
    %3 = tpu.matmul %1, %2, %cst {dimension_numbers = #tpu.dot_dimension_numbers<[1], [0], [0], [1], [0, 0, 1, 1], [], []>} : vector<1024x128xf32>, vector<128x128xf32>, vector<1024x128xf32> -> vector<1024x128xf32>
    %c0_4 = arith.constant 0 : index
    %c0_5 = arith.constant 0 : index
    %4 = vector.load %arg3[%c0_4, %c0_5] : memref<1x128xf32, #tpu.memory_space<vmem>>, vector<1x128xf32>
    %5 = vector.broadcast %4 : vector<1x128xf32> to vector<1024x128xf32>
    %6 = arith.addf %3, %5 : vector<1024x128xf32>
    %cst_6 = arith.constant 0.000000e+00 : f32
    %7 = vector.broadcast %cst_6 : f32 to vector<1024x128xf32>
    %8 = arith.maximumf %6, %7 : vector<1024x128xf32>
    %c0_7 = arith.constant 0 : index
    %c0_8 = arith.constant 0 : index
    %9 = vector.load %arg4[%c0_7, %c0_8] : memref<128x128xf32, #tpu.memory_space<vmem>>, vector<128x128xf32>
    %cst_9 = arith.constant dense<0.000000e+00> : vector<1024x128xf32>
    %10 = tpu.matmul %8, %9, %cst_9 {dimension_numbers = #tpu.dot_dimension_numbers<[1], [0], [0], [1], [0, 0, 1, 1], [], []>} : vector<1024x128xf32>, vector<128x128xf32>, vector<1024x128xf32> -> vector<1024x128xf32>
    %c0_10 = arith.constant 0 : index
    %c0_11 = arith.constant 0 : index
    %11 = vector.load %arg5[%c0_10, %c0_11] : memref<1x128xf32, #tpu.memory_space<vmem>>, vector<1x128xf32>
    %12 = vector.broadcast %11 : vector<1x128xf32> to vector<1024x128xf32>
    %13 = arith.addf %10, %12 : vector<1024x128xf32>
    %cst_12 = arith.constant 9.99999997E-7 : f32
    %14 = vector.broadcast %cst_12 : f32 to vector<1024x128xf32>
    %15 = arith.maximumf %13, %14 : vector<1024x128xf32>
    %16 = arith.mulf %15, %15 : vector<1024x128xf32>
    %17 = arith.mulf %16, %15 : vector<1024x128xf32>
    %18 = vector.shape_cast %17 : vector<1024x128xf32> to vector<16x64x128xf32>
    %cst_13 = arith.constant dense<0.000000e+00> : vector<16x128xf32>
    %19 = vector.multi_reduction <add>, %18, %cst_13 [1] : vector<16x64x128xf32> to vector<16x128xf32>
    %cst_14 = arith.constant 6.400000e+01 : f32
    %20 = vector.broadcast %cst_14 : f32 to vector<16x128xf32>
    %21 = arith.divf %19, %20 : vector<16x128xf32>
    %cst_15 = arith.constant 0.333333343 : f32
    %22 = vector.broadcast %cst_15 : f32 to vector<16x128xf32>
    %23 = math.powf %21, %22 : vector<16x128xf32>
    %24 = tpu.iota {dimensions = array<i32: 1>} : vector<16x128xi32>
    %c32_i32 = arith.constant 32 : i32
    %25 = vector.broadcast %c32_i32 : i32 to vector<16x128xi32>
    %26 = arith.cmpi slt, %24, %25 : vector<16x128xi32>
    %cst_16 = arith.constant 0.000000e+00 : f32
    %27 = vector.broadcast %cst_16 : f32 to vector<16x128xf32>
    %28 = arith.select %26, %23, %27 : vector<16x128xi1>, vector<16x128xf32>
    %29 = arith.mulf %28, %28 : vector<16x128xf32>
    %cst_17 = arith.constant dense<0.000000e+00> : vector<16xf32>
    %30 = vector.multi_reduction <add>, %29, %cst_17 [1] : vector<16x128xf32> to vector<16xf32>
    %31 = vector.shape_cast %30 : vector<16xf32> to vector<16x1xf32>
    %cst_18 = arith.constant 9.99999996E-13 : f32
    %32 = vector.broadcast %cst_18 : f32 to vector<16x1xf32>
    %33 = arith.addf %31, %32 : vector<16x1xf32>
    %34 = math.rsqrt %33 : vector<16x1xf32>
    %35 = vector.broadcast %34 : vector<16x1xf32> to vector<16x128xf32>
    %36 = arith.mulf %28, %35 : vector<16x128xf32>
    %c0_19 = arith.constant 0 : index
    %c0_20 = arith.constant 0 : index
    %37 = vector.load %arg6[%c0_19, %c0_20] : memref<16x128xf32, #tpu.memory_space<vmem>>, vector<16x128xf32>
    tpu.vector_store %arg6[%c0_19, %c0_20], %36 {strides = array<i32>} : memref<16x128xf32, #tpu.memory_space<vmem>>, vector<16x128xf32>,
    return
  }
  func.func @transform_0(%arg0: i32) -> (i32, i32, i32) {
    %c0_i32 = arith.constant 0 : i32
    %c0_i32_0 = arith.constant 0 : i32
    %c0_i32_1 = arith.constant 0 : i32
    return %arg0, %c0_i32, %c0_i32_0 : i32, i32, i32
  }
  func.func @transform_1(%arg0: i32) -> (i32, i32) {
    %c0_i32 = arith.constant 0 : i32
    %c0_i32_0 = arith.constant 0 : i32
    %c0_i32_1 = arith.constant 0 : i32
    return %c0_i32, %c0_i32_0 : i32, i32
  }
  func.func @transform_2(%arg0: i32) -> (i32, i32) {
    %c0_i32 = arith.constant 0 : i32
    %c0_i32_0 = arith.constant 0 : i32
    %c0_i32_1 = arith.constant 0 : i32
    return %c0_i32, %c0_i32_0 : i32, i32
  }
  func.func @transform_3(%arg0: i32) -> (i32, i32) {
    %c0_i32 = arith.constant 0 : i32
    %c0_i32_0 = arith.constant 0 : i32
    %c0_i32_1 = arith.constant 0 : i32
    return %c0_i32, %c0_i32_0 : i32, i32
  }
  func.func @transform_4(%arg0: i32) -> (i32, i32) {
    %c0_i32 = arith.constant 0 : i32
    %c0_i32_0 = arith.constant 0 : i32
    %c0_i32_1 = arith.constant 0 : i32
    return %c0_i32, %c0_i32_0 : i32, i32
  }
  func.func @transform_5(%arg0: i32) -> (i32, i32) {
    %c0_i32 = arith.constant 0 : i32
    %c0_i32_0 = arith.constant 0 : i32
    return %arg0, %c0_i32 : i32, i32
  }
}

</mosaic_0001>

<llo_original>
// kernel: tpu_custom_call.1
$region0: #{tpu_custom_call.1}
  #allocation0 [shape = 'u32[]', space=smem, size = 0x4, offset = 0x4, fixed_abs, tag = 'smem constant byte address 0x4 - core index']
  #allocation1 [shape = 'u32[144,128]{1,0:T(1,128)}', space=vmem, size = 0x12000, scoped, tag = 'internal scratch']
  %s0 = inlined_call_operand.hbm [shape: f32[16,64,128], index: 0, kind: input, shape index: {}]
  %s1 = inlined_call_operand.hbm [shape: f32[128,128], index: 1, kind: input, shape index: {}]
  %s2 = inlined_call_operand.vmem [shape: f32[1,128], index: 2, kind: input, shape index: {}]
  %s3 = inlined_call_operand.hbm [shape: f32[128,128], index: 3, kind: input, shape index: {}]
  %s4 = inlined_call_operand.vmem [shape: f32[1,128], index: 4, kind: input, shape index: {}]
  %s5 = inlined_call_operand.hbm [shape: f32[16,128], index: 5, kind: output, shape index: {}]
  %s6 = sld [smem:[#allocation0]]
  $region42: #{tpu_custom_call.1} parent=0
    _
  %s8 = ssub.s32 1, %s6
  %s9 = scalar_select 0, %s8, %s6
  $region1: #{tpu_custom_call.1} parent=0
    #allocation2 [shape = 'u8[524288]{0}', space=vmem, size = 0x80000, scoped, tag = 'input window, operand 0, single buffered']
    #allocation3 [shape = 's32[1]{0}', space=sflag, size = 0x4, scoped, tag = 'scoped memory for tpu_custom_call.1']
    #allocation4 [shape = 's32[1]{0}', space=sflag, size = 0x4, scoped, tag = 'scoped memory for tpu_custom_call.1']
    #allocation5 [shape = 'u8[65536]{0}', space=vmem, size = 0x10000, scoped, tag = 'input window, operand 1, single buffered']
    #allocation6 [shape = 's32[1]{0}', space=sflag, size = 0x4, scoped, tag = 'scoped memory for tpu_custom_call.1']
    #allocation7 [shape = 'u8[65536]{0}', space=vmem, size = 0x10000, scoped, tag = 'input window, operand 3, single buffered']
    #allocation8 [shape = 'u8[8192]{0}', space=vmem, size = 0x2000, scoped, tag = 'output window, operand 0, single buffered']
    %10 = vsyncpa [#allocation3], 0
    %11 = vsyncpa [#allocation6], 0
    %12 = vsyncpa [#allocation4], 0
    // Predicated region
    $region2: #{tpu_custom_call.1} parent=1 // pred_check
      _
    $region3: #{tpu_custom_call.1} parent=1 // pred_check_branch
      %14 = sbr.rel (0) target = $region5
    $region4: #{tpu_custom_call.1} parent=1 // pred_region
      %s16 = ssub.s32 16384, 16384
      %17 = vsyncadd [#allocation3], %s16
      %s18 = sshll.u32 [#allocation2], 4
      %s19 = int_to_ptr.vmem [resolvable:$true] %s18
      %24 = dma.hbm_to_vmem [thread:$0]  %s0, 16384, %s19, [#allocation3], 128, 128, 8
    $region5: #{tpu_custom_call.1} parent=1 // pred_fallthru
      _
    // Predicated region
    $region6: #{tpu_custom_call.1} parent=1 // pred_check
      _
    $region7: #{tpu_custom_call.1} parent=1 // pred_check_branch
      %26 = sbr.rel (0) target = $region9
    $region8: #{tpu_custom_call.1} parent=1 // pred_region
      %s28 = ssub.s32 2048, 2048
      %29 = vsyncadd [#allocation6], %s28
      %s30 = sshll.u32 [#allocation5], 4
      %s31 = int_to_ptr.vmem [resolvable:$true] %s30
      %36 = dma.hbm_to_vmem [thread:$0]  %s1, 2048, %s31, [#allocation6], 128, 128, 8
    $region9: #{tpu_custom_call.1} parent=1 // pred_fallthru
      _
    // Predicated region
    $region10: #{tpu_custom_call.1} parent=1 // pred_check
      _
    $region11: #{tpu_custom_call.1} parent=1 // pred_check_branch
      %38 = sbr.rel (0) target = $region13
    $region12: #{tpu_custom_call.1} parent=1 // pred_region
      _
    $region13: #{tpu_custom_call.1} parent=1 // pred_fallthru
      _
    // Predicated region
    $region14: #{tpu_custom_call.1} parent=1 // pred_check
      _
    $region15: #{tpu_custom_call.1} parent=1 // pred_check_branch
      %40 = sbr.rel (0) target = $region17
    $region16: #{tpu_custom_call.1} parent=1 // pred_region
      %s42 = ssub.s32 2048, 2048
      %43 = vsyncadd [#allocation6], %s42
      %s44 = sshll.u32 [#allocation7], 4
      %s45 = int_to_ptr.vmem [resolvable:$true] %s44
      %50 = dma.hbm_to_vmem [thread:$0]  %s3, 2048, %s45, [#allocation6], 128, 128, 8
    $region17: #{tpu_custom_call.1} parent=1 // pred_fallthru
      _
    // Predicated region
    $region18: #{tpu_custom_call.1} parent=1 // pred_check
      _
    $region19: #{tpu_custom_call.1} parent=1 // pred_check_branch
      %52 = sbr.rel (0) target = $region21
    $region20: #{tpu_custom_call.1} parent=1 // pred_region
      _
    $region21: #{tpu_custom_call.1} parent=1 // pred_fallthru
      _
    // Predicated region
    $region22: #{tpu_custom_call.1} parent=1 // pred_check
      _
    $region23: #{tpu_custom_call.1} parent=1 // pred_check_branch
      %54 = sbr.rel (0) target = $region25
    $region24: #{tpu_custom_call.1} parent=1 // pred_region
      %55 = dma.done [#allocation3], 16384
    $region25: #{tpu_custom_call.1} parent=1 // pred_fallthru
      _
    // Predicated region
    $region26: #{tpu_custom_call.1} parent=1 // pred_check
      _
    $region27: #{tpu_custom_call.1} parent=1 // pred_check_branch
      %57 = sbr.rel (0) target = $region29
    $region28: #{tpu_custom_call.1} parent=1 // pred_region
      %58 = dma.done [#allocation6], 2048
    $region29: #{tpu_custom_call.1} parent=1 // pred_fallthru
      _
    // Predicated region
    $region30: #{tpu_custom_call.1} parent=1 // pred_check
      _
    $region31: #{tpu_custom_call.1} parent=1 // pred_check_branch
      %60 = sbr.rel (0) target = $region33
    $region32: #{tpu_custom_call.1} parent=1 // pred_region
      %61 = dma.done [#allocation6], 2048
    $region33: #{tpu_custom_call.1} parent=1 // pred_fallthru
      _
    %v62 = vld [vmem:[#allocation2] sm:$0xff]
    %v63 = vld [vmem:[#allocation2 + $0x8] sm:$0xff]
    %v64 = vld [vmem:[#allocation2 + $0x10] sm:$0xff]
    %v65 = vld [vmem:[#allocation2 + $0x18] sm:$0xff]
    %v66 = vld [vmem:[#allocation2 + $0x20] sm:$0xff]
    %v67 = vld [vmem:[#allocation2 + $0x28] sm:$0xff]
    %v68 = vld [vmem:[#allocation2 + $0x30] sm:$0xff]
    %v69 = vld [vmem:[#allocation2 + $0x38] sm:$0xff]
    %v70 = vld [vmem:[#allocation2 + $0x40] sm:$0xff]
    %v71 = vld [vmem:[#allocation2 + $0x48] sm:$0xff]
    %v72 = vld [vmem:[#allocation2 + $0x50] sm:$0xff]
    %v73 = vld [vmem:[#allocation2 + $0x58] sm:$0xff]
    %v74 = vld [vmem:[#allocation2 + $0x60] sm:$0xff]
    %v75 = vld [vmem:[#allocation2 + $0x68] sm:$0xff]
    %v76 = vld [vmem:[#allocation2 + $0x70] sm:$0xff]
    %v77 = vld [vmem:[#allocation2 + $0x78] sm:$0xff]
    %v78 = vld [vmem:[#allocation2 + $0x80] sm:$0xff]
    %v79 = vld [vmem:[#allocation2 + $0x88] sm:$0xff]
    %v80 = vld [vmem:[#allocation2 + $0x90] sm:$0xff]
    %v81 = vld [vmem:[#allocation2 + $0x98] sm:$0xff]
    %v82 = vld [vmem:[#allocation2 + $0xa0] sm:$0xff]
    %v83 = vld [vmem:[#allocation2 + $0xa8] sm:$0xff]
    %v84 = vld [vmem:[#allocation2 + $0xb0] sm:$0xff]
    %v85 = vld [vmem:[#allocation2 + $0xb8] sm:$0xff]
    %v86 = vld [vmem:[#allocation2 + $0xc0] sm:$0xff]
    %v87 = vld [vmem:[#allocation2 + $0xc8] sm:$0xff]
    %v88 = vld [vmem:[#allocation2 + $0xd0] sm:$0xff]
    %v89 = vld [vmem:[#allocation2 + $0xd8] sm:$0xff]
    %v90 = vld [vmem:[#allocation2 + $0xe0] sm:$0xff]
    %v91 = vld [vmem:[#allocation2 + $0xe8] sm:$0xff]
    %v92 = vld [vmem:[#allocation2 + $0xf0] sm:$0xff]
    %v93 = vld [vmem:[#allocation2 + $0xf8] sm:$0xff]
    %v94 = vld [vmem:[#allocation2 + $0x100] sm:$0xff]
    %v95 = vld [vmem:[#allocation2 + $0x108] sm:$0xff]
    %v96 = vld [vmem:[#allocation2 + $0x110] sm:$0xff]
    %v97 = vld [vmem:[#allocation2 + $0x118] sm:$0xff]
    %v98 = vld [vmem:[#allocation2 + $0x120] sm:$0xff]
    %v99 = vld [vmem:[#allocation2 + $0x128] sm:$0xff]
    %v100 = vld [vmem:[#allocation2 + $0x130] sm:$0xff]
    %v101 = vld [vmem:[#allocation2 + $0x138] sm:$0xff]
    %v102 = vld [vmem:[#allocation2 + $0x140] sm:$0xff]
    %v103 = vld [vmem:[#allocation2 + $0x148] sm:$0xff]
    %v104 = vld [vmem:[#allocation2 + $0x150] sm:$0xff]
    %v105 = vld [vmem:[#allocation2 + $0x158] sm:$0xff]
    %v106 = vld [vmem:[#allocation2 + $0x160] sm:$0xff]
    %v107 = vld [vmem:[#allocation2 + $0x168] sm:$0xff]
    %v108 = vld [vmem:[#allocation2 + $0x170] sm:$0xff]
    %v109 = vld [vmem:[#allocation2 + $0x178] sm:$0xff]
    %v110 = vld [vmem:[#allocation2 + $0x180] sm:$0xff]
    %v111 = vld [vmem:[#allocation2 + $0x188] sm:$0xff]
    %v112 = vld [vmem:[#allocation2 + $0x190] sm:$0xff]
    %v113 = vld [vmem:[#allocation2 + $0x198] sm:$0xff]
    %v114 = vld [vmem:[#allocation2 + $0x1a0] sm:$0xff]
    %v115 = vld [vmem:[#allocation2 + $0x1a8] sm:$0xff]
    %v116 = vld [vmem:[#allocation2 + $0x1b0] sm:$0xff]
    %v117 = vld [vmem:[#allocation2 + $0x1b8] sm:$0xff]
    %v118 = vld [vmem:[#allocation2 + $0x1c0] sm:$0xff]
    %v119 = vld [vmem:[#allocation2 + $0x1c8] sm:$0xff]
    %v120 = vld [vmem:[#allocation2 + $0x1d0] sm:$0xff]
    %v121 = vld [vmem:[#allocation2 + $0x1d8] sm:$0xff]
    %v122 = vld [vmem:[#allocation2 + $0x1e0] sm:$0xff]
    %v123 = vld [vmem:[#allocation2 + $0x1e8] sm:$0xff]
    %v124 = vld [vmem:[#allocation2 + $0x1f0] sm:$0xff]
    %v125 = vld [vmem:[#allocation2 + $0x1f8] sm:$0xff]
    %v126 = vld [vmem:[#allocation2 + $0x200] sm:$0xff]
    %v127 = vld [vmem:[#allocation2 + $0x208] sm:$0xff]
    %v128 = vld [vmem:[#allocation2 + $0x210] sm:$0xff]
    %v129 = vld [vmem:[#allocation2 + $0x218] sm:$0xff]
    %v130 = vld [vmem:[#allocation2 + $0x220] sm:$0xff]
    %v131 = vld [vmem:[#allocation2 + $0x228] sm:$0xff]
    %v132 = vld [vmem:[#allocation2 + $0x230] sm:$0xff]
    %v133 = vld [vmem:[#allocation2 + $0x238] sm:$0xff]
    %v134 = vld [vmem:[#allocation2 + $0x240] sm:$0xff]
    %v135 = vld [vmem:[#allocation2 + $0x248] sm:$0xff]
    %v136 = vld [vmem:[#allocation2 + $0x250] sm:$0xff]
    %v137 = vld [vmem:[#allocation2 + $0x258] sm:$0xff]
    %v138 = vld [vmem:[#allocation2 + $0x260] sm:$0xff]
    %v139 = vld [vmem:[#allocation2 + $0x268] sm:$0xff]
    %v140 = vld [vmem:[#allocation2 + $0x270] sm:$0xff]
    %v141 = vld [vmem:[#allocation2 + $0x278] sm:$0xff]
    %v142 = vld [vmem:[#allocation2 + $0x280] sm:$0xff]
    %v143 = vld [vmem:[#allocation2 + $0x288] sm:$0xff]
    %v144 = vld [vmem:[#allocation2 + $0x290] sm:$0xff]
    %v145 = vld [vmem:[#allocation2 + $0x298] sm:$0xff]
    %v146 = vld [vmem:[#allocation2 + $0x2a0] sm:$0xff]
    %v147 = vld [vmem:[#allocation2 + $0x2a8] sm:$0xff]
    %v148 = vld [vmem:[#allocation2 + $0x2b0] sm:$0xff]
    %v149 = vld [vmem:[#allocation2 + $0x2b8] sm:$0xff]
    %v150 = vld [vmem:[#allocation2 + $0x2c0] sm:$0xff]
    %v151 = vld [vmem:[#allocation2 + $0x2c8] sm:$0xff]
    %v152 = vld [vmem:[#allocation2 + $0x2d0] sm:$0xff]
    %v153 = vld [vmem:[#allocation2 + $0x2d8] sm:$0xff]
    %v154 = vld [vmem:[#allocation2 + $0x2e0] sm:$0xff]
    %v155 = vld [vmem:[#allocation2 + $0x2e8] sm:$0xff]
    %v156 = vld [vmem:[#allocation2 + $0x2f0] sm:$0xff]
    %v157 = vld [vmem:[#allocation2 + $0x2f8] sm:$0xff]
    %v158 = vld [vmem:[#allocation2 + $0x300] sm:$0xff]
    %v159 = vld [vmem:[#allocation2 + $0x308] sm:$0xff]
    %v160 = vld [vmem:[#allocation2 + $0x310] sm:$0xff]
    %v161 = vld [vmem:[#allocation2 + $0x318] sm:$0xff]
    %v162 = vld [vmem:[#allocation2 + $0x320] sm:$0xff]
    %v163 = vld [vmem:[#allocation2 + $0x328] sm:$0xff]
    %v164 = vld [vmem:[#allocation2 + $0x330] sm:$0xff]
    %v165 = vld [vmem:[#allocation2 + $0x338] sm:$0xff]
    %v166 = vld [vmem:[#allocation2 + $0x340] sm:$0xff]
    %v167 = vld [vmem:[#allocation2 + $0x348] sm:$0xff]
    %v168 = vld [vmem:[#allocation2 + $0x350] sm:$0xff]
    %v169 = vld [vmem:[#allocation2 + $0x358] sm:$0xff]
    %v170 = vld [vmem:[#allocation2 + $0x360] sm:$0xff]
    %v171 = vld [vmem:[#allocation2 + $0x368] sm:$0xff]
    %v172 = vld [vmem:[#allocation2 + $0x370] sm:$0xff]
    %v173 = vld [vmem:[#allocation2 + $0x378] sm:$0xff]
    %v174 = vld [vmem:[#allocation2 + $0x380] sm:$0xff]
    %v175 = vld [vmem:[#allocation2 + $0x388] sm:$0xff]
    %v176 = vld [vmem:[#allocation2 + $0x390] sm:$0xff]
    %v177 = vld [vmem:[#allocation2 + $0x398] sm:$0xff]
    %v178 = vld [vmem:[#allocation2 + $0x3a0] sm:$0xff]
    %v179 = vld [vmem:[#allocation2 + $0x3a8] sm:$0xff]
    %v180 = vld [vmem:[#allocation2 + $0x3b0] sm:$0xff]
    %v181 = vld [vmem:[#allocation2 + $0x3b8] sm:$0xff]
    %v182 = vld [vmem:[#allocation2 + $0x3c0] sm:$0xff]
    %v183 = vld [vmem:[#allocation2 + $0x3c8] sm:$0xff]
    %v184 = vld [vmem:[#allocation2 + $0x3d0] sm:$0xff]
    %v185 = vld [vmem:[#allocation2 + $0x3d8] sm:$0xff]
    %v186 = vld [vmem:[#allocation2 + $0x3e0] sm:$0xff]
    %v187 = vld [vmem:[#allocation2 + $0x3e8] sm:$0xff]
    %v188 = vld [vmem:[#allocation2 + $0x3f0] sm:$0xff]
    %v189 = vld [vmem:[#allocation2 + $0x3f8] sm:$0xff]
    %v190 = vld [vmem:[#allocation5] sm:$0xff]
    %v191 = vld [vmem:[#allocation5 + $0x8] sm:$0xff]
    %v192 = vld [vmem:[#allocation5 + $0x10] sm:$0xff]
    %v193 = vld [vmem:[#allocation5 + $0x18] sm:$0xff]
    %v194 = vld [vmem:[#allocation5 + $0x20] sm:$0xff]
    %v195 = vld [vmem:[#allocation5 + $0x28] sm:$0xff]
    %v196 = vld [vmem:[#allocation5 + $0x30] sm:$0xff]
    %v197 = vld [vmem:[#allocation5 + $0x38] sm:$0xff]
    %v198 = vld [vmem:[#allocation5 + $0x40] sm:$0xff]
    %v199 = vld [vmem:[#allocation5 + $0x48] sm:$0xff]
    %v200 = vld [vmem:[#allocation5 + $0x50] sm:$0xff]
    %v201 = vld [vmem:[#allocation5 + $0x58] sm:$0xff]
    %v202 = vld [vmem:[#allocation5 + $0x60] sm:$0xff]
    %v203 = vld [vmem:[#allocation5 + $0x68] sm:$0xff]
    %v204 = vld [vmem:[#allocation5 + $0x70] sm:$0xff]
    %v205 = vld [vmem:[#allocation5 + $0x78] sm:$0xff]
    %v206 = vld [vmem:[%s2] sm:$0x1]
    %v208 = vlaneseq
    %v209 = vshrl.u32 %v208, 7
    %v210 = vsub.s32 0, %v209
    %v211 = vrot.slane %v206, %v210
    %213 = vmatprep.subr.mxu0 0.0
    %214 = vmatpush1.msra.mxu0 %v190
    %215 = vmatprep.subr.mxu0 0.0
    %216 = vmatpush1.msra.mxu0 %v191
    %217 = vmatprep.subr.mxu0 0.0
    %218 = vmatpush1.msra.mxu0 %v192
    %219 = vmatprep.subr.mxu0 0.0
    %220 = vmatpush1.msra.mxu0 %v193
    %221 = vmatprep.subr.mxu0 0.0
    %222 = vmatpush1.msra.mxu0 %v194
    %223 = vmatprep.subr.mxu0 0.0
    %224 = vmatpush1.msra.mxu0 %v195
    %225 = vmatprep.subr.mxu0 0.0
    %226 = vmatpush1.msra.mxu0 %v196
    %227 = vmatprep.subr.mxu0 0.0
    %228 = vmatpush1.msra.mxu0 %v197
    %229 = vmatprep.subr.mxu0 0.0
    %230 = vmatpush1.msra.mxu0 %v198
    %231 = vmatprep.subr.mxu0 0.0
    %232 = vmatpush1.msra.mxu0 %v199
    %233 = vmatprep.subr.mxu0 0.0
    %234 = vmatpush1.msra.mxu0 %v200
    %235 = vmatprep.subr.mxu0 0.0
    %236 = vmatpush1.msra.mxu0 %v201
    %237 = vmatprep.subr.mxu0 0.0
    %238 = vmatpush1.msra.mxu0 %v202
    %239 = vmatprep.subr.mxu0 0.0
    %240 = vmatpush1.msra.mxu0 %v203
    %241 = vmatprep.subr.mxu0 0.0
    %242 = vmatpush1.msra.mxu0 %v204
    %243 = vmatprep.subr.mxu0 0.0
    %244 = vmatpush1.msra.mxu0 %v205
    %245 = vmatprep.subr.mxu0 0.0
    %246 = vmatpush1.msra.mxu0 0.0
    %247 = vmatprep.subr.mxu0 0.0
    %248 = vmatpush1.msra.mxu0 0.0
    %249 = vmatprep.subr.mxu0 0.0
    %250 = vmatpush1.msra.mxu0 0.0
    %251 = vmatprep.subr.mxu0 0.0
    %252 = vmatpush1.msra.mxu0 0.0
    %253 = vmatprep.subr.mxu0 0.0
    %254 = vmatpush1.msra.mxu0 0.0
    %255 = vmatprep.subr.mxu0 0.0
    %256 = vmatpush1.msra.mxu0 0.0
    %257 = vmatprep.subr.mxu0 0.0
    %258 = vmatpush1.msra.mxu0 0.0
    %259 = vmatprep.subr.mxu0 0.0
    %260 = vmatpush1.msra.mxu0 0.0
    %261 = vmatprep.subr.mxu0 0.0
    %262 = vmatpush1.msra.mxu0 0.0
    %263 = vmatprep.subr.mxu0 0.0
    %264 = vmatpush1.msra.mxu0 0.0
    %265 = vmatprep.subr.mxu0 0.0
    %266 = vmatpush1.msra.mxu0 0.0
    %267 = vmatprep.subr.mxu0 0.0
    %268 = vmatpush1.msra.mxu0 0.0
    %269 = vmatprep.subr.mxu0 0.0
    %270 = vmatpush1.msra.mxu0 0.0
    %271 = vmatprep.subr.mxu0 0.0
    %272 = vmatpush1.msra.mxu0 0.0
    %273 = vmatprep.subr.mxu0 0.0
    %274 = vmatpush1.msra.mxu0 0.0
    %275 = vmatprep.subr.mxu0 0.0
    %276 = vmatpush1.msra.mxu0 0.0
    %277 = vmatprep.mubr.f32.mxu0 0.0
    %278 = vmatmul.mubr.f32.gmra.mrb[0].mxu0 %v62
    %v279 = vpop.f32.mrb[0].mxu0
    %v280 = vadd.f32 %v211, %v279
    %v281 = vpop.f32.mrb[0].mxu0
    %282 = vmatprep.mubr.f32.mxu0 0.0
    %283 = vmatmul.mubr.f32.gmra.mrb[0].mxu0 %v63
    %v284 = vpop.f32.mrb[0].mxu0
    %v285 = vadd.f32 %v211, %v284
    %v286 = vpop.f32.mrb[0].mxu0
    %287 = vmatprep.mubr.f32.mxu0 0.0
    %288 = vmatmul.mubr.f32.gmra.mrb[0].mxu0 %v64
    %v289 = vpop.f32.mrb[0].mxu0
    %v290 = vadd.f32 %v211, %v289
    %v291 = vpop.f32.mrb[0].mxu0
    %292 = vmatprep.mubr.f32.mxu0 0.0
    %293 = vmatmul.mubr.f32.gmra.mrb[0].mxu0 %v65
    %v294 = vpop.f32.mrb[0].mxu0
    %v295 = vadd.f32 %v211, %v294
    %v296 = vpop.f32.mrb[0].mxu0
    %297 = vmatprep.mubr.f32.mxu0 0.0
    %298 = vmatmul.mubr.f32.gmra.mrb[0].mxu0 %v66
    %v299 = vpop.f32.mrb[0].mxu0
    %v300 = vadd.f32 %v211, %v299
    %v301 = vpop.f32.mrb[0].mxu0
    %302 = vmatprep.mubr.f32.mxu0 0.0
    %303 = vmatmul.mubr.f32.gmra.mrb[0].mxu0 %v67
    %v304 = vpop.f32.mrb[0].mxu0
    %v305 = vadd.f32 %v211, %v304
    %v306 = vpop.f32.mrb[0].mxu0
    %307 = vmatprep.mubr.f32.mxu0 0.0
    %308 = vmatmul.mubr.f32.gmra.mrb[0].mxu0 %v68
    %v309 = vpop.f32.mrb[0].mxu0
    %v310 = vadd.f32 %v211, %v309
    %v311 = vpop.f32.mrb[0].mxu0
    %312 = vmatprep.mubr.f32.mxu0 0.0
    %313 = vmatmul.mubr.f32.gmra.mrb[0].mxu0 %v69
    %v314 = vpop.f32.mrb[0].mxu0
    %v315 = vadd.f32 %v211, %v314
    %v316 = vpop.f32.mrb[0].mxu0
    %317 = vmatprep.mubr.f32.mxu0 0.0
    %318 = vmatmul.mubr.f32.gmra.mrb[0].mxu0 %v70
    %v319 = vpop.f32.mrb[0].mxu0
    %v320 = vadd.f32 %v211, %v319
    %v321 = vpop.f32.mrb[0].mxu0
    %322 = vmatprep.mubr.f32.mxu0 0.0
    %323 = vmatmul.mubr.f32.gmra.mrb[0].mxu0 %v71
    %v324 = vpop.f32.mrb[0].mxu0
    %v325 = vadd.f32 %v211, %v324
    %v326 = vpop.f32.mrb[0].mxu0
    %327 = vmatprep.mubr.f32.mxu0 0.0
    %328 = vmatmul.mubr.f32.gmra.mrb[0].mxu0 %v72
    %v329 = vpop.f32.mrb[0].mxu0
    %v330 = vadd.f32 %v211, %v329
    %v331 = vpop.f32.mrb[0].mxu0
    %332 = vmatprep.mubr.f32.mxu0 0.0
    %333 = vmatmul.mubr.f32.gmra.mrb[0].mxu0 %v73
    %v334 = vpop.f32.mrb[0].mxu0
    %v335 = vadd.f32 %v211, %v334
    %v336 = vpop.f32.mrb[0].mxu0
    %337 = vmatprep.mubr.f32.mxu0 0.0
    %338 = vmatmul.mubr.f32.gmra.mrb[0].mxu0 %v74
    %v339 = vpop.f32.mrb[0].mxu0
    %v340 = vadd.f32 %v211, %v339
    %v341 = vpop.f32.mrb[0].mxu0
    %342 = vmatprep.mubr.f32.mxu0 0.0
    %343 = vmatmul.mubr.f32.gmra.mrb[0].mxu0 %v75
    %v344 = vpop.f32.mrb[0].mxu0
    %v345 = vadd.f32 %v211, %v344
    %v346 = vpop.f32.mrb[0].mxu0
    %347 = vmatprep.mubr.f32.mxu0 0.0
    %348 = vmatmul.mubr.f32.gmra.mrb[0].mxu0 %v76
    %v349 = vpop.f32.mrb[0].mxu0
    %v350 = vadd.f32 %v211, %v349
    %v351 = vpop.f32.mrb[0].mxu0
    %352 = vmatprep.mubr.f32.mxu0 0.0
    %353 = vmatmul.mubr.f32.gmra.mrb[0].mxu0 %v77
    %v354 = vpop.f32.mrb[0].mxu0
    %v355 = vadd.f32 %v211, %v354
    %v356 = vpop.f32.mrb[0].mxu0
    %357 = vmatprep.mubr.f32.mxu0 0.0
    %358 = vmatmul.mubr.f32.gmra.mrb[0].mxu0 %v78
    %v359 = vpop.f32.mrb[0].mxu0
    %v360 = vadd.f32 %v211, %v359
    %v361 = vpop.f32.mrb[0].mxu0
    %362 = vmatprep.mubr.f32.mxu0 0.0
    %363 = vmatmul.mubr.f32.gmra.mrb[0].mxu0 %v79
    %v364 = vpop.f32.mrb[0].mxu0
    %v365 = vadd.f32 %v211, %v364
    %v366 = vpop.f32.mrb[0].mxu0
    %367 = vmatprep.mubr.f32.mxu0 0.0
    %368 = vmatmul.mubr.f32.gmra.mrb[0].mxu0 %v80
    %v369 = vpop.f32.mrb[0].mxu0
    %v370 = vadd.f32 %v211, %v369
    %v371 = vpop.f32.mrb[0].mxu0
    %372 = vmatprep.mubr.f32.mxu0 0.0
    %373 = vmatmul.mubr.f32.gmra.mrb[0].mxu0 %v81
    %v374 = vpop.f32.mrb[0].mxu0
    %v375 = vadd.f32 %v211, %v374
    %v376 = vpop.f32.mrb[0].mxu0
    %377 = vmatprep.mubr.f32.mxu0 0.0
    %378 = vmatmul.mubr.f32.gmra.mrb[0].mxu0 %v82
    %v379 = vpop.f32.mrb[0].mxu0
    %v380 = vadd.f32 %v211, %v379
    %v381 = vpop.f32.mrb[0].mxu0
    %382 = vmatprep.mubr.f32.mxu0 0.0
    %383 = vmatmul.mubr.f32.gmra.mrb[0].mxu0 %v83
    %v384 = vpop.f32.mrb[0].mxu0
    %v385 = vadd.f32 %v211, %v384
    %v386 = vpop.f32.mrb[0].mxu0
    %387 = vmatprep.mubr.f32.mxu0 0.0
    %388 = vmatmul.mubr.f32.gmra.mrb[0].mxu0 %v84
    %v389 = vpop.f32.mrb[0].mxu0
    %v390 = vadd.f32 %v211, %v389
    %v391 = vpop.f32.mrb[0].mxu0
    %392 = vmatprep.mubr.f32.mxu0 0.0
    %393 = vmatmul.mubr.f32.gmra.mrb[0].mxu0 %v85
    %v394 = vpop.f32.mrb[0].mxu0
    %v395 = vadd.f32 %v211, %v394
    %v396 = vpop.f32.mrb[0].mxu0
    %397 = vmatprep.mubr.f32.mxu0 0.0
    %398 = vmatmul.mubr.f32.gmra.mrb[0].mxu0 %v86
    %v399 = vpop.f32.mrb[0].mxu0
    %v400 = vadd.f32 %v211, %v399
    %v401 = vpop.f32.mrb[0].mxu0
    %402 = vmatprep.mubr.f32.mxu0 0.0
    %403 = vmatmul.mubr.f32.gmra.mrb[0].mxu0 %v87
    %v404 = vpop.f32.mrb[0].mxu0
    %v405 = vadd.f32 %v211, %v404
    %v406 = vpop.f32.mrb[0].mxu0
    %407 = vmatprep.mubr.f32.mxu0 0.0
    %408 = vmatmul.mubr.f32.gmra.mrb[0].mxu0 %v88
    %v409 = vpop.f32.mrb[0].mxu0
    %v410 = vadd.f32 %v211, %v409
    %v411 = vpop.f32.mrb[0].mxu0
    %412 = vmatprep.mubr.f32.mxu0 0.0
    %413 = vmatmul.mubr.f32.gmra.mrb[0].mxu0 %v89
    %v414 = vpop.f32.mrb[0].mxu0
    %v415 = vadd.f32 %v211, %v414
    %v416 = vpop.f32.mrb[0].mxu0
    %417 = vmatprep.mubr.f32.mxu0 0.0
    %418 = vmatmul.mubr.f32.gmra.mrb[0].mxu0 %v90
    %v419 = vpop.f32.mrb[0].mxu0
    %v420 = vadd.f32 %v211, %v419
    %v421 = vpop.f32.mrb[0].mxu0
    %422 = vmatprep.mubr.f32.mxu0 0.0
    %423 = vmatmul.mubr.f32.gmra.mrb[0].mxu0 %v91
    %v424 = vpop.f32.mrb[0].mxu0
    %v425 = vadd.f32 %v211, %v424
    %v426 = vpop.f32.mrb[0].mxu0
    %427 = vmatprep.mubr.f32.mxu0 0.0
    %428 = vmatmul.mubr.f32.gmra.mrb[0].mxu0 %v92
    %v429 = vpop.f32.mrb[0].mxu0
    %v430 = vadd.f32 %v211, %v429
    %v431 = vpop.f32.mrb[0].mxu0
    %432 = vmatprep.mubr.f32.mxu0 0.0
    %433 = vmatmul.mubr.f32.gmra.mrb[0].mxu0 %v93
    %v434 = vpop.f32.mrb[0].mxu0
    %v435 = vadd.f32 %v211, %v434
    %v436 = vpop.f32.mrb[0].mxu0
    %437 = vmatprep.mubr.f32.mxu0 0.0
    %438 = vmatmul.mubr.f32.gmra.mrb[0].mxu0 %v94
    %v439 = vpop.f32.mrb[0].mxu0
    %v440 = vadd.f32 %v211, %v439
    %v441 = vpop.f32.mrb[0].mxu0
    %442 = vmatprep.mubr.f32.mxu0 0.0
    %443 = vmatmul.mubr.f32.gmra.mrb[0].mxu0 %v95
    %v444 = vpop.f32.mrb[0].mxu0
    %v445 = vadd.f32 %v211, %v444
    %v446 = vpop.f32.mrb[0].mxu0
    %447 = vmatprep.mubr.f32.mxu0 0.0
    %448 = vmatmul.mubr.f32.gmra.mrb[0].mxu0 %v96
    %v449 = vpop.f32.mrb[0].mxu0
    %v450 = vadd.f32 %v211, %v449
    %v451 = vpop.f32.mrb[0].mxu0
    %452 = vmatprep.mubr.f32.mxu0 0.0
    %453 = vmatmul.mubr.f32.gmra.mrb[0].mxu0 %v97
    %v454 = vpop.f32.mrb[0].mxu0
    %v455 = vadd.f32 %v211, %v454
    %v456 = vpop.f32.mrb[0].mxu0
    %457 = vmatprep.mubr.f32.mxu0 0.0
    %458 = vmatmul.mubr.f32.gmra.mrb[0].mxu0 %v98
    %v459 = vpop.f32.mrb[0].mxu0
    %v460 = vadd.f32 %v211, %v459
    %v461 = vpop.f32.mrb[0].mxu0
    %462 = vmatprep.mubr.f32.mxu0 0.0
    %463 = vmatmul.mubr.f32.gmra.mrb[0].mxu0 %v99
    %v464 = vpop.f32.mrb[0].mxu0
    %v465 = vadd.f32 %v211, %v464
    %v466 = vpop.f32.mrb[0].mxu0
    %467 = vmatprep.mubr.f32.mxu0 0.0
    %468 = vmatmul.mubr.f32.gmra.mrb[0].mxu0 %v100
    %v469 = vpop.f32.mrb[0].mxu0
    %v470 = vadd.f32 %v211, %v469
    %v471 = vpop.f32.mrb[0].mxu0
    %472 = vmatprep.mubr.f32.mxu0 0.0
    %473 = vmatmul.mubr.f32.gmra.mrb[0].mxu0 %v101
    %v474 = vpop.f32.mrb[0].mxu0
    %v475 = vadd.f32 %v211, %v474
    %v476 = vpop.f32.mrb[0].mxu0
    %477 = vmatprep.mubr.f32.mxu0 0.0
    %478 = vmatmul.mubr.f32.gmra.mrb[0].mxu0 %v102
    %v479 = vpop.f32.mrb[0].mxu0
    %v480 = vadd.f32 %v211, %v479
    %v481 = vpop.f32.mrb[0].mxu0
    %482 = vmatprep.mubr.f32.mxu0 0.0
    %483 = vmatmul.mubr.f32.gmra.mrb[0].mxu0 %v103
    %v484 = vpop.f32.mrb[0].mxu0
    %v485 = vadd.f32 %v211, %v484
    %v486 = vpop.f32.mrb[0].mxu0
    %487 = vmatprep.mubr.f32.mxu0 0.0
    %488 = vmatmul.mubr.f32.gmra.mrb[0].mxu0 %v104
    %v489 = vpop.f32.mrb[0].mxu0
    %v490 = vadd.f32 %v211, %v489
    %v491 = vpop.f32.mrb[0].mxu0
    %492 = vmatprep.mubr.f32.mxu0 0.0
    %493 = vmatmul.mubr.f32.gmra.mrb[0].mxu0 %v105
    %v494 = vpop.f32.mrb[0].mxu0
    %v495 = vadd.f32 %v211, %v494
    %v496 = vpop.f32.mrb[0].mxu0
    %497 = vmatprep.mubr.f32.mxu0 0.0
    %498 = vmatmul.mubr.f32.gmra.mrb[0].mxu0 %v106
    %v499 = vpop.f32.mrb[0].mxu0
    %v500 = vadd.f32 %v211, %v499
    %v501 = vpop.f32.mrb[0].mxu0
    %502 = vmatprep.mubr.f32.mxu0 0.0
    %503 = vmatmul.mubr.f32.gmra.mrb[0].mxu0 %v107
    %v504 = vpop.f32.mrb[0].mxu0
    %v505 = vadd.f32 %v211, %v504
    %v506 = vpop.f32.mrb[0].mxu0
    %507 = vmatprep.mubr.f32.mxu0 0.0
    %508 = vmatmul.mubr.f32.gmra.mrb[0].mxu0 %v108
    %v509 = vpop.f32.mrb[0].mxu0
    %v510 = vadd.f32 %v211, %v509
    %v511 = vpop.f32.mrb[0].mxu0
    %512 = vmatprep.mubr.f32.mxu0 0.0
    %513 = vmatmul.mubr.f32.gmra.mrb[0].mxu0 %v109
    %v514 = vpop.f32.mrb[0].mxu0
    %v515 = vadd.f32 %v211, %v514
    %v516 = vpop.f32.mrb[0].mxu0
    %517 = vmatprep.mubr.f32.mxu0 0.0
    %518 = vmatmul.mubr.f32.gmra.mrb[0].mxu0 %v110
    %v519 = vpop.f32.mrb[0].mxu0
    %v520 = vadd.f32 %v211, %v519
    %v521 = vpop.f32.mrb[0].mxu0
    %522 = vmatprep.mubr.f32.mxu0 0.0
    %523 = vmatmul.mubr.f32.gmra.mrb[0].mxu0 %v111
    %v524 = vpop.f32.mrb[0].mxu0
    %v525 = vadd.f32 %v211, %v524
    %v526 = vpop.f32.mrb[0].mxu0
    %527 = vmatprep.mubr.f32.mxu0 0.0
    %528 = vmatmul.mubr.f32.gmra.mrb[0].mxu0 %v112
    %v529 = vpop.f32.mrb[0].mxu0
    %v530 = vadd.f32 %v211, %v529
    %v531 = vpop.f32.mrb[0].mxu0
    %532 = vmatprep.mubr.f32.mxu0 0.0
    %533 = vmatmul.mubr.f32.gmra.mrb[0].mxu0 %v113
    %v534 = vpop.f32.mrb[0].mxu0
    %v535 = vadd.f32 %v211, %v534
    %v536 = vpop.f32.mrb[0].mxu0
    %537 = vmatprep.mubr.f32.mxu0 0.0
    %538 = vmatmul.mubr.f32.gmra.mrb[0].mxu0 %v114
    %v539 = vpop.f32.mrb[0].mxu0
    %v540 = vadd.f32 %v211, %v539
    %v541 = vpop.f32.mrb[0].mxu0
    %542 = vmatprep.mubr.f32.mxu0 0.0
    %543 = vmatmul.mubr.f32.gmra.mrb[0].mxu0 %v115
    %v544 = vpop.f32.mrb[0].mxu0
    %v545 = vadd.f32 %v211, %v544
    %v546 = vpop.f32.mrb[0].mxu0
    %547 = vmatprep.mubr.f32.mxu0 0.0
    %548 = vmatmul.mubr.f32.gmra.mrb[0].mxu0 %v116
    %v549 = vpop.f32.mrb[0].mxu0
    %v550 = vadd.f32 %v211, %v549
    %v551 = vpop.f32.mrb[0].mxu0
    %552 = vmatprep.mubr.f32.mxu0 0.0
    %553 = vmatmul.mubr.f32.gmra.mrb[0].mxu0 %v117
    %v554 = vpop.f32.mrb[0].mxu0
    %v555 = vadd.f32 %v211, %v554
    %v556 = vpop.f32.mrb[0].mxu0
    %557 = vmatprep.mubr.f32.mxu0 0.0
    %558 = vmatmul.mubr.f32.gmra.mrb[0].mxu0 %v118
    %v559 = vpop.f32.mrb[0].mxu0
    %v560 = vadd.f32 %v211, %v559
    %v561 = vpop.f32.mrb[0].mxu0
    %562 = vmatprep.mubr.f32.mxu0 0.0
    %563 = vmatmul.mubr.f32.gmra.mrb[0].mxu0 %v119
    %v564 = vpop.f32.mrb[0].mxu0
    %v565 = vadd.f32 %v211, %v564
    %v566 = vpop.f32.mrb[0].mxu0
    %567 = vmatprep.mubr.f32.mxu0 0.0
    %568 = vmatmul.mubr.f32.gmra.mrb[0].mxu0 %v120
    %v569 = vpop.f32.mrb[0].mxu0
    %v570 = vadd.f32 %v211, %v569
    %v571 = vpop.f32.mrb[0].mxu0
    %572 = vmatprep.mubr.f32.mxu0 0.0
    %573 = vmatmul.mubr.f32.gmra.mrb[0].mxu0 %v121
    %v574 = vpop.f32.mrb[0].mxu0
    %v575 = vadd.f32 %v211, %v574
    %v576 = vpop.f32.mrb[0].mxu0
    %577 = vmatprep.mubr.f32.mxu0 0.0
    %578 = vmatmul.mubr.f32.gmra.mrb[0].mxu0 %v122
    %v579 = vpop.f32.mrb[0].mxu0
    %v580 = vadd.f32 %v211, %v579
    %v581 = vpop.f32.mrb[0].mxu0
    %582 = vmatprep.mubr.f32.mxu0 0.0
    %583 = vmatmul.mubr.f32.gmra.mrb[0].mxu0 %v123
    %v584 = vpop.f32.mrb[0].mxu0
    %v585 = vadd.f32 %v211, %v584
    %v586 = vpop.f32.mrb[0].mxu0
    %587 = vmatprep.mubr.f32.mxu0 0.0
    %588 = vmatmul.mubr.f32.gmra.mrb[0].mxu0 %v124
    %v589 = vpop.f32.mrb[0].mxu0
    %v590 = vadd.f32 %v211, %v589
    %v591 = vpop.f32.mrb[0].mxu0
    %592 = vmatprep.mubr.f32.mxu0 0.0
    %593 = vmatmul.mubr.f32.gmra.mrb[0].mxu0 %v125
    %v594 = vpop.f32.mrb[0].mxu0
    %v595 = vadd.f32 %v211, %v594
    %v596 = vpop.f32.mrb[0].mxu0
    %597 = vmatprep.mubr.f32.mxu0 0.0
    %598 = vmatmul.mubr.f32.gmra.mrb[0].mxu0 %v126
    %v599 = vpop.f32.mrb[0].mxu0
    %v600 = vadd.f32 %v211, %v599
    %v601 = vpop.f32.mrb[0].mxu0
    %602 = vmatprep.mubr.f32.mxu0 0.0
    %603 = vmatmul.mubr.f32.gmra.mrb[0].mxu0 %v127
    %v604 = vpop.f32.mrb[0].mxu0
    %v605 = vadd.f32 %v211, %v604
    %v606 = vpop.f32.mrb[0].mxu0
    %607 = vmatprep.mubr.f32.mxu0 0.0
    %608 = vmatmul.mubr.f32.gmra.mrb[0].mxu0 %v128
    %v609 = vpop.f32.mrb[0].mxu0
    %v610 = vadd.f32 %v211, %v609
    %v611 = vpop.f32.mrb[0].mxu0
    %612 = vmatprep.mubr.f32.mxu0 0.0
    %613 = vmatmul.mubr.f32.gmra.mrb[0].mxu0 %v129
    %v614 = vpop.f32.mrb[0].mxu0
    %v615 = vadd.f32 %v211, %v614
    %v616 = vpop.f32.mrb[0].mxu0
    %617 = vmatprep.mubr.f32.mxu0 0.0
    %618 = vmatmul.mubr.f32.gmra.mrb[0].mxu0 %v130
    %v619 = vpop.f32.mrb[0].mxu0
    %v620 = vadd.f32 %v211, %v619
    %v621 = vpop.f32.mrb[0].mxu0
    %622 = vmatprep.mubr.f32.mxu0 0.0
    %623 = vmatmul.mubr.f32.gmra.mrb[0].mxu0 %v131
    %v624 = vpop.f32.mrb[0].mxu0
    %v625 = vadd.f32 %v211, %v624
    %v626 = vpop.f32.mrb[0].mxu0
    %627 = vmatprep.mubr.f32.mxu0 0.0
    %628 = vmatmul.mubr.f32.gmra.mrb[0].mxu0 %v132
    %v629 = vpop.f32.mrb[0].mxu0
    %v630 = vadd.f32 %v211, %v629
    %v631 = vpop.f32.mrb[0].mxu0
    %632 = vmatprep.mubr.f32.mxu0 0.0
    %633 = vmatmul.mubr.f32.gmra.mrb[0].mxu0 %v133
    %v634 = vpop.f32.mrb[0].mxu0
    %v635 = vadd.f32 %v211, %v634
    %v636 = vpop.f32.mrb[0].mxu0
    %637 = vmatprep.mubr.f32.mxu0 0.0
    %638 = vmatmul.mubr.f32.gmra.mrb[0].mxu0 %v134
    %v639 = vpop.f32.mrb[0].mxu0
    %v640 = vadd.f32 %v211, %v639
    %v641 = vpop.f32.mrb[0].mxu0
    %642 = vmatprep.mubr.f32.mxu0 0.0
    %643 = vmatmul.mubr.f32.gmra.mrb[0].mxu0 %v135
    %v644 = vpop.f32.mrb[0].mxu0
    %v645 = vadd.f32 %v211, %v644
    %v646 = vpop.f32.mrb[0].mxu0
    %647 = vmatprep.mubr.f32.mxu0 0.0
    %648 = vmatmul.mubr.f32.gmra.mrb[0].mxu0 %v136
    %v649 = vpop.f32.mrb[0].mxu0
    %v650 = vadd.f32 %v211, %v649
    %v651 = vpop.f32.mrb[0].mxu0
    %652 = vmatprep.mubr.f32.mxu0 0.0
    %653 = vmatmul.mubr.f32.gmra.mrb[0].mxu0 %v137
    %v654 = vpop.f32.mrb[0].mxu0
    %v655 = vadd.f32 %v211, %v654
    %v656 = vpop.f32.mrb[0].mxu0
    %657 = vmatprep.mubr.f32.mxu0 0.0
    %658 = vmatmul.mubr.f32.gmra.mrb[0].mxu0 %v138
    %v659 = vpop.f32.mrb[0].mxu0
    %v660 = vadd.f32 %v211, %v659
    %v661 = vpop.f32.mrb[0].mxu0
    %662 = vmatprep.mubr.f32.mxu0 0.0
    %663 = vmatmul.mubr.f32.gmra.mrb[0].mxu0 %v139
    %v664 = vpop.f32.mrb[0].mxu0
    %v665 = vadd.f32 %v211, %v664
    %v666 = vpop.f32.mrb[0].mxu0
    %667 = vmatprep.mubr.f32.mxu0 0.0
    %668 = vmatmul.mubr.f32.gmra.mrb[0].mxu0 %v140
    %v669 = vpop.f32.mrb[0].mxu0
    %v670 = vadd.f32 %v211, %v669
    %v671 = vpop.f32.mrb[0].mxu0
    %672 = vmatprep.mubr.f32.mxu0 0.0
    %673 = vmatmul.mubr.f32.gmra.mrb[0].mxu0 %v141
    %v674 = vpop.f32.mrb[0].mxu0
    %v675 = vadd.f32 %v211, %v674
    %v676 = vpop.f32.mrb[0].mxu0
    %677 = vmatprep.mubr.f32.mxu0 0.0
    %678 = vmatmul.mubr.f32.gmra.mrb[0].mxu0 %v142
    %v679 = vpop.f32.mrb[0].mxu0
    %v680 = vadd.f32 %v211, %v679
    %v681 = vpop.f32.mrb[0].mxu0
    %682 = vmatprep.mubr.f32.mxu0 0.0
    %683 = vmatmul.mubr.f32.gmra.mrb[0].mxu0 %v143
    %v684 = vpop.f32.mrb[0].mxu0
    %v685 = vadd.f32 %v211, %v684
    %v686 = vpop.f32.mrb[0].mxu0
    %687 = vmatprep.mubr.f32.mxu0 0.0
    %688 = vmatmul.mubr.f32.gmra.mrb[0].mxu0 %v144
    %v689 = vpop.f32.mrb[0].mxu0
    %v690 = vadd.f32 %v211, %v689
    %v691 = vpop.f32.mrb[0].mxu0
    %692 = vmatprep.mubr.f32.mxu0 0.0
    %693 = vmatmul.mubr.f32.gmra.mrb[0].mxu0 %v145
    %v694 = vpop.f32.mrb[0].mxu0
    %v695 = vadd.f32 %v211, %v694
    %v696 = vpop.f32.mrb[0].mxu0
    %697 = vmatprep.mubr.f32.mxu0 0.0
    %698 = vmatmul.mubr.f32.gmra.mrb[0].mxu0 %v146
    %v699 = vpop.f32.mrb[0].mxu0
    %v700 = vadd.f32 %v211, %v699
    %v701 = vpop.f32.mrb[0].mxu0
    %702 = vmatprep.mubr.f32.mxu0 0.0
    %703 = vmatmul.mubr.f32.gmra.mrb[0].mxu0 %v147
    %v704 = vpop.f32.mrb[0].mxu0
    %v705 = vadd.f32 %v211, %v704
    %v706 = vpop.f32.mrb[0].mxu0
    %707 = vmatprep.mubr.f32.mxu0 0.0
    %708 = vmatmul.mubr.f32.gmra.mrb[0].mxu0 %v148
    %v709 = vpop.f32.mrb[0].mxu0
    %v710 = vadd.f32 %v211, %v709
    %v711 = vpop.f32.mrb[0].mxu0
    %712 = vmatprep.mubr.f32.mxu0 0.0
    %713 = vmatmul.mubr.f32.gmra.mrb[0].mxu0 %v149
    %v714 = vpop.f32.mrb[0].mxu0
    %v715 = vadd.f32 %v211, %v714
    %v716 = vpop.f32.mrb[0].mxu0
    %717 = vmatprep.mubr.f32.mxu0 0.0
    %718 = vmatmul.mubr.f32.gmra.mrb[0].mxu0 %v150
    %v719 = vpop.f32.mrb[0].mxu0
    %v720 = vadd.f32 %v211, %v719
    %v721 = vpop.f32.mrb[0].mxu0
    %722 = vmatprep.mubr.f32.mxu0 0.0
    %723 = vmatmul.mubr.f32.gmra.mrb[0].mxu0 %v151
    %v724 = vpop.f32.mrb[0].mxu0
    %v725 = vadd.f32 %v211, %v724
    %v726 = vpop.f32.mrb[0].mxu0
    %727 = vmatprep.mubr.f32.mxu0 0.0
    %728 = vmatmul.mubr.f32.gmra.mrb[0].mxu0 %v152
    %v729 = vpop.f32.mrb[0].mxu0
    %v730 = vadd.f32 %v211, %v729
    %v731 = vpop.f32.mrb[0].mxu0
    %732 = vmatprep.mubr.f32.mxu0 0.0
    %733 = vmatmul.mubr.f32.gmra.mrb[0].mxu0 %v153
    %v734 = vpop.f32.mrb[0].mxu0
    %v735 = vadd.f32 %v211, %v734
    %v736 = vpop.f32.mrb[0].mxu0
    %737 = vmatprep.mubr.f32.mxu0 0.0
    %738 = vmatmul.mubr.f32.gmra.mrb[0].mxu0 %v154
    %v739 = vpop.f32.mrb[0].mxu0
    %v740 = vadd.f32 %v211, %v739
    %v741 = vpop.f32.mrb[0].mxu0
    %742 = vmatprep.mubr.f32.mxu0 0.0
    %743 = vmatmul.mubr.f32.gmra.mrb[0].mxu0 %v155
    %v744 = vpop.f32.mrb[0].mxu0
    %v745 = vadd.f32 %v211, %v744
    %v746 = vpop.f32.mrb[0].mxu0
    %747 = vmatprep.mubr.f32.mxu0 0.0
    %748 = vmatmul.mubr.f32.gmra.mrb[0].mxu0 %v156
    %v749 = vpop.f32.mrb[0].mxu0
    %v750 = vadd.f32 %v211, %v749
    %v751 = vpop.f32.mrb[0].mxu0
    %752 = vmatprep.mubr.f32.mxu0 0.0
    %753 = vmatmul.mubr.f32.gmra.mrb[0].mxu0 %v157
    %v754 = vpop.f32.mrb[0].mxu0
    %v755 = vadd.f32 %v211, %v754
    %v756 = vpop.f32.mrb[0].mxu0
    %757 = vmatprep.mubr.f32.mxu0 0.0
    %758 = vmatmul.mubr.f32.gmra.mrb[0].mxu0 %v158
    %v759 = vpop.f32.mrb[0].mxu0
    %v760 = vadd.f32 %v211, %v759
    %v761 = vpop.f32.mrb[0].mxu0
    %762 = vmatprep.mubr.f32.mxu0 0.0
    %763 = vmatmul.mubr.f32.gmra.mrb[0].mxu0 %v159
    %v764 = vpop.f32.mrb[0].mxu0
    %v765 = vadd.f32 %v211, %v764
    %v766 = vpop.f32.mrb[0].mxu0
    %767 = vmatprep.mubr.f32.mxu0 0.0
    %768 = vmatmul.mubr.f32.gmra.mrb[0].mxu0 %v160
    %v769 = vpop.f32.mrb[0].mxu0
    %v770 = vadd.f32 %v211, %v769
    %v771 = vpop.f32.mrb[0].mxu0
    %772 = vmatprep.mubr.f32.mxu0 0.0
    %773 = vmatmul.mubr.f32.gmra.mrb[0].mxu0 %v161
    %v774 = vpop.f32.mrb[0].mxu0
    %v775 = vadd.f32 %v211, %v774
    %v776 = vpop.f32.mrb[0].mxu0
    %777 = vmatprep.mubr.f32.mxu0 0.0
    %778 = vmatmul.mubr.f32.gmra.mrb[0].mxu0 %v162
    %v779 = vpop.f32.mrb[0].mxu0
    %v780 = vadd.f32 %v211, %v779
    %v781 = vpop.f32.mrb[0].mxu0
    %782 = vmatprep.mubr.f32.mxu0 0.0
    %783 = vmatmul.mubr.f32.gmra.mrb[0].mxu0 %v163
    %v784 = vpop.f32.mrb[0].mxu0
    %v785 = vadd.f32 %v211, %v784
    %v786 = vpop.f32.mrb[0].mxu0
    %787 = vmatprep.mubr.f32.mxu0 0.0
    %788 = vmatmul.mubr.f32.gmra.mrb[0].mxu0 %v164
    %v789 = vpop.f32.mrb[0].mxu0
    %v790 = vadd.f32 %v211, %v789
    %v791 = vpop.f32.mrb[0].mxu0
    %792 = vmatprep.mubr.f32.mxu0 0.0
    %793 = vmatmul.mubr.f32.gmra.mrb[0].mxu0 %v165
    %v794 = vpop.f32.mrb[0].mxu0
    %v795 = vadd.f32 %v211, %v794
    %v796 = vpop.f32.mrb[0].mxu0
    %797 = vmatprep.mubr.f32.mxu0 0.0
    %798 = vmatmul.mubr.f32.gmra.mrb[0].mxu0 %v166
    %v799 = vpop.f32.mrb[0].mxu0
    %v800 = vadd.f32 %v211, %v799
    %v801 = vpop.f32.mrb[0].mxu0
    %802 = vmatprep.mubr.f32.mxu0 0.0
    %803 = vmatmul.mubr.f32.gmra.mrb[0].mxu0 %v167
    %v804 = vpop.f32.mrb[0].mxu0
    %v805 = vadd.f32 %v211, %v804
    %v806 = vpop.f32.mrb[0].mxu0
    %807 = vmatprep.mubr.f32.mxu0 0.0
    %808 = vmatmul.mubr.f32.gmra.mrb[0].mxu0 %v168
    %v809 = vpop.f32.mrb[0].mxu0
    %v810 = vadd.f32 %v211, %v809
    %v811 = vpop.f32.mrb[0].mxu0
    %812 = vmatprep.mubr.f32.mxu0 0.0
    %813 = vmatmul.mubr.f32.gmra.mrb[0].mxu0 %v169
    %v814 = vpop.f32.mrb[0].mxu0
    %v815 = vadd.f32 %v211, %v814
    %v816 = vpop.f32.mrb[0].mxu0
    %817 = vmatprep.mubr.f32.mxu0 0.0
    %818 = vmatmul.mubr.f32.gmra.mrb[0].mxu0 %v170
    %v819 = vpop.f32.mrb[0].mxu0
    %v820 = vadd.f32 %v211, %v819
    %v821 = vpop.f32.mrb[0].mxu0
    %822 = vmatprep.mubr.f32.mxu0 0.0
    %823 = vmatmul.mubr.f32.gmra.mrb[0].mxu0 %v171
    %v824 = vpop.f32.mrb[0].mxu0
    %v825 = vadd.f32 %v211, %v824
    %v826 = vpop.f32.mrb[0].mxu0
    %827 = vmatprep.mubr.f32.mxu0 0.0
    %828 = vmatmul.mubr.f32.gmra.mrb[0].mxu0 %v172
    %v829 = vpop.f32.mrb[0].mxu0
    %v830 = vadd.f32 %v211, %v829
    %v831 = vpop.f32.mrb[0].mxu0
    %832 = vmatprep.mubr.f32.mxu0 0.0
    %833 = vmatmul.mubr.f32.gmra.mrb[0].mxu0 %v173
    %v834 = vpop.f32.mrb[0].mxu0
    %v835 = vadd.f32 %v211, %v834
    %v836 = vpop.f32.mrb[0].mxu0
    %837 = vmatprep.mubr.f32.mxu0 0.0
    %838 = vmatmul.mubr.f32.gmra.mrb[0].mxu0 %v174
    %v839 = vpop.f32.mrb[0].mxu0
    %v840 = vadd.f32 %v211, %v839
    %v841 = vpop.f32.mrb[0].mxu0
    %842 = vmatprep.mubr.f32.mxu0 0.0
    %843 = vmatmul.mubr.f32.gmra.mrb[0].mxu0 %v175
    %v844 = vpop.f32.mrb[0].mxu0
    %v845 = vadd.f32 %v211, %v844
    %v846 = vpop.f32.mrb[0].mxu0
    %847 = vmatprep.mubr.f32.mxu0 0.0
    %848 = vmatmul.mubr.f32.gmra.mrb[0].mxu0 %v176
    %v849 = vpop.f32.mrb[0].mxu0
    %v850 = vadd.f32 %v211, %v849
    %v851 = vpop.f32.mrb[0].mxu0
    %852 = vmatprep.mubr.f32.mxu0 0.0
    %853 = vmatmul.mubr.f32.gmra.mrb[0].mxu0 %v177
    %v854 = vpop.f32.mrb[0].mxu0
    %v855 = vadd.f32 %v211, %v854
    %v856 = vpop.f32.mrb[0].mxu0
    %857 = vmatprep.mubr.f32.mxu0 0.0
    %858 = vmatmul.mubr.f32.gmra.mrb[0].mxu0 %v178
    %v859 = vpop.f32.mrb[0].mxu0
    %v860 = vadd.f32 %v211, %v859
    %v861 = vpop.f32.mrb[0].mxu0
    %862 = vmatprep.mubr.f32.mxu0 0.0
    %863 = vmatmul.mubr.f32.gmra.mrb[0].mxu0 %v179
    %v864 = vpop.f32.mrb[0].mxu0
    %v865 = vadd.f32 %v211, %v864
    %v866 = vpop.f32.mrb[0].mxu0
    %867 = vmatprep.mubr.f32.mxu0 0.0
    %868 = vmatmul.mubr.f32.gmra.mrb[0].mxu0 %v180
    %v869 = vpop.f32.mrb[0].mxu0
    %v870 = vadd.f32 %v211, %v869
    %v871 = vpop.f32.mrb[0].mxu0
    %872 = vmatprep.mubr.f32.mxu0 0.0
    %873 = vmatmul.mubr.f32.gmra.mrb[0].mxu0 %v181
    %v874 = vpop.f32.mrb[0].mxu0
    %v875 = vadd.f32 %v211, %v874
    %v876 = vpop.f32.mrb[0].mxu0
    %877 = vmatprep.mubr.f32.mxu0 0.0
    %878 = vmatmul.mubr.f32.gmra.mrb[0].mxu0 %v182
    %v879 = vpop.f32.mrb[0].mxu0
    %v880 = vadd.f32 %v211, %v879
    %v881 = vpop.f32.mrb[0].mxu0
    %882 = vmatprep.mubr.f32.mxu0 0.0
    %883 = vmatmul.mubr.f32.gmra.mrb[0].mxu0 %v183
    %v884 = vpop.f32.mrb[0].mxu0
    %v885 = vadd.f32 %v211, %v884
    %v886 = vpop.f32.mrb[0].mxu0
    %887 = vmatprep.mubr.f32.mxu0 0.0
    %888 = vmatmul.mubr.f32.gmra.mrb[0].mxu0 %v184
    %v889 = vpop.f32.mrb[0].mxu0
    %v890 = vadd.f32 %v211, %v889
    %v891 = vpop.f32.mrb[0].mxu0
    %892 = vmatprep.mubr.f32.mxu0 0.0
    %893 = vmatmul.mubr.f32.gmra.mrb[0].mxu0 %v185
    %v894 = vpop.f32.mrb[0].mxu0
    %v895 = vadd.f32 %v211, %v894
    %v896 = vpop.f32.mrb[0].mxu0
    %897 = vmatprep.mubr.f32.mxu0 0.0
    %898 = vmatmul.mubr.f32.gmra.mrb[0].mxu0 %v186
    %v899 = vpop.f32.mrb[0].mxu0
    %v900 = vadd.f32 %v211, %v899
    %v901 = vpop.f32.mrb[0].mxu0
    %902 = vmatprep.mubr.f32.mxu0 0.0
    %903 = vmatmul.mubr.f32.gmra.mrb[0].mxu0 %v187
    %v904 = vpop.f32.mrb[0].mxu0
    %v905 = vadd.f32 %v211, %v904
    %v906 = vpop.f32.mrb[0].mxu0
    %907 = vmatprep.mubr.f32.mxu0 0.0
    %908 = vmatmul.mubr.f32.gmra.mrb[0].mxu0 %v188
    %v909 = vpop.f32.mrb[0].mxu0
    %v910 = vadd.f32 %v211, %v909
    %v911 = vpop.f32.mrb[0].mxu0
    %912 = vmatprep.mubr.f32.mxu0 0.0
    %913 = vmatmul.mubr.f32.gmra.mrb[0].mxu0 %v189
    %v914 = vpop.f32.mrb[0].mxu0
    %v915 = vadd.f32 %v211, %v914
    %v916 = vpop.f32.mrb[0].mxu0
    %917 = vdwg.mxu0
    %v918 = vmax.f32 %v280, 0.0
    %v919 = vmax.f32 %v285, 0.0
    %v920 = vmax.f32 %v290, 0.0
    %v921 = vmax.f32 %v295, 0.0
    %v922 = vmax.f32 %v300, 0.0
    %v923 = vmax.f32 %v305, 0.0
    %v924 = vmax.f32 %v310, 0.0
    %v925 = vmax.f32 %v315, 0.0
    %v926 = vmax.f32 %v320, 0.0
    %v927 = vmax.f32 %v325, 0.0
    %v928 = vmax.f32 %v330, 0.0
    %v929 = vmax.f32 %v335, 0.0
    %v930 = vmax.f32 %v340, 0.0
    %v931 = vmax.f32 %v345, 0.0
    %v932 = vmax.f32 %v350, 0.0
    %v933 = vmax.f32 %v355, 0.0
    %v934 = vmax.f32 %v360, 0.0
    %v935 = vmax.f32 %v365, 0.0
    %v936 = vmax.f32 %v370, 0.0
    %v937 = vmax.f32 %v375, 0.0
    %v938 = vmax.f32 %v380, 0.0
    %v939 = vmax.f32 %v385, 0.0
    %v940 = vmax.f32 %v390, 0.0
    %v941 = vmax.f32 %v395, 0.0
    %v942 = vmax.f32 %v400, 0.0
    %v943 = vmax.f32 %v405, 0.0
    %v944 = vmax.f32 %v410, 0.0
    %v945 = vmax.f32 %v415, 0.0
    %v946 = vmax.f32 %v420, 0.0
    %v947 = vmax.f32 %v425, 0.0
    %v948 = vmax.f32 %v430, 0.0
    %v949 = vmax.f32 %v435, 0.0
    %v950 = vmax.f32 %v440, 0.0
    %v951 = vmax.f32 %v445, 0.0
    %v952 = vmax.f32 %v450, 0.0
    %v953 = vmax.f32 %v455, 0.0
    %v954 = vmax.f32 %v460, 0.0
    %v955 = vmax.f32 %v465, 0.0
    %v956 = vmax.f32 %v470, 0.0
    %v957 = vmax.f32 %v475, 0.0
    %v958 = vmax.f32 %v480, 0.0
    %v959 = vmax.f32 %v485, 0.0
    %v960 = vmax.f32 %v490, 0.0
    %v961 = vmax.f32 %v495, 0.0
    %v962 = vmax.f32 %v500, 0.0
    %v963 = vmax.f32 %v505, 0.0
    %v964 = vmax.f32 %v510, 0.0
    %v965 = vmax.f32 %v515, 0.0
    %v966 = vmax.f32 %v520, 0.0
    %v967 = vmax.f32 %v525, 0.0
    %v968 = vmax.f32 %v530, 0.0
    %v969 = vmax.f32 %v535, 0.0
    %v970 = vmax.f32 %v540, 0.0
    %v971 = vmax.f32 %v545, 0.0
    %v972 = vmax.f32 %v550, 0.0
    %v973 = vmax.f32 %v555, 0.0
    %v974 = vmax.f32 %v560, 0.0
    %v975 = vmax.f32 %v565, 0.0
    %v976 = vmax.f32 %v570, 0.0
    %v977 = vmax.f32 %v575, 0.0
    %v978 = vmax.f32 %v580, 0.0
    %v979 = vmax.f32 %v585, 0.0
    %v980 = vmax.f32 %v590, 0.0
    %v981 = vmax.f32 %v595, 0.0
    %v982 = vmax.f32 %v600, 0.0
    %v983 = vmax.f32 %v605, 0.0
    %v984 = vmax.f32 %v610, 0.0
    %v985 = vmax.f32 %v615, 0.0
    %v986 = vmax.f32 %v620, 0.0
    %v987 = vmax.f32 %v625, 0.0
    %v988 = vmax.f32 %v630, 0.0
    %v989 = vmax.f32 %v635, 0.0
    %v990 = vmax.f32 %v640, 0.0
    %v991 = vmax.f32 %v645, 0.0
    %v992 = vmax.f32 %v650, 0.0
    %v993 = vmax.f32 %v655, 0.0
    %v994 = vmax.f32 %v660, 0.0
    %v995 = vmax.f32 %v665, 0.0
    %v996 = vmax.f32 %v670, 0.0
    %v997 = vmax.f32 %v675, 0.0
    %v998 = vmax.f32 %v680, 0.0
    %v999 = vmax.f32 %v685, 0.0
    %v1000 = vmax.f32 %v690, 0.0
    %v1001 = vmax.f32 %v695, 0.0
    %v1002 = vmax.f32 %v700, 0.0
    %v1003 = vmax.f32 %v705, 0.0
    %v1004 = vmax.f32 %v710, 0.0
    %v1005 = vmax.f32 %v715, 0.0
    %v1006 = vmax.f32 %v720, 0.0
    %v1007 = vmax.f32 %v725, 0.0
    %v1008 = vmax.f32 %v730, 0.0
    %v1009 = vmax.f32 %v735, 0.0
    %v1010 = vmax.f32 %v740, 0.0
    %v1011 = vmax.f32 %v745, 0.0
    %v1012 = vmax.f32 %v750, 0.0
    %v1013 = vmax.f32 %v755, 0.0
    %v1014 = vmax.f32 %v760, 0.0
    %v1015 = vmax.f32 %v765, 0.0
    %v1016 = vmax.f32 %v770, 0.0
    %v1017 = vmax.f32 %v775, 0.0
    %v1018 = vmax.f32 %v780, 0.0
    %v1019 = vmax.f32 %v785, 0.0
    %v1020 = vmax.f32 %v790, 0.0
    %v1021 = vmax.f32 %v795, 0.0
    %v1022 = vmax.f32 %v800, 0.0
    %v1023 = vmax.f32 %v805, 0.0
    %v1024 = vmax.f32 %v810, 0.0
    %v1025 = vmax.f32 %v815, 0.0
    %v1026 = vmax.f32 %v820, 0.0
    %v1027 = vmax.f32 %v825, 0.0
    %v1028 = vmax.f32 %v830, 0.0
    %v1029 = vmax.f32 %v835, 0.0
    %v1030 = vmax.f32 %v840, 0.0
    %v1031 = vmax.f32 %v845, 0.0
    %v1032 = vmax.f32 %v850, 0.0
    %v1033 = vmax.f32 %v855, 0.0
    %v1034 = vmax.f32 %v860, 0.0
    %v1035 = vmax.f32 %v865, 0.0
    %v1036 = vmax.f32 %v870, 0.0
    %v1037 = vmax.f32 %v875, 0.0
    %v1038 = vmax.f32 %v880, 0.0
    %v1039 = vmax.f32 %v885, 0.0
    %v1040 = vmax.f32 %v890, 0.0
    %v1041 = vmax.f32 %v895, 0.0
    %v1042 = vmax.f32 %v900, 0.0
    %v1043 = vmax.f32 %v905, 0.0
    %v1044 = vmax.f32 %v910, 0.0
    %v1045 = vmax.f32 %v915, 0.0
    %v1046 = vld [vmem:[#allocation7] sm:$0xff]
    %v1047 = vld [vmem:[#allocation7 + $0x8] sm:$0xff]
    %v1048 = vld [vmem:[#allocation7 + $0x10] sm:$0xff]
    %v1049 = vld [vmem:[#allocation7 + $0x18] sm:$0xff]
    %v1050 = vld [vmem:[#allocation7 + $0x20] sm:$0xff]
    %v1051 = vld [vmem:[#allocation7 + $0x28] sm:$0xff]
    %v1052 = vld [vmem:[#allocation7 + $0x30] sm:$0xff]
    %v1053 = vld [vmem:[#allocation7 + $0x38] sm:$0xff]
    %v1054 = vld [vmem:[#allocation7 + $0x40] sm:$0xff]
    %v1055 = vld [vmem:[#allocation7 + $0x48] sm:$0xff]
    %v1056 = vld [vmem:[#allocation7 + $0x50] sm:$0xff]
    %v1057 = vld [vmem:[#allocation7 + $0x58] sm:$0xff]
    %v1058 = vld [vmem:[#allocation7 + $0x60] sm:$0xff]
    %v1059 = vld [vmem:[#allocation7 + $0x68] sm:$0xff]
    %v1060 = vld [vmem:[#allocation7 + $0x70] sm:$0xff]
    %v1061 = vld [vmem:[#allocation7 + $0x78] sm:$0xff]
    %v1062 = vld [vmem:[%s4] sm:$0x1]
    %v1064 = vlaneseq
    %v1065 = vshrl.u32 %v1064, 7
    %v1066 = vsub.s32 0, %v1065
    %v1067 = vrot.slane %v1062, %v1066
    %1069 = vmatprep.subr.mxu0 0.0
    %1070 = vmatpush1.msra.mxu0 %v1046
    %1071 = vmatprep.subr.mxu0 0.0
    %1072 = vmatpush1.msra.mxu0 %v1047
    %1073 = vmatprep.subr.mxu0 0.0
    %1074 = vmatpush1.msra.mxu0 %v1048
    %1075 = vmatprep.subr.mxu0 0.0
    %1076 = vmatpush1.msra.mxu0 %v1049
    %1077 = vmatprep.subr.mxu0 0.0
    %1078 = vmatpush1.msra.mxu0 %v1050
    %1079 = vmatprep.subr.mxu0 0.0
    %1080 = vmatpush1.msra.mxu0 %v1051
    %1081 = vmatprep.subr.mxu0 0.0
    %1082 = vmatpush1.msra.mxu0 %v1052
    %1083 = vmatprep.subr.mxu0 0.0
    %1084 = vmatpush1.msra.mxu0 %v1053
    %1085 = vmatprep.subr.mxu0 0.0
    %1086 = vmatpush1.msra.mxu0 %v1054
    %1087 = vmatprep.subr.mxu0 0.0
    %1088 = vmatpush1.msra.mxu0 %v1055
    %1089 = vmatprep.subr.mxu0 0.0
    %1090 = vmatpush1.msra.mxu0 %v1056
    %1091 = vmatprep.subr.mxu0 0.0
    %1092 = vmatpush1.msra.mxu0 %v1057
    %1093 = vmatprep.subr.mxu0 0.0
    %1094 = vmatpush1.msra.mxu0 %v1058
    %1095 = vmatprep.subr.mxu0 0.0
    %1096 = vmatpush1.msra.mxu0 %v1059
    %1097 = vmatprep.subr.mxu0 0.0
    %1098 = vmatpush1.msra.mxu0 %v1060
    %1099 = vmatprep.subr.mxu0 0.0
    %1100 = vmatpush1.msra.mxu0 %v1061
    %1101 = vmatprep.subr.mxu0 0.0
    %1102 = vmatpush1.msra.mxu0 0.0
    %1103 = vmatprep.subr.mxu0 0.0
    %1104 = vmatpush1.msra.mxu0 0.0
    %1105 = vmatprep.subr.mxu0 0.0
    %1106 = vmatpush1.msra.mxu0 0.0
    %1107 = vmatprep.subr.mxu0 0.0
    %1108 = vmatpush1.msra.mxu0 0.0
    %1109 = vmatprep.subr.mxu0 0.0
    %1110 = vmatpush1.msra.mxu0 0.0
    %1111 = vmatprep.subr.mxu0 0.0
    %1112 = vmatpush1.msra.mxu0 0.0
    %1113 = vmatprep.subr.mxu0 0.0
    %1114 = vmatpush1.msra.mxu0 0.0
    %1115 = vmatprep.subr.mxu0 0.0
    %1116 = vmatpush1.msra.mxu0 0.0
    %1117 = vmatprep.subr.mxu0 0.0
    %1118 = vmatpush1.msra.mxu0 0.0
    %1119 = vmatprep.subr.mxu0 0.0
    %1120 = vmatpush1.msra.mxu0 0.0
    %1121 = vmatprep.subr.mxu0 0.0
    %1122 = vmatpush1.msra.mxu0 0.0
    %1123 = vmatprep.subr.mxu0 0.0
    %1124 = vmatpush1.msra.mxu0 0.0
    %1125 = vmatprep.subr.mxu0 0.0
    %1126 = vmatpush1.msra.mxu0 0.0
    %1127 = vmatprep.subr.mxu0 0.0
    %1128 = vmatpush1.msra.mxu0 0.0
    %1129 = vmatprep.subr.mxu0 0.0
    %1130 = vmatpush1.msra.mxu0 0.0
    %1131 = vmatprep.subr.mxu0 0.0
    %1132 = vmatpush1.msra.mxu0 0.0
    %1133 = vmatprep.mubr.f32.mxu0 0.0
    %1134 = vmatmul.mubr.f32.gmra.mrb[0].mxu0 %v918
    %v1135 = vpop.f32.mrb[0].mxu0
    %v1136 = vadd.f32 %v1067, %v1135
    %v1137 = vpop.f32.mrb[0].mxu0
    %1138 = vmatprep.mubr.f32.mxu0 0.0
    %1139 = vmatmul.mubr.f32.gmra.mrb[0].mxu0 %v919
    %v1140 = vpop.f32.mrb[0].mxu0
    %v1141 = vadd.f32 %v1067, %v1140
    %v1142 = vpop.f32.mrb[0].mxu0
    %1143 = vmatprep.mubr.f32.mxu0 0.0
    %1144 = vmatmul.mubr.f32.gmra.mrb[0].mxu0 %v920
    %v1145 = vpop.f32.mrb[0].mxu0
    %v1146 = vadd.f32 %v1067, %v1145
    %v1147 = vpop.f32.mrb[0].mxu0
    %1148 = vmatprep.mubr.f32.mxu0 0.0
    %1149 = vmatmul.mubr.f32.gmra.mrb[0].mxu0 %v921
    %v1150 = vpop.f32.mrb[0].mxu0
    %v1151 = vadd.f32 %v1067, %v1150
    %v1152 = vpop.f32.mrb[0].mxu0
    %1153 = vmatprep.mubr.f32.mxu0 0.0
    %1154 = vmatmul.mubr.f32.gmra.mrb[0].mxu0 %v922
    %v1155 = vpop.f32.mrb[0].mxu0
    %v1156 = vadd.f32 %v1067, %v1155
    %v1157 = vpop.f32.mrb[0].mxu0
    %1158 = vmatprep.mubr.f32.mxu0 0.0
    %1159 = vmatmul.mubr.f32.gmra.mrb[0].mxu0 %v923
    %v1160 = vpop.f32.mrb[0].mxu0
    %v1161 = vadd.f32 %v1067, %v1160
    %v1162 = vpop.f32.mrb[0].mxu0
    %1163 = vmatprep.mubr.f32.mxu0 0.0
    %1164 = vmatmul.mubr.f32.gmra.mrb[0].mxu0 %v924
    %v1165 = vpop.f32.mrb[0].mxu0
    %v1166 = vadd.f32 %v1067, %v1165
    %v1167 = vpop.f32.mrb[0].mxu0
    %1168 = vmatprep.mubr.f32.mxu0 0.0
    %1169 = vmatmul.mubr.f32.gmra.mrb[0].mxu0 %v925
    %v1170 = vpop.f32.mrb[0].mxu0
    %v1171 = vadd.f32 %v1067, %v1170
    %v1172 = vpop.f32.mrb[0].mxu0
    %1173 = vmatprep.mubr.f32.mxu0 0.0
    %1174 = vmatmul.mubr.f32.gmra.mrb[0].mxu0 %v926
    %v1175 = vpop.f32.mrb[0].mxu0
    %v1176 = vadd.f32 %v1067, %v1175
    %v1177 = vpop.f32.mrb[0].mxu0
    %1178 = vmatprep.mubr.f32.mxu0 0.0
    %1179 = vmatmul.mubr.f32.gmra.mrb[0].mxu0 %v927
    %v1180 = vpop.f32.mrb[0].mxu0
    %v1181 = vadd.f32 %v1067, %v1180
    %v1182 = vpop.f32.mrb[0].mxu0
    %1183 = vmatprep.mubr.f32.mxu0 0.0
    %1184 = vmatmul.mubr.f32.gmra.mrb[0].mxu0 %v928
    %v1185 = vpop.f32.mrb[0].mxu0
    %v1186 = vadd.f32 %v1067, %v1185
    %v1187 = vpop.f32.mrb[0].mxu0
    %1188 = vmatprep.mubr.f32.mxu0 0.0
    %1189 = vmatmul.mubr.f32.gmra.mrb[0].mxu0 %v929
    %v1190 = vpop.f32.mrb[0].mxu0
    %v1191 = vadd.f32 %v1067, %v1190
    %v1192 = vpop.f32.mrb[0].mxu0
    %1193 = vmatprep.mubr.f32.mxu0 0.0
    %1194 = vmatmul.mubr.f32.gmra.mrb[0].mxu0 %v930
    %v1195 = vpop.f32.mrb[0].mxu0
    %v1196 = vadd.f32 %v1067, %v1195
    %v1197 = vpop.f32.mrb[0].mxu0
    %1198 = vmatprep.mubr.f32.mxu0 0.0
    %1199 = vmatmul.mubr.f32.gmra.mrb[0].mxu0 %v931
    %v1200 = vpop.f32.mrb[0].mxu0
    %v1201 = vadd.f32 %v1067, %v1200
    %v1202 = vpop.f32.mrb[0].mxu0
    %1203 = vmatprep.mubr.f32.mxu0 0.0
    %1204 = vmatmul.mubr.f32.gmra.mrb[0].mxu0 %v932
    %v1205 = vpop.f32.mrb[0].mxu0
    %v1206 = vadd.f32 %v1067, %v1205
    %v1207 = vpop.f32.mrb[0].mxu0
    %1208 = vmatprep.mubr.f32.mxu0 0.0
    %1209 = vmatmul.mubr.f32.gmra.mrb[0].mxu0 %v933
    %v1210 = vpop.f32.mrb[0].mxu0
    %v1211 = vadd.f32 %v1067, %v1210
    %v1212 = vpop.f32.mrb[0].mxu0
    %1213 = vmatprep.mubr.f32.mxu0 0.0
    %1214 = vmatmul.mubr.f32.gmra.mrb[0].mxu0 %v934
    %v1215 = vpop.f32.mrb[0].mxu0
    %v1216 = vadd.f32 %v1067, %v1215
    %v1217 = vpop.f32.mrb[0].mxu0
    %1218 = vmatprep.mubr.f32.mxu0 0.0
    %1219 = vmatmul.mubr.f32.gmra.mrb[0].mxu0 %v935
    %v1220 = vpop.f32.mrb[0].mxu0
    %v1221 = vadd.f32 %v1067, %v1220
    %v1222 = vpop.f32.mrb[0].mxu0
    %1223 = vmatprep.mubr.f32.mxu0 0.0
    %1224 = vmatmul.mubr.f32.gmra.mrb[0].mxu0 %v936
    %v1225 = vpop.f32.mrb[0].mxu0
    %v1226 = vadd.f32 %v1067, %v1225
    %v1227 = vpop.f32.mrb[0].mxu0
    %1228 = vmatprep.mubr.f32.mxu0 0.0
    %1229 = vmatmul.mubr.f32.gmra.mrb[0].mxu0 %v937
    %v1230 = vpop.f32.mrb[0].mxu0
    %v1231 = vadd.f32 %v1067, %v1230
    %v1232 = vpop.f32.mrb[0].mxu0
    %1233 = vmatprep.mubr.f32.mxu0 0.0
    %1234 = vmatmul.mubr.f32.gmra.mrb[0].mxu0 %v938
    %v1235 = vpop.f32.mrb[0].mxu0
    %v1236 = vadd.f32 %v1067, %v1235
    %v1237 = vpop.f32.mrb[0].mxu0
    %1238 = vmatprep.mubr.f32.mxu0 0.0
    %1239 = vmatmul.mubr.f32.gmra.mrb[0].mxu0 %v939
    %v1240 = vpop.f32.mrb[0].mxu0
    %v1241 = vadd.f32 %v1067, %v1240
    %v1242 = vpop.f32.mrb[0].mxu0
    %1243 = vmatprep.mubr.f32.mxu0 0.0
    %1244 = vmatmul.mubr.f32.gmra.mrb[0].mxu0 %v940
    %v1245 = vpop.f32.mrb[0].mxu0
    %v1246 = vadd.f32 %v1067, %v1245
    %v1247 = vpop.f32.mrb[0].mxu0
    %1248 = vmatprep.mubr.f32.mxu0 0.0
    %1249 = vmatmul.mubr.f32.gmra.mrb[0].mxu0 %v941
    %v1250 = vpop.f32.mrb[0].mxu0
    %v1251 = vadd.f32 %v1067, %v1250
    %v1252 = vpop.f32.mrb[0].mxu0
    %1253 = vmatprep.mubr.f32.mxu0 0.0
    %1254 = vmatmul.mubr.f32.gmra.mrb[0].mxu0 %v942
    %v1255 = vpop.f32.mrb[0].mxu0
    %v1256 = vadd.f32 %v1067, %v1255
    %v1257 = vpop.f32.mrb[0].mxu0
    %1258 = vmatprep.mubr.f32.mxu0 0.0
    %1259 = vmatmul.mubr.f32.gmra.mrb[0].mxu0 %v943
    %v1260 = vpop.f32.mrb[0].mxu0
    %v1261 = vadd.f32 %v1067, %v1260
    %v1262 = vpop.f32.mrb[0].mxu0
    %1263 = vmatprep.mubr.f32.mxu0 0.0
    %1264 = vmatmul.mubr.f32.gmra.mrb[0].mxu0 %v944
    %v1265 = vpop.f32.mrb[0].mxu0
    %v1266 = vadd.f32 %v1067, %v1265
    %v1267 = vpop.f32.mrb[0].mxu0
    %1268 = vmatprep.mubr.f32.mxu0 0.0
    %1269 = vmatmul.mubr.f32.gmra.mrb[0].mxu0 %v945
    %v1270 = vpop.f32.mrb[0].mxu0
    %v1271 = vadd.f32 %v1067, %v1270
    %v1272 = vpop.f32.mrb[0].mxu0
    %1273 = vmatprep.mubr.f32.mxu0 0.0
    %1274 = vmatmul.mubr.f32.gmra.mrb[0].mxu0 %v946
    %v1275 = vpop.f32.mrb[0].mxu0
    %v1276 = vadd.f32 %v1067, %v1275
    %v1277 = vpop.f32.mrb[0].mxu0
    %1278 = vmatprep.mubr.f32.mxu0 0.0
    %1279 = vmatmul.mubr.f32.gmra.mrb[0].mxu0 %v947
    %v1280 = vpop.f32.mrb[0].mxu0
    %v1281 = vadd.f32 %v1067, %v1280
    %v1282 = vpop.f32.mrb[0].mxu0
    %1283 = vmatprep.mubr.f32.mxu0 0.0
    %1284 = vmatmul.mubr.f32.gmra.mrb[0].mxu0 %v948
    %v1285 = vpop.f32.mrb[0].mxu0
    %v1286 = vadd.f32 %v1067, %v1285
    %v1287 = vpop.f32.mrb[0].mxu0
    %1288 = vmatprep.mubr.f32.mxu0 0.0
    %1289 = vmatmul.mubr.f32.gmra.mrb[0].mxu0 %v949
    %v1290 = vpop.f32.mrb[0].mxu0
    %v1291 = vadd.f32 %v1067, %v1290
    %v1292 = vpop.f32.mrb[0].mxu0
    %1293 = vmatprep.mubr.f32.mxu0 0.0
    %1294 = vmatmul.mubr.f32.gmra.mrb[0].mxu0 %v950
    %v1295 = vpop.f32.mrb[0].mxu0
    %v1296 = vadd.f32 %v1067, %v1295
    %v1297 = vpop.f32.mrb[0].mxu0
    %1298 = vmatprep.mubr.f32.mxu0 0.0
    %1299 = vmatmul.mubr.f32.gmra.mrb[0].mxu0 %v951
    %v1300 = vpop.f32.mrb[0].mxu0
    %v1301 = vadd.f32 %v1067, %v1300
    %v1302 = vpop.f32.mrb[0].mxu0
    %1303 = vmatprep.mubr.f32.mxu0 0.0
    %1304 = vmatmul.mubr.f32.gmra.mrb[0].mxu0 %v952
    %v1305 = vpop.f32.mrb[0].mxu0
    %v1306 = vadd.f32 %v1067, %v1305
    %v1307 = vpop.f32.mrb[0].mxu0
    %1308 = vmatprep.mubr.f32.mxu0 0.0
    %1309 = vmatmul.mubr.f32.gmra.mrb[0].mxu0 %v953
    %v1310 = vpop.f32.mrb[0].mxu0
    %v1311 = vadd.f32 %v1067, %v1310
    %v1312 = vpop.f32.mrb[0].mxu0
    %1313 = vmatprep.mubr.f32.mxu0 0.0
    %1314 = vmatmul.mubr.f32.gmra.mrb[0].mxu0 %v954
    %v1315 = vpop.f32.mrb[0].mxu0
    %v1316 = vadd.f32 %v1067, %v1315
    %v1317 = vpop.f32.mrb[0].mxu0
    %1318 = vmatprep.mubr.f32.mxu0 0.0
    %1319 = vmatmul.mubr.f32.gmra.mrb[0].mxu0 %v955
    %v1320 = vpop.f32.mrb[0].mxu0
    %v1321 = vadd.f32 %v1067, %v1320
    %v1322 = vpop.f32.mrb[0].mxu0
    %1323 = vmatprep.mubr.f32.mxu0 0.0
    %1324 = vmatmul.mubr.f32.gmra.mrb[0].mxu0 %v956
    %v1325 = vpop.f32.mrb[0].mxu0
    %v1326 = vadd.f32 %v1067, %v1325
    %v1327 = vpop.f32.mrb[0].mxu0
    %1328 = vmatprep.mubr.f32.mxu0 0.0
    %1329 = vmatmul.mubr.f32.gmra.mrb[0].mxu0 %v957
    %v1330 = vpop.f32.mrb[0].mxu0
    %v1331 = vadd.f32 %v1067, %v1330
    %v1332 = vpop.f32.mrb[0].mxu0
    %1333 = vmatprep.mubr.f32.mxu0 0.0
    %1334 = vmatmul.mubr.f32.gmra.mrb[0].mxu0 %v958
    %v1335 = vpop.f32.mrb[0].mxu0
    %v1336 = vadd.f32 %v1067, %v1335
    %v1337 = vpop.f32.mrb[0].mxu0
    %1338 = vmatprep.mubr.f32.mxu0 0.0
    %1339 = vmatmul.mubr.f32.gmra.mrb[0].mxu0 %v959
    %v1340 = vpop.f32.mrb[0].mxu0
    %v1341 = vadd.f32 %v1067, %v1340
    %v1342 = vpop.f32.mrb[0].mxu0
    %1343 = vmatprep.mubr.f32.mxu0 0.0
    %1344 = vmatmul.mubr.f32.gmra.mrb[0].mxu0 %v960
    %v1345 = vpop.f32.mrb[0].mxu0
    %v1346 = vadd.f32 %v1067, %v1345
    %v1347 = vpop.f32.mrb[0].mxu0
    %1348 = vmatprep.mubr.f32.mxu0 0.0
    %1349 = vmatmul.mubr.f32.gmra.mrb[0].mxu0 %v961
    %v1350 = vpop.f32.mrb[0].mxu0
    %v1351 = vadd.f32 %v1067, %v1350
    %v1352 = vpop.f32.mrb[0].mxu0
    %1353 = vmatprep.mubr.f32.mxu0 0.0
    %1354 = vmatmul.mubr.f32.gmra.mrb[0].mxu0 %v962
    %v1355 = vpop.f32.mrb[0].mxu0
    %v1356 = vadd.f32 %v1067, %v1355
    %v1357 = vpop.f32.mrb[0].mxu0
    %1358 = vmatprep.mubr.f32.mxu0 0.0
    %1359 = vmatmul.mubr.f32.gmra.mrb[0].mxu0 %v963
    %v1360 = vpop.f32.mrb[0].mxu0
    %v1361 = vadd.f32 %v1067, %v1360
    %v1362 = vpop.f32.mrb[0].mxu0
    %1363 = vmatprep.mubr.f32.mxu0 0.0
    %1364 = vmatmul.mubr.f32.gmra.mrb[0].mxu0 %v964
    %v1365 = vpop.f32.mrb[0].mxu0
    %v1366 = vadd.f32 %v1067, %v1365
    %v1367 = vpop.f32.mrb[0].mxu0
    %1368 = vmatprep.mubr.f32.mxu0 0.0
    %1369 = vmatmul.mubr.f32.gmra.mrb[0].mxu0 %v965
    %v1370 = vpop.f32.mrb[0].mxu0
    %v1371 = vadd.f32 %v1067, %v1370
    %v1372 = vpop.f32.mrb[0].mxu0
    %1373 = vmatprep.mubr.f32.mxu0 0.0
    %1374 = vmatmul.mubr.f32.gmra.mrb[0].mxu0 %v966
    %v1375 = vpop.f32.mrb[0].mxu0
    %v1376 = vadd.f32 %v1067, %v1375
    %v1377 = vpop.f32.mrb[0].mxu0
    %1378 = vmatprep.mubr.f32.mxu0 0.0
    %1379 = vmatmul.mubr.f32.gmra.mrb[0].mxu0 %v967
    %v1380 = vpop.f32.mrb[0].mxu0
    %v1381 = vadd.f32 %v1067, %v1380
    %v1382 = vpop.f32.mrb[0].mxu0
    %1383 = vmatprep.mubr.f32.mxu0 0.0
    %1384 = vmatmul.mubr.f32.gmra.mrb[0].mxu0 %v968
    %v1385 = vpop.f32.mrb[0].mxu0
    %v1386 = vadd.f32 %v1067, %v1385
    %v1387 = vpop.f32.mrb[0].mxu0
    %1388 = vmatprep.mubr.f32.mxu0 0.0
    %1389 = vmatmul.mubr.f32.gmra.mrb[0].mxu0 %v969
    %v1390 = vpop.f32.mrb[0].mxu0
    %v1391 = vadd.f32 %v1067, %v1390
    %v1392 = vpop.f32.mrb[0].mxu0
    %1393 = vmatprep.mubr.f32.mxu0 0.0
    %1394 = vmatmul.mubr.f32.gmra.mrb[0].mxu0 %v970
    %v1395 = vpop.f32.mrb[0].mxu0
    %v1396 = vadd.f32 %v1067, %v1395
    %v1397 = vpop.f32.mrb[0].mxu0
    %1398 = vmatprep.mubr.f32.mxu0 0.0
    %1399 = vmatmul.mubr.f32.gmra.mrb[0].mxu0 %v971
    %v1400 = vpop.f32.mrb[0].mxu0
    %v1401 = vadd.f32 %v1067, %v1400
    %v1402 = vpop.f32.mrb[0].mxu0
    %1403 = vmatprep.mubr.f32.mxu0 0.0
    %1404 = vmatmul.mubr.f32.gmra.mrb[0].mxu0 %v972
    %v1405 = vpop.f32.mrb[0].mxu0
    %v1406 = vadd.f32 %v1067, %v1405
    %v1407 = vpop.f32.mrb[0].mxu0
    %1408 = vmatprep.mubr.f32.mxu0 0.0
    %1409 = vmatmul.mubr.f32.gmra.mrb[0].mxu0 %v973
    %v1410 = vpop.f32.mrb[0].mxu0
    %v1411 = vadd.f32 %v1067, %v1410
    %v1412 = vpop.f32.mrb[0].mxu0
    %1413 = vmatprep.mubr.f32.mxu0 0.0
    %1414 = vmatmul.mubr.f32.gmra.mrb[0].mxu0 %v974
    %v1415 = vpop.f32.mrb[0].mxu0
    %v1416 = vadd.f32 %v1067, %v1415
    %v1417 = vpop.f32.mrb[0].mxu0
    %1418 = vmatprep.mubr.f32.mxu0 0.0
    %1419 = vmatmul.mubr.f32.gmra.mrb[0].mxu0 %v975
    %v1420 = vpop.f32.mrb[0].mxu0
    %v1421 = vadd.f32 %v1067, %v1420
    %v1422 = vpop.f32.mrb[0].mxu0
    %1423 = vmatprep.mubr.f32.mxu0 0.0
    %1424 = vmatmul.mubr.f32.gmra.mrb[0].mxu0 %v976
    %v1425 = vpop.f32.mrb[0].mxu0
    %v1426 = vadd.f32 %v1067, %v1425
    %v1427 = vpop.f32.mrb[0].mxu0
    %1428 = vmatprep.mubr.f32.mxu0 0.0
    %1429 = vmatmul.mubr.f32.gmra.mrb[0].mxu0 %v977
    %v1430 = vpop.f32.mrb[0].mxu0
    %v1431 = vadd.f32 %v1067, %v1430
    %v1432 = vpop.f32.mrb[0].mxu0
    %1433 = vmatprep.mubr.f32.mxu0 0.0
    %1434 = vmatmul.mubr.f32.gmra.mrb[0].mxu0 %v978
    %v1435 = vpop.f32.mrb[0].mxu0
    %v1436 = vadd.f32 %v1067, %v1435
    %v1437 = vpop.f32.mrb[0].mxu0
    %1438 = vmatprep.mubr.f32.mxu0 0.0
    %1439 = vmatmul.mubr.f32.gmra.mrb[0].mxu0 %v979
    %v1440 = vpop.f32.mrb[0].mxu0
    %v1441 = vadd.f32 %v1067, %v1440
    %v1442 = vpop.f32.mrb[0].mxu0
    %1443 = vmatprep.mubr.f32.mxu0 0.0
    %1444 = vmatmul.mubr.f32.gmra.mrb[0].mxu0 %v980
    %v1445 = vpop.f32.mrb[0].mxu0
    %v1446 = vadd.f32 %v1067, %v1445
    %v1447 = vpop.f32.mrb[0].mxu0
    %1448 = vmatprep.mubr.f32.mxu0 0.0
    %1449 = vmatmul.mubr.f32.gmra.mrb[0].mxu0 %v981
    %v1450 = vpop.f32.mrb[0].mxu0
    %v1451 = vadd.f32 %v1067, %v1450
    %v1452 = vpop.f32.mrb[0].mxu0
    %1453 = vmatprep.mubr.f32.mxu0 0.0
    %1454 = vmatmul.mubr.f32.gmra.mrb[0].mxu0 %v982
    %v1455 = vpop.f32.mrb[0].mxu0
    %v1456 = vadd.f32 %v1067, %v1455
    %v1457 = vpop.f32.mrb[0].mxu0
    %1458 = vmatprep.mubr.f32.mxu0 0.0
    %1459 = vmatmul.mubr.f32.gmra.mrb[0].mxu0 %v983
    %v1460 = vpop.f32.mrb[0].mxu0
    %v1461 = vadd.f32 %v1067, %v1460
    %v1462 = vpop.f32.mrb[0].mxu0
    %1463 = vmatprep.mubr.f32.mxu0 0.0
    %1464 = vmatmul.mubr.f32.gmra.mrb[0].mxu0 %v984
    %v1465 = vpop.f32.mrb[0].mxu0
    %v1466 = vadd.f32 %v1067, %v1465
    %v1467 = vpop.f32.mrb[0].mxu0
    %1468 = vmatprep.mubr.f32.mxu0 0.0
    %1469 = vmatmul.mubr.f32.gmra.mrb[0].mxu0 %v985
    %v1470 = vpop.f32.mrb[0].mxu0
    %v1471 = vadd.f32 %v1067, %v1470
    %v1472 = vpop.f32.mrb[0].mxu0
    %1473 = vmatprep.mubr.f32.mxu0 0.0
    %1474 = vmatmul.mubr.f32.gmra.mrb[0].mxu0 %v986
    %v1475 = vpop.f32.mrb[0].mxu0
    %v1476 = vadd.f32 %v1067, %v1475
    %v1477 = vpop.f32.mrb[0].mxu0
    %1478 = vmatprep.mubr.f32.mxu0 0.0
    %1479 = vmatmul.mubr.f32.gmra.mrb[0].mxu0 %v987
    %v1480 = vpop.f32.mrb[0].mxu0
    %v1481 = vadd.f32 %v1067, %v1480
    %v1482 = vpop.f32.mrb[0].mxu0
    %1483 = vmatprep.mubr.f32.mxu0 0.0
    %1484 = vmatmul.mubr.f32.gmra.mrb[0].mxu0 %v988
    %v1485 = vpop.f32.mrb[0].mxu0
    %v1486 = vadd.f32 %v1067, %v1485
    %v1487 = vpop.f32.mrb[0].mxu0
    %1488 = vmatprep.mubr.f32.mxu0 0.0
    %1489 = vmatmul.mubr.f32.gmra.mrb[0].mxu0 %v989
    %v1490 = vpop.f32.mrb[0].mxu0
    %v1491 = vadd.f32 %v1067, %v1490
    %v1492 = vpop.f32.mrb[0].mxu0
    %1493 = vmatprep.mubr.f32.mxu0 0.0
    %1494 = vmatmul.mubr.f32.gmra.mrb[0].mxu0 %v990
    %v1495 = vpop.f32.mrb[0].mxu0
    %v1496 = vadd.f32 %v1067, %v1495
    %v1497 = vpop.f32.mrb[0].mxu0
    %1498 = vmatprep.mubr.f32.mxu0 0.0
    %1499 = vmatmul.mubr.f32.gmra.mrb[0].mxu0 %v991
    %v1500 = vpop.f32.mrb[0].mxu0
    %v1501 = vadd.f32 %v1067, %v1500
    %v1502 = vpop.f32.mrb[0].mxu0
    %1503 = vmatprep.mubr.f32.mxu0 0.0
    %1504 = vmatmul.mubr.f32.gmra.mrb[0].mxu0 %v992
    %v1505 = vpop.f32.mrb[0].mxu0
    %v1506 = vadd.f32 %v1067, %v1505
    %v1507 = vpop.f32.mrb[0].mxu0
    %1508 = vmatprep.mubr.f32.mxu0 0.0
    %1509 = vmatmul.mubr.f32.gmra.mrb[0].mxu0 %v993
    %v1510 = vpop.f32.mrb[0].mxu0
    %v1511 = vadd.f32 %v1067, %v1510
    %v1512 = vpop.f32.mrb[0].mxu0
    %1513 = vmatprep.mubr.f32.mxu0 0.0
    %1514 = vmatmul.mubr.f32.gmra.mrb[0].mxu0 %v994
    %v1515 = vpop.f32.mrb[0].mxu0
    %v1516 = vadd.f32 %v1067, %v1515
    %v1517 = vpop.f32.mrb[0].mxu0
    %1518 = vmatprep.mubr.f32.mxu0 0.0
    %1519 = vmatmul.mubr.f32.gmra.mrb[0].mxu0 %v995
    %v1520 = vpop.f32.mrb[0].mxu0
    %v1521 = vadd.f32 %v1067, %v1520
    %v1522 = vpop.f32.mrb[0].mxu0
    %1523 = vmatprep.mubr.f32.mxu0 0.0
    %1524 = vmatmul.mubr.f32.gmra.mrb[0].mxu0 %v996
    %v1525 = vpop.f32.mrb[0].mxu0
    %v1526 = vadd.f32 %v1067, %v1525
    %v1527 = vpop.f32.mrb[0].mxu0
    %1528 = vmatprep.mubr.f32.mxu0 0.0
    %1529 = vmatmul.mubr.f32.gmra.mrb[0].mxu0 %v997
    %v1530 = vpop.f32.mrb[0].mxu0
    %v1531 = vadd.f32 %v1067, %v1530
    %v1532 = vpop.f32.mrb[0].mxu0
    %1533 = vmatprep.mubr.f32.mxu0 0.0
    %1534 = vmatmul.mubr.f32.gmra.mrb[0].mxu0 %v998
    %v1535 = vpop.f32.mrb[0].mxu0
    %v1536 = vadd.f32 %v1067, %v1535
    %v1537 = vpop.f32.mrb[0].mxu0
    %1538 = vmatprep.mubr.f32.mxu0 0.0
    %1539 = vmatmul.mubr.f32.gmra.mrb[0].mxu0 %v999
    %v1540 = vpop.f32.mrb[0].mxu0
    %v1541 = vadd.f32 %v1067, %v1540
    %v1542 = vpop.f32.mrb[0].mxu0
    %1543 = vmatprep.mubr.f32.mxu0 0.0
    %1544 = vmatmul.mubr.f32.gmra.mrb[0].mxu0 %v1000
    %v1545 = vpop.f32.mrb[0].mxu0
    %v1546 = vadd.f32 %v1067, %v1545
    %v1547 = vpop.f32.mrb[0].mxu0
    %1548 = vmatprep.mubr.f32.mxu0 0.0
    %1549 = vmatmul.mubr.f32.gmra.mrb[0].mxu0 %v1001
    %v1550 = vpop.f32.mrb[0].mxu0
    %v1551 = vadd.f32 %v1067, %v1550
    %v1552 = vpop.f32.mrb[0].mxu0
    %1553 = vmatprep.mubr.f32.mxu0 0.0
    %1554 = vmatmul.mubr.f32.gmra.mrb[0].mxu0 %v1002
    %v1555 = vpop.f32.mrb[0].mxu0
    %v1556 = vadd.f32 %v1067, %v1555
    %v1557 = vpop.f32.mrb[0].mxu0
    %1558 = vmatprep.mubr.f32.mxu0 0.0
    %1559 = vmatmul.mubr.f32.gmra.mrb[0].mxu0 %v1003
    %v1560 = vpop.f32.mrb[0].mxu0
    %v1561 = vadd.f32 %v1067, %v1560
    %v1562 = vpop.f32.mrb[0].mxu0
    %1563 = vmatprep.mubr.f32.mxu0 0.0
    %1564 = vmatmul.mubr.f32.gmra.mrb[0].mxu0 %v1004
    %v1565 = vpop.f32.mrb[0].mxu0
    %v1566 = vadd.f32 %v1067, %v1565
    %v1567 = vpop.f32.mrb[0].mxu0
    %1568 = vmatprep.mubr.f32.mxu0 0.0
    %1569 = vmatmul.mubr.f32.gmra.mrb[0].mxu0 %v1005
    %v1570 = vpop.f32.mrb[0].mxu0
    %v1571 = vadd.f32 %v1067, %v1570
    %v1572 = vpop.f32.mrb[0].mxu0
    %1573 = vmatprep.mubr.f32.mxu0 0.0
    %1574 = vmatmul.mubr.f32.gmra.mrb[0].mxu0 %v1006
    %v1575 = vpop.f32.mrb[0].mxu0
    %v1576 = vadd.f32 %v1067, %v1575
    %v1577 = vpop.f32.mrb[0].mxu0
    %1578 = vmatprep.mubr.f32.mxu0 0.0
    %1579 = vmatmul.mubr.f32.gmra.mrb[0].mxu0 %v1007
    %v1580 = vpop.f32.mrb[0].mxu0
    %v1581 = vadd.f32 %v1067, %v1580
    %v1582 = vpop.f32.mrb[0].mxu0
    %1583 = vmatprep.mubr.f32.mxu0 0.0
    %1584 = vmatmul.mubr.f32.gmra.mrb[0].mxu0 %v1008
    %v1585 = vpop.f32.mrb[0].mxu0
    %v1586 = vadd.f32 %v1067, %v1585
    %v1587 = vpop.f32.mrb[0].mxu0
    %1588 = vmatprep.mubr.f32.mxu0 0.0
    %1589 = vmatmul.mubr.f32.gmra.mrb[0].mxu0 %v1009
    %v1590 = vpop.f32.mrb[0].mxu0
    %v1591 = vadd.f32 %v1067, %v1590
    %v1592 = vpop.f32.mrb[0].mxu0
    %1593 = vmatprep.mubr.f32.mxu0 0.0
    %1594 = vmatmul.mubr.f32.gmra.mrb[0].mxu0 %v1010
    %v1595 = vpop.f32.mrb[0].mxu0
    %v1596 = vadd.f32 %v1067, %v1595
    %v1597 = vpop.f32.mrb[0].mxu0
    %1598 = vmatprep.mubr.f32.mxu0 0.0
    %1599 = vmatmul.mubr.f32.gmra.mrb[0].mxu0 %v1011
    %v1600 = vpop.f32.mrb[0].mxu0
    %v1601 = vadd.f32 %v1067, %v1600
    %v1602 = vpop.f32.mrb[0].mxu0
    %1603 = vmatprep.mubr.f32.mxu0 0.0
    %1604 = vmatmul.mubr.f32.gmra.mrb[0].mxu0 %v1012
    %v1605 = vpop.f32.mrb[0].mxu0
    %v1606 = vadd.f32 %v1067, %v1605
    %v1607 = vpop.f32.mrb[0].mxu0
    %1608 = vmatprep.mubr.f32.mxu0 0.0
    %1609 = vmatmul.mubr.f32.gmra.mrb[0].mxu0 %v1013
    %v1610 = vpop.f32.mrb[0].mxu0
    %v1611 = vadd.f32 %v1067, %v1610
    %v1612 = vpop.f32.mrb[0].mxu0
    %1613 = vmatprep.mubr.f32.mxu0 0.0
    %1614 = vmatmul.mubr.f32.gmra.mrb[0].mxu0 %v1014
    %v1615 = vpop.f32.mrb[0].mxu0
    %v1616 = vadd.f32 %v1067, %v1615
    %v1617 = vpop.f32.mrb[0].mxu0
    %1618 = vmatprep.mubr.f32.mxu0 0.0
    %1619 = vmatmul.mubr.f32.gmra.mrb[0].mxu0 %v1015
    %v1620 = vpop.f32.mrb[0].mxu0
    %v1621 = vadd.f32 %v1067, %v1620
    %v1622 = vpop.f32.mrb[0].mxu0
    %1623 = vmatprep.mubr.f32.mxu0 0.0
    %1624 = vmatmul.mubr.f32.gmra.mrb[0].mxu0 %v1016
    %v1625 = vpop.f32.mrb[0].mxu0
    %v1626 = vadd.f32 %v1067, %v1625
    %v1627 = vpop.f32.mrb[0].mxu0
    %1628 = vmatprep.mubr.f32.mxu0 0.0
    %1629 = vmatmul.mubr.f32.gmra.mrb[0].mxu0 %v1017
    %v1630 = vpop.f32.mrb[0].mxu0
    %v1631 = vadd.f32 %v1067, %v1630
    %v1632 = vpop.f32.mrb[0].mxu0
    %1633 = vmatprep.mubr.f32.mxu0 0.0
    %1634 = vmatmul.mubr.f32.gmra.mrb[0].mxu0 %v1018
    %v1635 = vpop.f32.mrb[0].mxu0
    %v1636 = vadd.f32 %v1067, %v1635
    %v1637 = vpop.f32.mrb[0].mxu0
    %1638 = vmatprep.mubr.f32.mxu0 0.0
    %1639 = vmatmul.mubr.f32.gmra.mrb[0].mxu0 %v1019
    %v1640 = vpop.f32.mrb[0].mxu0
    %v1641 = vadd.f32 %v1067, %v1640
    %v1642 = vpop.f32.mrb[0].mxu0
    %1643 = vmatprep.mubr.f32.mxu0 0.0
    %1644 = vmatmul.mubr.f32.gmra.mrb[0].mxu0 %v1020
    %v1645 = vpop.f32.mrb[0].mxu0
    %v1646 = vadd.f32 %v1067, %v1645
    %v1647 = vpop.f32.mrb[0].mxu0
    %1648 = vmatprep.mubr.f32.mxu0 0.0
    %1649 = vmatmul.mubr.f32.gmra.mrb[0].mxu0 %v1021
    %v1650 = vpop.f32.mrb[0].mxu0
    %v1651 = vadd.f32 %v1067, %v1650
    %v1652 = vpop.f32.mrb[0].mxu0
    %1653 = vmatprep.mubr.f32.mxu0 0.0
    %1654 = vmatmul.mubr.f32.gmra.mrb[0].mxu0 %v1022
    %v1655 = vpop.f32.mrb[0].mxu0
    %v1656 = vadd.f32 %v1067, %v1655
    %v1657 = vpop.f32.mrb[0].mxu0
    %1658 = vmatprep.mubr.f32.mxu0 0.0
    %1659 = vmatmul.mubr.f32.gmra.mrb[0].mxu0 %v1023
    %v1660 = vpop.f32.mrb[0].mxu0
    %v1661 = vadd.f32 %v1067, %v1660
    %v1662 = vpop.f32.mrb[0].mxu0
    %1663 = vmatprep.mubr.f32.mxu0 0.0
    %1664 = vmatmul.mubr.f32.gmra.mrb[0].mxu0 %v1024
    %v1665 = vpop.f32.mrb[0].mxu0
    %v1666 = vadd.f32 %v1067, %v1665
    %v1667 = vpop.f32.mrb[0].mxu0
    %1668 = vmatprep.mubr.f32.mxu0 0.0
    %1669 = vmatmul.mubr.f32.gmra.mrb[0].mxu0 %v1025
    %v1670 = vpop.f32.mrb[0].mxu0
    %v1671 = vadd.f32 %v1067, %v1670
    %v1672 = vpop.f32.mrb[0].mxu0
    %1673 = vmatprep.mubr.f32.mxu0 0.0
    %1674 = vmatmul.mubr.f32.gmra.mrb[0].mxu0 %v1026
    %v1675 = vpop.f32.mrb[0].mxu0
    %v1676 = vadd.f32 %v1067, %v1675
    %v1677 = vpop.f32.mrb[0].mxu0
    %1678 = vmatprep.mubr.f32.mxu0 0.0
    %1679 = vmatmul.mubr.f32.gmra.mrb[0].mxu0 %v1027
    %v1680 = vpop.f32.mrb[0].mxu0
    %v1681 = vadd.f32 %v1067, %v1680
    %v1682 = vpop.f32.mrb[0].mxu0
    %1683 = vmatprep.mubr.f32.mxu0 0.0
    %1684 = vmatmul.mubr.f32.gmra.mrb[0].mxu0 %v1028
    %v1685 = vpop.f32.mrb[0].mxu0
    %v1686 = vadd.f32 %v1067, %v1685
    %v1687 = vpop.f32.mrb[0].mxu0
    %1688 = vmatprep.mubr.f32.mxu0 0.0
    %1689 = vmatmul.mubr.f32.gmra.mrb[0].mxu0 %v1029
    %v1690 = vpop.f32.mrb[0].mxu0
    %v1691 = vadd.f32 %v1067, %v1690
    %v1692 = vpop.f32.mrb[0].mxu0
    %1693 = vmatprep.mubr.f32.mxu0 0.0
    %1694 = vmatmul.mubr.f32.gmra.mrb[0].mxu0 %v1030
    %v1695 = vpop.f32.mrb[0].mxu0
    %v1696 = vadd.f32 %v1067, %v1695
    %v1697 = vpop.f32.mrb[0].mxu0
    %1698 = vmatprep.mubr.f32.mxu0 0.0
    %1699 = vmatmul.mubr.f32.gmra.mrb[0].mxu0 %v1031
    %v1700 = vpop.f32.mrb[0].mxu0
    %v1701 = vadd.f32 %v1067, %v1700
    %v1702 = vpop.f32.mrb[0].mxu0
    %1703 = vmatprep.mubr.f32.mxu0 0.0
    %1704 = vmatmul.mubr.f32.gmra.mrb[0].mxu0 %v1032
    %v1705 = vpop.f32.mrb[0].mxu0
    %v1706 = vadd.f32 %v1067, %v1705
    %v1707 = vpop.f32.mrb[0].mxu0
    %1708 = vmatprep.mubr.f32.mxu0 0.0
    %1709 = vmatmul.mubr.f32.gmra.mrb[0].mxu0 %v1033
    %v1710 = vpop.f32.mrb[0].mxu0
    %v1711 = vadd.f32 %v1067, %v1710
    %v1712 = vpop.f32.mrb[0].mxu0
    %1713 = vmatprep.mubr.f32.mxu0 0.0
    %1714 = vmatmul.mubr.f32.gmra.mrb[0].mxu0 %v1034
    %v1715 = vpop.f32.mrb[0].mxu0
    %v1716 = vadd.f32 %v1067, %v1715
    %v1717 = vpop.f32.mrb[0].mxu0
    %1718 = vmatprep.mubr.f32.mxu0 0.0
    %1719 = vmatmul.mubr.f32.gmra.mrb[0].mxu0 %v1035
    %v1720 = vpop.f32.mrb[0].mxu0
    %v1721 = vadd.f32 %v1067, %v1720
    %v1722 = vpop.f32.mrb[0].mxu0
    %1723 = vmatprep.mubr.f32.mxu0 0.0
    %1724 = vmatmul.mubr.f32.gmra.mrb[0].mxu0 %v1036
    %v1725 = vpop.f32.mrb[0].mxu0
    %v1726 = vadd.f32 %v1067, %v1725
    %v1727 = vpop.f32.mrb[0].mxu0
    %1728 = vmatprep.mubr.f32.mxu0 0.0
    %1729 = vmatmul.mubr.f32.gmra.mrb[0].mxu0 %v1037
    %v1730 = vpop.f32.mrb[0].mxu0
    %v1731 = vadd.f32 %v1067, %v1730
    %v1732 = vpop.f32.mrb[0].mxu0
    %1733 = vmatprep.mubr.f32.mxu0 0.0
    %1734 = vmatmul.mubr.f32.gmra.mrb[0].mxu0 %v1038
    %v1735 = vpop.f32.mrb[0].mxu0
    %v1736 = vadd.f32 %v1067, %v1735
    %v1737 = vpop.f32.mrb[0].mxu0
    %1738 = vmatprep.mubr.f32.mxu0 0.0
    %1739 = vmatmul.mubr.f32.gmra.mrb[0].mxu0 %v1039
    %v1740 = vpop.f32.mrb[0].mxu0
    %v1741 = vadd.f32 %v1067, %v1740
    %v1742 = vpop.f32.mrb[0].mxu0
    %1743 = vmatprep.mubr.f32.mxu0 0.0
    %1744 = vmatmul.mubr.f32.gmra.mrb[0].mxu0 %v1040
    %v1745 = vpop.f32.mrb[0].mxu0
    %v1746 = vadd.f32 %v1067, %v1745
    %v1747 = vpop.f32.mrb[0].mxu0
    %1748 = vmatprep.mubr.f32.mxu0 0.0
    %1749 = vmatmul.mubr.f32.gmra.mrb[0].mxu0 %v1041
    %v1750 = vpop.f32.mrb[0].mxu0
    %v1751 = vadd.f32 %v1067, %v1750
    %v1752 = vpop.f32.mrb[0].mxu0
    %1753 = vmatprep.mubr.f32.mxu0 0.0
    %1754 = vmatmul.mubr.f32.gmra.mrb[0].mxu0 %v1042
    %v1755 = vpop.f32.mrb[0].mxu0
    %v1756 = vadd.f32 %v1067, %v1755
    %v1757 = vpop.f32.mrb[0].mxu0
    %1758 = vmatprep.mubr.f32.mxu0 0.0
    %1759 = vmatmul.mubr.f32.gmra.mrb[0].mxu0 %v1043
    %v1760 = vpop.f32.mrb[0].mxu0
    %v1761 = vadd.f32 %v1067, %v1760
    %v1762 = vpop.f32.mrb[0].mxu0
    %1763 = vmatprep.mubr.f32.mxu0 0.0
    %1764 = vmatmul.mubr.f32.gmra.mrb[0].mxu0 %v1044
    %v1765 = vpop.f32.mrb[0].mxu0
    %v1766 = vadd.f32 %v1067, %v1765
    %v1767 = vpop.f32.mrb[0].mxu0
    %1768 = vmatprep.mubr.f32.mxu0 0.0
    %1769 = vmatmul.mubr.f32.gmra.mrb[0].mxu0 %v1045
    %v1770 = vpop.f32.mrb[0].mxu0
    %v1771 = vadd.f32 %v1067, %v1770
    %v1772 = vpop.f32.mrb[0].mxu0
    %1773 = vdwg.mxu0
    %v1774 = vmax.f32 %v1136, 1e-06
    %v1775 = vmax.f32 %v1141, 1e-06
    %v1776 = vmax.f32 %v1146, 1e-06
    %v1777 = vmax.f32 %v1151, 1e-06
    %v1778 = vmax.f32 %v1156, 1e-06
    %v1779 = vmax.f32 %v1161, 1e-06
    %v1780 = vmax.f32 %v1166, 1e-06
    %v1781 = vmax.f32 %v1171, 1e-06
    %v1782 = vmax.f32 %v1176, 1e-06
    %v1783 = vmax.f32 %v1181, 1e-06
    %v1784 = vmax.f32 %v1186, 1e-06
    %v1785 = vmax.f32 %v1191, 1e-06
    %v1786 = vmax.f32 %v1196, 1e-06
    %v1787 = vmax.f32 %v1201, 1e-06
    %v1788 = vmax.f32 %v1206, 1e-06
    %v1789 = vmax.f32 %v1211, 1e-06
    %v1790 = vmax.f32 %v1216, 1e-06
    %v1791 = vmax.f32 %v1221, 1e-06
    %v1792 = vmax.f32 %v1226, 1e-06
    %v1793 = vmax.f32 %v1231, 1e-06
    %v1794 = vmax.f32 %v1236, 1e-06
    %v1795 = vmax.f32 %v1241, 1e-06
    %v1796 = vmax.f32 %v1246, 1e-06
    %v1797 = vmax.f32 %v1251, 1e-06
    %v1798 = vmax.f32 %v1256, 1e-06
    %v1799 = vmax.f32 %v1261, 1e-06
    %v1800 = vmax.f32 %v1266, 1e-06
    %v1801 = vmax.f32 %v1271, 1e-06
    %v1802 = vmax.f32 %v1276, 1e-06
    %v1803 = vmax.f32 %v1281, 1e-06
    %v1804 = vmax.f32 %v1286, 1e-06
    %v1805 = vmax.f32 %v1291, 1e-06
    %v1806 = vmax.f32 %v1296, 1e-06
    %v1807 = vmax.f32 %v1301, 1e-06
    %v1808 = vmax.f32 %v1306, 1e-06
    %v1809 = vmax.f32 %v1311, 1e-06
    %v1810 = vmax.f32 %v1316, 1e-06
    %v1811 = vmax.f32 %v1321, 1e-06
    %v1812 = vmax.f32 %v1326, 1e-06
    %v1813 = vmax.f32 %v1331, 1e-06
    %v1814 = vmax.f32 %v1336, 1e-06
    %v1815 = vmax.f32 %v1341, 1e-06
    %v1816 = vmax.f32 %v1346, 1e-06
    %v1817 = vmax.f32 %v1351, 1e-06
    %v1818 = vmax.f32 %v1356, 1e-06
    %v1819 = vmax.f32 %v1361, 1e-06
    %v1820 = vmax.f32 %v1366, 1e-06
    %v1821 = vmax.f32 %v1371, 1e-06
    %v1822 = vmax.f32 %v1376, 1e-06
    %v1823 = vmax.f32 %v1381, 1e-06
    %v1824 = vmax.f32 %v1386, 1e-06
    %v1825 = vmax.f32 %v1391, 1e-06
    %v1826 = vmax.f32 %v1396, 1e-06
    %v1827 = vmax.f32 %v1401, 1e-06
    %v1828 = vmax.f32 %v1406, 1e-06
    %v1829 = vmax.f32 %v1411, 1e-06
    %v1830 = vmax.f32 %v1416, 1e-06
    %v1831 = vmax.f32 %v1421, 1e-06
    %v1832 = vmax.f32 %v1426, 1e-06
    %v1833 = vmax.f32 %v1431, 1e-06
    %v1834 = vmax.f32 %v1436, 1e-06
    %v1835 = vmax.f32 %v1441, 1e-06
    %v1836 = vmax.f32 %v1446, 1e-06
    %v1837 = vmax.f32 %v1451, 1e-06
    %v1838 = vmax.f32 %v1456, 1e-06
    %v1839 = vmax.f32 %v1461, 1e-06
    %v1840 = vmax.f32 %v1466, 1e-06
    %v1841 = vmax.f32 %v1471, 1e-06
    %v1842 = vmax.f32 %v1476, 1e-06
    %v1843 = vmax.f32 %v1481, 1e-06
    %v1844 = vmax.f32 %v1486, 1e-06
    %v1845 = vmax.f32 %v1491, 1e-06
    %v1846 = vmax.f32 %v1496, 1e-06
    %v1847 = vmax.f32 %v1501, 1e-06
    %v1848 = vmax.f32 %v1506, 1e-06
    %v1849 = vmax.f32 %v1511, 1e-06
    %v1850 = vmax.f32 %v1516, 1e-06
    %v1851 = vmax.f32 %v1521, 1e-06
    %v1852 = vmax.f32 %v1526, 1e-06
    %v1853 = vmax.f32 %v1531, 1e-06
    %v1854 = vmax.f32 %v1536, 1e-06
    %v1855 = vmax.f32 %v1541, 1e-06
    %v1856 = vmax.f32 %v1546, 1e-06
    %v1857 = vmax.f32 %v1551, 1e-06
    %v1858 = vmax.f32 %v1556, 1e-06
    %v1859 = vmax.f32 %v1561, 1e-06
    %v1860 = vmax.f32 %v1566, 1e-06
    %v1861 = vmax.f32 %v1571, 1e-06
    %v1862 = vmax.f32 %v1576, 1e-06
    %v1863 = vmax.f32 %v1581, 1e-06
    %v1864 = vmax.f32 %v1586, 1e-06
    %v1865 = vmax.f32 %v1591, 1e-06
    %v1866 = vmax.f32 %v1596, 1e-06
    %v1867 = vmax.f32 %v1601, 1e-06
    %v1868 = vmax.f32 %v1606, 1e-06
    %v1869 = vmax.f32 %v1611, 1e-06
    %v1870 = vmax.f32 %v1616, 1e-06
    %v1871 = vmax.f32 %v1621, 1e-06
    %v1872 = vmax.f32 %v1626, 1e-06
    %v1873 = vmax.f32 %v1631, 1e-06
    %v1874 = vmax.f32 %v1636, 1e-06
    %v1875 = vmax.f32 %v1641, 1e-06
    %v1876 = vmax.f32 %v1646, 1e-06
    %v1877 = vmax.f32 %v1651, 1e-06
    %v1878 = vmax.f32 %v1656, 1e-06
    %v1879 = vmax.f32 %v1661, 1e-06
    %v1880 = vmax.f32 %v1666, 1e-06
    %v1881 = vmax.f32 %v1671, 1e-06
    %v1882 = vmax.f32 %v1676, 1e-06
    %v1883 = vmax.f32 %v1681, 1e-06
    %v1884 = vmax.f32 %v1686, 1e-06
    %v1885 = vmax.f32 %v1691, 1e-06
    %v1886 = vmax.f32 %v1696, 1e-06
    %v1887 = vmax.f32 %v1701, 1e-06
    %v1888 = vmax.f32 %v1706, 1e-06
    %v1889 = vmax.f32 %v1711, 1e-06
    %v1890 = vmax.f32 %v1716, 1e-06
    %v1891 = vmax.f32 %v1721, 1e-06
    %v1892 = vmax.f32 %v1726, 1e-06
    %v1893 = vmax.f32 %v1731, 1e-06
    %v1894 = vmax.f32 %v1736, 1e-06
    %v1895 = vmax.f32 %v1741, 1e-06
    %v1896 = vmax.f32 %v1746, 1e-06
    %v1897 = vmax.f32 %v1751, 1e-06
    %v1898 = vmax.f32 %v1756, 1e-06
    %v1899 = vmax.f32 %v1761, 1e-06
    %v1900 = vmax.f32 %v1766, 1e-06
    %v1901 = vmax.f32 %v1771, 1e-06
    %v1902 = vmul.f32 %v1774, %v1774
    %v1903 = vmul.f32 %v1775, %v1775
    %v1904 = vmul.f32 %v1776, %v1776
    %v1905 = vmul.f32 %v1777, %v1777
    %v1906 = vmul.f32 %v1778, %v1778
    %v1907 = vmul.f32 %v1779, %v1779
    %v1908 = vmul.f32 %v1780, %v1780
    %v1909 = vmul.f32 %v1781, %v1781
    %v1910 = vmul.f32 %v1782, %v1782
    %v1911 = vmul.f32 %v1783, %v1783
    %v1912 = vmul.f32 %v1784, %v1784
    %v1913 = vmul.f32 %v1785, %v1785
    %v1914 = vmul.f32 %v1786, %v1786
    %v1915 = vmul.f32 %v1787, %v1787
    %v1916 = vmul.f32 %v1788, %v1788
    %v1917 = vmul.f32 %v1789, %v1789
    %v1918 = vmul.f32 %v1790, %v1790
    %v1919 = vmul.f32 %v1791, %v1791
    %v1920 = vmul.f32 %v1792, %v1792
    %v1921 = vmul.f32 %v1793, %v1793
    %v1922 = vmul.f32 %v1794, %v1794
    %v1923 = vmul.f32 %v1795, %v1795
    %v1924 = vmul.f32 %v1796, %v1796
    %v1925 = vmul.f32 %v1797, %v1797
    %v1926 = vmul.f32 %v1798, %v1798
    %v1927 = vmul.f32 %v1799, %v1799
    %v1928 = vmul.f32 %v1800, %v1800
    %v1929 = vmul.f32 %v1801, %v1801
    %v1930 = vmul.f32 %v1802, %v1802
    %v1931 = vmul.f32 %v1803, %v1803
    %v1932 = vmul.f32 %v1804, %v1804
    %v1933 = vmul.f32 %v1805, %v1805
    %v1934 = vmul.f32 %v1806, %v1806
    %v1935 = vmul.f32 %v1807, %v1807
    %v1936 = vmul.f32 %v1808, %v1808
    %v1937 = vmul.f32 %v1809, %v1809
    %v1938 = vmul.f32 %v1810, %v1810
    %v1939 = vmul.f32 %v1811, %v1811
    %v1940 = vmul.f32 %v1812, %v1812
    %v1941 = vmul.f32 %v1813, %v1813
    %v1942 = vmul.f32 %v1814, %v1814
    %v1943 = vmul.f32 %v1815, %v1815
    %v1944 = vmul.f32 %v1816, %v1816
    %v1945 = vmul.f32 %v1817, %v1817
    %v1946 = vmul.f32 %v1818, %v1818
    %v1947 = vmul.f32 %v1819, %v1819
    %v1948 = vmul.f32 %v1820, %v1820
    %v1949 = vmul.f32 %v1821, %v1821
    %v1950 = vmul.f32 %v1822, %v1822
    %v1951 = vmul.f32 %v1823, %v1823
    %v1952 = vmul.f32 %v1824, %v1824
    %v1953 = vmul.f32 %v1825, %v1825
    %v1954 = vmul.f32 %v1826, %v1826
    %v1955 = vmul.f32 %v1827, %v1827
    %v1956 = vmul.f32 %v1828, %v1828
    %v1957 = vmul.f32 %v1829, %v1829
    %v1958 = vmul.f32 %v1830, %v1830
    %v1959 = vmul.f32 %v1831, %v1831
    %v1960 = vmul.f32 %v1832, %v1832
    %v1961 = vmul.f32 %v1833, %v1833
    %v1962 = vmul.f32 %v1834, %v1834
    %v1963 = vmul.f32 %v1835, %v1835
    %v1964 = vmul.f32 %v1836, %v1836
    %v1965 = vmul.f32 %v1837, %v1837
    %v1966 = vmul.f32 %v1838, %v1838
    %v1967 = vmul.f32 %v1839, %v1839
    %v1968 = vmul.f32 %v1840, %v1840
    %v1969 = vmul.f32 %v1841, %v1841
    %v1970 = vmul.f32 %v1842, %v1842
    %v1971 = vmul.f32 %v1843, %v1843
    %v1972 = vmul.f32 %v1844, %v1844
    %v1973 = vmul.f32 %v1845, %v1845
    %v1974 = vmul.f32 %v1846, %v1846
    %v1975 = vmul.f32 %v1847, %v1847
    %v1976 = vmul.f32 %v1848, %v1848
    %v1977 = vmul.f32 %v1849, %v1849
    %v1978 = vmul.f32 %v1850, %v1850
    %v1979 = vmul.f32 %v1851, %v1851
    %v1980 = vmul.f32 %v1852, %v1852
    %v1981 = vmul.f32 %v1853, %v1853
    %v1982 = vmul.f32 %v1854, %v1854
    %v1983 = vmul.f32 %v1855, %v1855
    %v1984 = vmul.f32 %v1856, %v1856
    %v1985 = vmul.f32 %v1857, %v1857
    %v1986 = vmul.f32 %v1858, %v1858
    %v1987 = vmul.f32 %v1859, %v1859
    %v1988 = vmul.f32 %v1860, %v1860
    %v1989 = vmul.f32 %v1861, %v1861
    %v1990 = vmul.f32 %v1862, %v1862
    %v1991 = vmul.f32 %v1863, %v1863
    %v1992 = vmul.f32 %v1864, %v1864
    %v1993 = vmul.f32 %v1865, %v1865
    %v1994 = vmul.f32 %v1866, %v1866
    %v1995 = vmul.f32 %v1867, %v1867
    %v1996 = vmul.f32 %v1868, %v1868
    %v1997 = vmul.f32 %v1869, %v1869
    %v1998 = vmul.f32 %v1870, %v1870
    %v1999 = vmul.f32 %v1871, %v1871
    %v2000 = vmul.f32 %v1872, %v1872
    %v2001 = vmul.f32 %v1873, %v1873
    %v2002 = vmul.f32 %v1874, %v1874
    %v2003 = vmul.f32 %v1875, %v1875
    %v2004 = vmul.f32 %v1876, %v1876
    %v2005 = vmul.f32 %v1877, %v1877
    %v2006 = vmul.f32 %v1878, %v1878
    %v2007 = vmul.f32 %v1879, %v1879
    %v2008 = vmul.f32 %v1880, %v1880
    %v2009 = vmul.f32 %v1881, %v1881
    %v2010 = vmul.f32 %v1882, %v1882
    %v2011 = vmul.f32 %v1883, %v1883
    %v2012 = vmul.f32 %v1884, %v1884
    %v2013 = vmul.f32 %v1885, %v1885
    %v2014 = vmul.f32 %v1886, %v1886
    %v2015 = vmul.f32 %v1887, %v1887
    %v2016 = vmul.f32 %v1888, %v1888
    %v2017 = vmul.f32 %v1889, %v1889
    %v2018 = vmul.f32 %v1890, %v1890
    %v2019 = vmul.f32 %v1891, %v1891
    %v2020 = vmul.f32 %v1892, %v1892
    %v2021 = vmul.f32 %v1893, %v1893
    %v2022 = vmul.f32 %v1894, %v1894
    %v2023 = vmul.f32 %v1895, %v1895
    %v2024 = vmul.f32 %v1896, %v1896
    %v2025 = vmul.f32 %v1897, %v1897
    %v2026 = vmul.f32 %v1898, %v1898
    %v2027 = vmul.f32 %v1899, %v1899
    %v2028 = vmul.f32 %v1900, %v1900
    %v2029 = vmul.f32 %v1901, %v1901
    %v2030 = vmul.f32 %v1902, %v1774
    %v2031 = vmul.f32 %v1903, %v1775
    %v2032 = vmul.f32 %v1904, %v1776
    %v2033 = vmul.f32 %v1905, %v1777
    %v2034 = vmul.f32 %v1906, %v1778
    %v2035 = vmul.f32 %v1907, %v1779
    %v2036 = vmul.f32 %v1908, %v1780
    %v2037 = vmul.f32 %v1909, %v1781
    %v2038 = vmul.f32 %v1910, %v1782
    %v2039 = vmul.f32 %v1911, %v1783
    %v2040 = vmul.f32 %v1912, %v1784
    %v2041 = vmul.f32 %v1913, %v1785
    %v2042 = vmul.f32 %v1914, %v1786
    %v2043 = vmul.f32 %v1915, %v1787
    %v2044 = vmul.f32 %v1916, %v1788
    %v2045 = vmul.f32 %v1917, %v1789
    %v2046 = vmul.f32 %v1918, %v1790
    %v2047 = vmul.f32 %v1919, %v1791
    %v2048 = vmul.f32 %v1920, %v1792
    %v2049 = vmul.f32 %v1921, %v1793
    %v2050 = vmul.f32 %v1922, %v1794
    %v2051 = vmul.f32 %v1923, %v1795
    %v2052 = vmul.f32 %v1924, %v1796
    %v2053 = vmul.f32 %v1925, %v1797
    %v2054 = vmul.f32 %v1926, %v1798
    %v2055 = vmul.f32 %v1927, %v1799
    %v2056 = vmul.f32 %v1928, %v1800
    %v2057 = vmul.f32 %v1929, %v1801
    %v2058 = vmul.f32 %v1930, %v1802
    %v2059 = vmul.f32 %v1931, %v1803
    %v2060 = vmul.f32 %v1932, %v1804
    %v2061 = vmul.f32 %v1933, %v1805
    %v2062 = vmul.f32 %v1934, %v1806
    %v2063 = vmul.f32 %v1935, %v1807
    %v2064 = vmul.f32 %v1936, %v1808
    %v2065 = vmul.f32 %v1937, %v1809
    %v2066 = vmul.f32 %v1938, %v1810
    %v2067 = vmul.f32 %v1939, %v1811
    %v2068 = vmul.f32 %v1940, %v1812
    %v2069 = vmul.f32 %v1941, %v1813
    %v2070 = vmul.f32 %v1942, %v1814
    %v2071 = vmul.f32 %v1943, %v1815
    %v2072 = vmul.f32 %v1944, %v1816
    %v2073 = vmul.f32 %v1945, %v1817
    %v2074 = vmul.f32 %v1946, %v1818
    %v2075 = vmul.f32 %v1947, %v1819
    %v2076 = vmul.f32 %v1948, %v1820
    %v2077 = vmul.f32 %v1949, %v1821
    %v2078 = vmul.f32 %v1950, %v1822
    %v2079 = vmul.f32 %v1951, %v1823
    %v2080 = vmul.f32 %v1952, %v1824
    %v2081 = vmul.f32 %v1953, %v1825
    %v2082 = vmul.f32 %v1954, %v1826
    %v2083 = vmul.f32 %v1955, %v1827
    %v2084 = vmul.f32 %v1956, %v1828
    %v2085 = vmul.f32 %v1957, %v1829
    %v2086 = vmul.f32 %v1958, %v1830
    %v2087 = vmul.f32 %v1959, %v1831
    %v2088 = vmul.f32 %v1960, %v1832
    %v2089 = vmul.f32 %v1961, %v1833
    %v2090 = vmul.f32 %v1962, %v1834
    %v2091 = vmul.f32 %v1963, %v1835
    %v2092 = vmul.f32 %v1964, %v1836
    %v2093 = vmul.f32 %v1965, %v1837
    %v2094 = vmul.f32 %v1966, %v1838
    %v2095 = vmul.f32 %v1967, %v1839
    %v2096 = vmul.f32 %v1968, %v1840
    %v2097 = vmul.f32 %v1969, %v1841
    %v2098 = vmul.f32 %v1970, %v1842
    %v2099 = vmul.f32 %v1971, %v1843
    %v2100 = vmul.f32 %v1972, %v1844
    %v2101 = vmul.f32 %v1973, %v1845
    %v2102 = vmul.f32 %v1974, %v1846
    %v2103 = vmul.f32 %v1975, %v1847
    %v2104 = vmul.f32 %v1976, %v1848
    %v2105 = vmul.f32 %v1977, %v1849
    %v2106 = vmul.f32 %v1978, %v1850
    %v2107 = vmul.f32 %v1979, %v1851
    %v2108 = vmul.f32 %v1980, %v1852
    %v2109 = vmul.f32 %v1981, %v1853
    %v2110 = vmul.f32 %v1982, %v1854
    %v2111 = vmul.f32 %v1983, %v1855
    %v2112 = vmul.f32 %v1984, %v1856
    %v2113 = vmul.f32 %v1985, %v1857
    %v2114 = vmul.f32 %v1986, %v1858
    %v2115 = vmul.f32 %v1987, %v1859
    %v2116 = vmul.f32 %v1988, %v1860
    %v2117 = vmul.f32 %v1989, %v1861
    %v2118 = vmul.f32 %v1990, %v1862
    %v2119 = vmul.f32 %v1991, %v1863
    %v2120 = vmul.f32 %v1992, %v1864
    %v2121 = vmul.f32 %v1993, %v1865
    %v2122 = vmul.f32 %v1994, %v1866
    %v2123 = vmul.f32 %v1995, %v1867
    %v2124 = vmul.f32 %v1996, %v1868
    %v2125 = vmul.f32 %v1997, %v1869
    %v2126 = vmul.f32 %v1998, %v1870
    %v2127 = vmul.f32 %v1999, %v1871
    %v2128 = vmul.f32 %v2000, %v1872
    %v2129 = vmul.f32 %v2001, %v1873
    %v2130 = vmul.f32 %v2002, %v1874
    %v2131 = vmul.f32 %v2003, %v1875
    %v2132 = vmul.f32 %v2004, %v1876
    %v2133 = vmul.f32 %v2005, %v1877
    %v2134 = vmul.f32 %v2006, %v1878
    %v2135 = vmul.f32 %v2007, %v1879
    %v2136 = vmul.f32 %v2008, %v1880
    %v2137 = vmul.f32 %v2009, %v1881
    %v2138 = vmul.f32 %v2010, %v1882
    %v2139 = vmul.f32 %v2011, %v1883
    %v2140 = vmul.f32 %v2012, %v1884
    %v2141 = vmul.f32 %v2013, %v1885
    %v2142 = vmul.f32 %v2014, %v1886
    %v2143 = vmul.f32 %v2015, %v1887
    %v2144 = vmul.f32 %v2016, %v1888
    %v2145 = vmul.f32 %v2017, %v1889
    %v2146 = vmul.f32 %v2018, %v1890
    %v2147 = vmul.f32 %v2019, %v1891
    %v2148 = vmul.f32 %v2020, %v1892
    %v2149 = vmul.f32 %v2021, %v1893
    %v2150 = vmul.f32 %v2022, %v1894
    %v2151 = vmul.f32 %v2023, %v1895
    %v2152 = vmul.f32 %v2024, %v1896
    %v2153 = vmul.f32 %v2025, %v1897
    %v2154 = vmul.f32 %v2026, %v1898
    %v2155 = vmul.f32 %v2027, %v1899
    %v2156 = vmul.f32 %v2028, %v1900
    %v2157 = vmul.f32 %v2029, %v1901
    %v2158 = vadd.f32 %v2030, %v2031
    %v2159 = vadd.f32 %v2158, %v2032
    %v2160 = vadd.f32 %v2159, %v2033
    %v2161 = vadd.f32 %v2160, %v2034
    %v2162 = vadd.f32 %v2161, %v2035
    %v2163 = vadd.f32 %v2162, %v2036
    %v2164 = vadd.f32 %v2163, %v2037
    %v2165 = vrot.slane %v2164, 4
    %v2166 = vadd.f32 %v2164, %v2165
    %v2167 = vrot.slane %v2166, 2
    %v2168 = vadd.f32 %v2166, %v2167
    %v2169 = vrot.slane %v2168, 1
    %v2170 = vadd.f32 %v2168, %v2169
    %v2171 = vadd.f32 %v2038, %v2039
    %v2172 = vadd.f32 %v2171, %v2040
    %v2173 = vadd.f32 %v2172, %v2041
    %v2174 = vadd.f32 %v2173, %v2042
    %v2175 = vadd.f32 %v2174, %v2043
    %v2176 = vadd.f32 %v2175, %v2044
    %v2177 = vadd.f32 %v2176, %v2045
    %v2178 = vrot.slane %v2177, 4
    %v2179 = vadd.f32 %v2177, %v2178
    %v2180 = vrot.slane %v2179, 2
    %v2181 = vadd.f32 %v2179, %v2180
    %v2182 = vrot.slane %v2181, 1
    %v2183 = vadd.f32 %v2181, %v2182
    %v2184 = vadd.f32 %v2046, %v2047
    %v2185 = vadd.f32 %v2184, %v2048
    %v2186 = vadd.f32 %v2185, %v2049
    %v2187 = vadd.f32 %v2186, %v2050
    %v2188 = vadd.f32 %v2187, %v2051
    %v2189 = vadd.f32 %v2188, %v2052
    %v2190 = vadd.f32 %v2189, %v2053
    %v2191 = vrot.slane %v2190, 4
    %v2192 = vadd.f32 %v2190, %v2191
    %v2193 = vrot.slane %v2192, 2
    %v2194 = vadd.f32 %v2192, %v2193
    %v2195 = vrot.slane %v2194, 1
    %v2196 = vadd.f32 %v2194, %v2195
    %v2197 = vadd.f32 %v2054, %v2055
    %v2198 = vadd.f32 %v2197, %v2056
    %v2199 = vadd.f32 %v2198, %v2057
    %v2200 = vadd.f32 %v2199, %v2058
    %v2201 = vadd.f32 %v2200, %v2059
    %v2202 = vadd.f32 %v2201, %v2060
    %v2203 = vadd.f32 %v2202, %v2061
    %v2204 = vrot.slane %v2203, 4
    %v2205 = vadd.f32 %v2203, %v2204
    %v2206 = vrot.slane %v2205, 2
    %v2207 = vadd.f32 %v2205, %v2206
    %v2208 = vrot.slane %v2207, 1
    %v2209 = vadd.f32 %v2207, %v2208
    %v2210 = vadd.f32 %v2062, %v2063
    %v2211 = vadd.f32 %v2210, %v2064
    %v2212 = vadd.f32 %v2211, %v2065
    %v2213 = vadd.f32 %v2212, %v2066
    %v2214 = vadd.f32 %v2213, %v2067
    %v2215 = vadd.f32 %v2214, %v2068
    %v2216 = vadd.f32 %v2215, %v2069
    %v2217 = vrot.slane %v2216, 4
    %v2218 = vadd.f32 %v2216, %v2217
    %v2219 = vrot.slane %v2218, 2
    %v2220 = vadd.f32 %v2218, %v2219
    %v2221 = vrot.slane %v2220, 1
    %v2222 = vadd.f32 %v2220, %v2221
    %v2223 = vadd.f32 %v2070, %v2071
    %v2224 = vadd.f32 %v2223, %v2072
    %v2225 = vadd.f32 %v2224, %v2073
    %v2226 = vadd.f32 %v2225, %v2074
    %v2227 = vadd.f32 %v2226, %v2075
    %v2228 = vadd.f32 %v2227, %v2076
    %v2229 = vadd.f32 %v2228, %v2077
    %v2230 = vrot.slane %v2229, 4
    %v2231 = vadd.f32 %v2229, %v2230
    %v2232 = vrot.slane %v2231, 2
    %v2233 = vadd.f32 %v2231, %v2232
    %v2234 = vrot.slane %v2233, 1
    %v2235 = vadd.f32 %v2233, %v2234
    %v2236 = vadd.f32 %v2078, %v2079
    %v2237 = vadd.f32 %v2236, %v2080
    %v2238 = vadd.f32 %v2237, %v2081
    %v2239 = vadd.f32 %v2238, %v2082
    %v2240 = vadd.f32 %v2239, %v2083
    %v2241 = vadd.f32 %v2240, %v2084
    %v2242 = vadd.f32 %v2241, %v2085
    %v2243 = vrot.slane %v2242, 4
    %v2244 = vadd.f32 %v2242, %v2243
    %v2245 = vrot.slane %v2244, 2
    %v2246 = vadd.f32 %v2244, %v2245
    %v2247 = vrot.slane %v2246, 1
    %v2248 = vadd.f32 %v2246, %v2247
    %v2249 = vadd.f32 %v2086, %v2087
    %v2250 = vadd.f32 %v2249, %v2088
    %v2251 = vadd.f32 %v2250, %v2089
    %v2252 = vadd.f32 %v2251, %v2090
    %v2253 = vadd.f32 %v2252, %v2091
    %v2254 = vadd.f32 %v2253, %v2092
    %v2255 = vadd.f32 %v2254, %v2093
    %v2256 = vrot.slane %v2255, 4
    %v2257 = vadd.f32 %v2255, %v2256
    %v2258 = vrot.slane %v2257, 2
    %v2259 = vadd.f32 %v2257, %v2258
    %v2260 = vrot.slane %v2259, 1
    %v2261 = vadd.f32 %v2259, %v2260
    %v2262 = vadd.f32 %v2094, %v2095
    %v2263 = vadd.f32 %v2262, %v2096
    %v2264 = vadd.f32 %v2263, %v2097
    %v2265 = vadd.f32 %v2264, %v2098
    %v2266 = vadd.f32 %v2265, %v2099
    %v2267 = vadd.f32 %v2266, %v2100
    %v2268 = vadd.f32 %v2267, %v2101
    %v2269 = vrot.slane %v2268, 4
    %v2270 = vadd.f32 %v2268, %v2269
    %v2271 = vrot.slane %v2270, 2
    %v2272 = vadd.f32 %v2270, %v2271
    %v2273 = vrot.slane %v2272, 1
    %v2274 = vadd.f32 %v2272, %v2273
    %v2275 = vadd.f32 %v2102, %v2103
    %v2276 = vadd.f32 %v2275, %v2104
    %v2277 = vadd.f32 %v2276, %v2105
    %v2278 = vadd.f32 %v2277, %v2106
    %v2279 = vadd.f32 %v2278, %v2107
    %v2280 = vadd.f32 %v2279, %v2108
    %v2281 = vadd.f32 %v2280, %v2109
    %v2282 = vrot.slane %v2281, 4
    %v2283 = vadd.f32 %v2281, %v2282
    %v2284 = vrot.slane %v2283, 2
    %v2285 = vadd.f32 %v2283, %v2284
    %v2286 = vrot.slane %v2285, 1
    %v2287 = vadd.f32 %v2285, %v2286
    %v2288 = vadd.f32 %v2110, %v2111
    %v2289 = vadd.f32 %v2288, %v2112
    %v2290 = vadd.f32 %v2289, %v2113
    %v2291 = vadd.f32 %v2290, %v2114
    %v2292 = vadd.f32 %v2291, %v2115
    %v2293 = vadd.f32 %v2292, %v2116
    %v2294 = vadd.f32 %v2293, %v2117
    %v2295 = vrot.slane %v2294, 4
    %v2296 = vadd.f32 %v2294, %v2295
    %v2297 = vrot.slane %v2296, 2
    %v2298 = vadd.f32 %v2296, %v2297
    %v2299 = vrot.slane %v2298, 1
    %v2300 = vadd.f32 %v2298, %v2299
    %v2301 = vadd.f32 %v2118, %v2119
    %v2302 = vadd.f32 %v2301, %v2120
    %v2303 = vadd.f32 %v2302, %v2121
    %v2304 = vadd.f32 %v2303, %v2122
    %v2305 = vadd.f32 %v2304, %v2123
    %v2306 = vadd.f32 %v2305, %v2124
    %v2307 = vadd.f32 %v2306, %v2125
    %v2308 = vrot.slane %v2307, 4
    %v2309 = vadd.f32 %v2307, %v2308
    %v2310 = vrot.slane %v2309, 2
    %v2311 = vadd.f32 %v2309, %v2310
    %v2312 = vrot.slane %v2311, 1
    %v2313 = vadd.f32 %v2311, %v2312
    %v2314 = vadd.f32 %v2126, %v2127
    %v2315 = vadd.f32 %v2314, %v2128
    %v2316 = vadd.f32 %v2315, %v2129
    %v2317 = vadd.f32 %v2316, %v2130
    %v2318 = vadd.f32 %v2317, %v2131
    %v2319 = vadd.f32 %v2318, %v2132
    %v2320 = vadd.f32 %v2319, %v2133
    %v2321 = vrot.slane %v2320, 4
    %v2322 = vadd.f32 %v2320, %v2321
    %v2323 = vrot.slane %v2322, 2
    %v2324 = vadd.f32 %v2322, %v2323
    %v2325 = vrot.slane %v2324, 1
    %v2326 = vadd.f32 %v2324, %v2325
    %v2327 = vadd.f32 %v2134, %v2135
    %v2328 = vadd.f32 %v2327, %v2136
    %v2329 = vadd.f32 %v2328, %v2137
    %v2330 = vadd.f32 %v2329, %v2138
    %v2331 = vadd.f32 %v2330, %v2139
    %v2332 = vadd.f32 %v2331, %v2140
    %v2333 = vadd.f32 %v2332, %v2141
    %v2334 = vrot.slane %v2333, 4
    %v2335 = vadd.f32 %v2333, %v2334
    %v2336 = vrot.slane %v2335, 2
    %v2337 = vadd.f32 %v2335, %v2336
    %v2338 = vrot.slane %v2337, 1
    %v2339 = vadd.f32 %v2337, %v2338
    %v2340 = vadd.f32 %v2142, %v2143
    %v2341 = vadd.f32 %v2340, %v2144
    %v2342 = vadd.f32 %v2341, %v2145
    %v2343 = vadd.f32 %v2342, %v2146
    %v2344 = vadd.f32 %v2343, %v2147
    %v2345 = vadd.f32 %v2344, %v2148
    %v2346 = vadd.f32 %v2345, %v2149
    %v2347 = vrot.slane %v2346, 4
    %v2348 = vadd.f32 %v2346, %v2347
    %v2349 = vrot.slane %v2348, 2
    %v2350 = vadd.f32 %v2348, %v2349
    %v2351 = vrot.slane %v2350, 1
    %v2352 = vadd.f32 %v2350, %v2351
    %v2353 = vadd.f32 %v2150, %v2151
    %v2354 = vadd.f32 %v2353, %v2152
    %v2355 = vadd.f32 %v2354, %v2153
    %v2356 = vadd.f32 %v2355, %v2154
    %v2357 = vadd.f32 %v2356, %v2155
    %v2358 = vadd.f32 %v2357, %v2156
    %v2359 = vadd.f32 %v2358, %v2157
    %v2360 = vrot.slane %v2359, 4
    %v2361 = vadd.f32 %v2359, %v2360
    %v2362 = vrot.slane %v2361, 2
    %v2363 = vadd.f32 %v2361, %v2362
    %v2364 = vrot.slane %v2363, 1
    %v2365 = vadd.f32 %v2363, %v2364
    %v2366 = vrcp.pop 64.0
    %v2367 = vmul.f32 %v2170, %v2366
    %v2368 = vmul.f32 %v2183, %v2366
    %v2369 = vmul.f32 %v2196, %v2366
    %v2370 = vmul.f32 %v2209, %v2366
    %v2371 = vmul.f32 %v2222, %v2366
    %v2372 = vmul.f32 %v2235, %v2366
    %v2373 = vmul.f32 %v2248, %v2366
    %v2374 = vmul.f32 %v2261, %v2366
    %v2375 = vmul.f32 %v2274, %v2366
    %v2376 = vmul.f32 %v2287, %v2366
    %v2377 = vmul.f32 %v2300, %v2366
    %v2378 = vmul.f32 %v2313, %v2366
    %v2379 = vmul.f32 %v2326, %v2366
    %v2380 = vmul.f32 %v2339, %v2366
    %v2381 = vmul.f32 %v2352, %v2366
    %v2382 = vmul.f32 %v2365, %v2366
    %v2383 = vpow.f32 %v2367, 0.33333334
    %v2384 = vpow.f32 %v2368, 0.33333334
    %v2385 = vpow.f32 %v2369, 0.33333334
    %v2386 = vpow.f32 %v2370, 0.33333334
    %v2387 = vpow.f32 %v2371, 0.33333334
    %v2388 = vpow.f32 %v2372, 0.33333334
    %v2389 = vpow.f32 %v2373, 0.33333334
    %v2390 = vpow.f32 %v2374, 0.33333334
    %v2391 = vpow.f32 %v2375, 0.33333334
    %v2392 = vpow.f32 %v2376, 0.33333334
    %v2393 = vpow.f32 %v2377, 0.33333334
    %v2394 = vpow.f32 %v2378, 0.33333334
    %v2395 = vpow.f32 %v2379, 0.33333334
    %v2396 = vpow.f32 %v2380, 0.33333334
    %v2397 = vpow.f32 %v2381, 0.33333334
    %v2398 = vpow.f32 %v2382, 0.33333334
    %v2399 = vlaneseq
    %v2400 = vand.u32 %v2399, 127
    %vm2401 = vcmp.lt.s32.totalorder %v2400, 32
    %vm2418 = vcmask 1041409
    %v2419 = vsel %vm2418, %v2384, %v2383
    %vm2420 = vcmask 1042434
    %v2421 = vsel %vm2420, %v2385, %v2419
    %vm2422 = vcmask 1043459
    %v2423 = vsel %vm2422, %v2386, %v2421
    %vm2424 = vcmask 1044484
    %v2425 = vsel %vm2424, %v2387, %v2423
    %vm2426 = vcmask 1045509
    %v2427 = vsel %vm2426, %v2388, %v2425
    %vm2428 = vcmask 1046534
    %v2429 = vsel %vm2428, %v2389, %v2427
    %vm2430 = vcmask 1047559
    %v2431 = vsel %vm2430, %v2390, %v2429
    %v2432 = vsel %vm2418, %v2392, %v2391
    %v2433 = vsel %vm2420, %v2393, %v2432
    %v2434 = vsel %vm2422, %v2394, %v2433
    %v2435 = vsel %vm2424, %v2395, %v2434
    %v2436 = vsel %vm2426, %v2396, %v2435
    %v2437 = vsel %vm2428, %v2397, %v2436
    %v2438 = vsel %vm2430, %v2398, %v2437
    %v2441 = vsel %vm2401, %v2431, 0.0
    %v2442 = vsel %vm2401, %v2438, 0.0
    %v2443 = vmul.f32 %v2441, %v2441
    %v2444 = vmul.f32 %v2442, %v2442
    %2445 = vadd.xlane.f32.xlu0 %v2443
    %v2446 = vpop.xlane.xlu0 %2445
    %2447 = vadd.xlane.f32.xlu0 %v2444
    %v2448 = vpop.xlane.xlu0 %2447
    %v2449 = vadd.f32 %v2446, 1e-12
    %v2450 = vadd.f32 %v2448, 1e-12
    %v2451 = vrsqrt.pop %v2449
    %v2452 = vrsqrt.pop %v2450
    %v2453 = vmul.f32 %v2441, %v2451
    %v2454 = vmul.f32 %v2442, %v2452
    %2455 = vst [vmem:[#allocation8] sm:$0xff] %v2453
    %2456 = vst [vmem:[#allocation8 + $0x8] sm:$0xff] %v2454
    // Predicated region
    $region34: #{tpu_custom_call.1} parent=1 // pred_check
      _
    $region35: #{tpu_custom_call.1} parent=1 // pred_check_branch
      %2458 = sbr.rel (0) target = $region37
    $region36: #{tpu_custom_call.1} parent=1 // pred_region
      %s2460 = ssub.s32 256, 256
      %2461 = vsyncadd [#allocation4], %s2460
      %s2462 = sshll.u32 [#allocation8], 4
      %s2463 = int_to_ptr.vmem [resolvable:$true] %s2462
      %2468 = dma.vmem_to_hbm [thread:$0]  %s2463, 256, %s5, [#allocation4], 128, 128, 8
    $region37: #{tpu_custom_call.1} parent=1 // pred_fallthru
      _
    // Predicated region
    $region38: #{tpu_custom_call.1} parent=1 // pred_check
      _
    $region39: #{tpu_custom_call.1} parent=1 // pred_check_branch
      %2470 = sbr.rel (0) target = $region41
    $region40: #{tpu_custom_call.1} parent=1 // pred_region
      %2471 = dma.done [#allocation4], 256
    $region41: #{tpu_custom_call.1} parent=1 // pred_fallthru
      _
    %2472 = vsyncpa [#allocation3], 1
    %2473 = vsyncpa [#allocation6], 1
    %2474 = vsyncpa [#allocation4], 1

// kernel: tpu_custom_call.1
$region0: #{tpu_custom_call.1}
  #allocation0 [shape = 'u32[]', space=smem, size = 0x4, offset = 0x4, fixed_abs, tag = 'smem constant byte address 0x4 - core index']
  #allocation1 [shape = 'u32[144,128]{1,0:T(1,128)}', space=vmem, size = 0x12000, scoped, tag = 'internal scratch']
  %s0 = inlined_call_operand.hbm [shape: f32[16,64,128], index: 0, kind: input, shape index: {}]
  %s1 = inlined_call_operand.hbm [shape: f32[128,128], index: 1, kind: input, shape index: {}]
  %s2 = inlined_call_operand.vmem [shape: f32[1,128], index: 2, kind: input, shape index: {}]
  %s3 = inlined_call_operand.hbm [shape: f32[128,128], index: 3, kind: input, shape index: {}]
  %s4 = inlined_call_operand.vmem [shape: f32[1,128], index: 4, kind: input, shape index: {}]
  %s5 = inlined_call_operand.hbm [shape: f32[16,128], index: 5, kind: output, shape index: {}]
  %s6 = sld [smem:[#allocation0]]
  $region42: #{tpu_custom_call.1} parent=0
    _
  %s8 = ssub.s32 1, %s6
  %s9 = scalar_select 0, %s8, %s6
  $region1: #{tpu_custom_call.1} parent=0
    #allocation2 [shape = 'u8[524288]{0}', space=vmem, size = 0x80000, scoped, tag = 'input window, operand 0, single buffered']
    #allocation3 [shape = 's32[1]{0}', space=sflag, size = 0x4, scoped, tag = 'scoped memory for tpu_custom_call.1']
    #allocation4 [shape = 's32[1]{0}', space=sflag, size = 0x4, scoped, tag = 'scoped memory for tpu_custom_call.1']
    #allocation5 [shape = 'u8[65536]{0}', space=vmem, size = 0x10000, scoped, tag = 'input window, operand 1, single buffered']
    #allocation6 [shape = 's32[1]{0}', space=sflag, size = 0x4, scoped, tag = 'scoped memory for tpu_custom_call.1']
    #allocation7 [shape = 'u8[65536]{0}', space=vmem, size = 0x10000, scoped, tag = 'input window, operand 3, single buffered']
    #allocation8 [shape = 'u8[8192]{0}', space=vmem, size = 0x2000, scoped, tag = 'output window, operand 0, single buffered']
    %10 = vsyncpa [#allocation3], 0
    %11 = vsyncpa [#allocation6], 0
    %12 = vsyncpa [#allocation4], 0
    // Predicated region
    $region2: #{tpu_custom_call.1} parent=1 // pred_check
      _
    $region3: #{tpu_custom_call.1} parent=1 // pred_check_branch
      %14 = sbr.rel (0) target = $region5
    $region4: #{tpu_custom_call.1} parent=1 // pred_region
      %s16 = ssub.s32 16384, 16384
      %17 = vsyncadd [#allocation3], %s16
      %s18 = sshll.u32 [#allocation2], 4
      %s19 = int_to_ptr.vmem [resolvable:$true] %s18
      %24 = dma.hbm_to_vmem [thread:$0]  %s0, 16384, %s19, [#allocation3], 128, 128, 8
    $region5: #{tpu_custom_call.1} parent=1 // pred_fallthru
      _
    // Predicated region
    $region6: #{tpu_custom_call.1} parent=1 // pred_check
      _
    $region7: #{tpu_custom_call.1} parent=1 // pred_check_branch
      %26 = sbr.rel (0) target = $region9
    $region8: #{tpu_custom_call.1} parent=1 // pred_region
      %s28 = ssub.s32 2048, 2048
      %29 = vsyncadd [#allocation6], %s28
      %s30 = sshll.u32 [#allocation5], 4
      %s31 = int_to_ptr.vmem [resolvable:$true] %s30
      %36 = dma.hbm_to_vmem [thread:$0]  %s1, 2048, %s31, [#allocation6], 128, 128, 8
    $region9: #{tpu_custom_call.1} parent=1 // pred_fallthru
      _
    // Predicated region
    $region10: #{tpu_custom_call.1} parent=1 // pred_check
      _
    $region11: #{tpu_custom_call.1} parent=1 // pred_check_branch
      %38 = sbr.rel (0) target = $region13
    $region12: #{tpu_custom_call.1} parent=1 // pred_region
      _
    $region13: #{tpu_custom_call.1} parent=1 // pred_fallthru
      _
    // Predicated region
    $region14: #{tpu_custom_call.1} parent=1 // pred_check
      _
    $region15: #{tpu_custom_call.1} parent=1 // pred_check_branch
      %40 = sbr.rel (0) target = $region17
    $region16: #{tpu_custom_call.1} parent=1 // pred_region
      %s42 = ssub.s32 2048, 2048
      %43 = vsyncadd [#allocation6], %s42
      %s44 = sshll.u32 [#allocation7], 4
      %s45 = int_to_ptr.vmem [resolvable:$true] %s44
      %50 = dma.hbm_to_vmem [thread:$0]  %s3, 2048, %s45, [#allocation6], 128, 128, 8
    $region17: #{tpu_custom_call.1} parent=1 // pred_fallthru
      _
    // Predicated region
    $region18: #{tpu_custom_call.1} parent=1 // pred_check
      _
    $region19: #{tpu_custom_call.1} parent=1 // pred_check_branch
      %52 = sbr.rel (0) target = $region21
    $region20: #{tpu_custom_call.1} parent=1 // pred_region
      _
    $region21: #{tpu_custom_call.1} parent=1 // pred_fallthru
      _
    // Predicated region
    $region22: #{tpu_custom_call.1} parent=1 // pred_check
      _
    $region23: #{tpu_custom_call.1} parent=1 // pred_check_branch
      %54 = sbr.rel (0) target = $region25
    $region24: #{tpu_custom_call.1} parent=1 // pred_region
      %55 = dma.done [#allocation3], 16384
    $region25: #{tpu_custom_call.1} parent=1 // pred_fallthru
      _
    // Predicated region
    $region26: #{tpu_custom_call.1} parent=1 // pred_check
      _
    $region27: #{tpu_custom_call.1} parent=1 // pred_check_branch
      %57 = sbr.rel (0) target = $region29
    $region28: #{tpu_custom_call.1} parent=1 // pred_region
      %58 = dma.done [#allocation6], 2048
    $region29: #{tpu_custom_call.1} parent=1 // pred_fallthru
      _
    // Predicated region
    $region30: #{tpu_custom_call.1} parent=1 // pred_check
      _
    $region31: #{tpu_custom_call.1} parent=1 // pred_check_branch
      %60 = sbr.rel (0) target = $region33
    $region32: #{tpu_custom_call.1} parent=1 // pred_region
      %61 = dma.done [#allocation6], 2048
    $region33: #{tpu_custom_call.1} parent=1 // pred_fallthru
      _
    %v62 = vld [vmem:[#allocation2] sm:$0xff]
    %v63 = vld [vmem:[#allocation2 + $0x8] sm:$0xff]
    %v64 = vld [vmem:[#allocation2 + $0x10] sm:$0xff]
    %v65 = vld [vmem:[#allocation2 + $0x18] sm:$0xff]
    %v66 = vld [vmem:[#allocation2 + $0x20] sm:$0xff]
    %v67 = vld [vmem:[#allocation2 + $0x28] sm:$0xff]
    %v68 = vld [vmem:[#allocation2 + $0x30] sm:$0xff]
    %v69 = vld [vmem:[#allocation2 + $0x38] sm:$0xff]
    %v70 = vld [vmem:[#allocation2 + $0x40] sm:$0xff]
    %v71 = vld [vmem:[#allocation2 + $0x48] sm:$0xff]
    %v72 = vld [vmem:[#allocation2 + $0x50] sm:$0xff]
    %v73 = vld [vmem:[#allocation2 + $0x58] sm:$0xff]
    %v74 = vld [vmem:[#allocation2 + $0x60] sm:$0xff]
    %v75 = vld [vmem:[#allocation2 + $0x68] sm:$0xff]
    %v76 = vld [vmem:[#allocation2 + $0x70] sm:$0xff]
    %v77 = vld [vmem:[#allocation2 + $0x78] sm:$0xff]
    %v78 = vld [vmem:[#allocation2 + $0x80] sm:$0xff]
    %v79 = vld [vmem:[#allocation2 + $0x88] sm:$0xff]
    %v80 = vld [vmem:[#allocation2 + $0x90] sm:$0xff]
    %v81 = vld [vmem:[#allocation2 + $0x98] sm:$0xff]
    %v82 = vld [vmem:[#allocation2 + $0xa0] sm:$0xff]
    %v83 = vld [vmem:[#allocation2 + $0xa8] sm:$0xff]
    %v84 = vld [vmem:[#allocation2 + $0xb0] sm:$0xff]
    %v85 = vld [vmem:[#allocation2 + $0xb8] sm:$0xff]
    %v86 = vld [vmem:[#allocation2 + $0xc0] sm:$0xff]
    %v87 = vld [vmem:[#allocation2 + $0xc8] sm:$0xff]
    %v88 = vld [vmem:[#allocation2 + $0xd0] sm:$0xff]
    %v89 = vld [vmem:[#allocation2 + $0xd8] sm:$0xff]
    %v90 = vld [vmem:[#allocation2 + $0xe0] sm:$0xff]
    %v91 = vld [vmem:[#allocation2 + $0xe8] sm:$0xff]
    %v92 = vld [vmem:[#allocation2 + $0xf0] sm:$0xff]
    %v93 = vld [vmem:[#allocation2 + $0xf8] sm:$0xff]
    %v94 = vld [vmem:[#allocation2 + $0x100] sm:$0xff]
    %v95 = vld [vmem:[#allocation2 + $0x108] sm:$0xff]
    %v96 = vld [vmem:[#allocation2 + $0x110] sm:$0xff]
    %v97 = vld [vmem:[#allocation2 + $0x118] sm:$0xff]
    %v98 = vld [vmem:[#allocation2 + $0x120] sm:$0xff]
    %v99 = vld [vmem:[#allocation2 + $0x128] sm:$0xff]
    %v100 = vld [vmem:[#allocation2 + $0x130] sm:$0xff]
    %v101 = vld [vmem:[#allocation2 + $0x138] sm:$0xff]
    %v102 = vld [vmem:[#allocation2 + $0x140] sm:$0xff]
    %v103 = vld [vmem:[#allocation2 + $0x148] sm:$0xff]
    %v104 = vld [vmem:[#allocation2 + $0x150] sm:$0xff]
    %v105 = vld [vmem:[#allocation2 + $0x158] sm:$0xff]
    %v106 = vld [vmem:[#allocation2 + $0x160] sm:$0xff]
    %v107 = vld [vmem:[#allocation2 + $0x168] sm:$0xff]
    %v108 = vld [vmem:[#allocation2 + $0x170] sm:$0xff]
    %v109 = vld [vmem:[#allocation2 + $0x178] sm:$0xff]
    %v110 = vld [vmem:[#allocation2 + $0x180] sm:$0xff]
    %v111 = vld [vmem:[#allocation2 + $0x188] sm:$0xff]
    %v112 = vld [vmem:[#allocation2 + $0x190] sm:$0xff]
    %v113 = vld [vmem:[#allocation2 + $0x198] sm:$0xff]
    %v114 = vld [vmem:[#allocation2 + $0x1a0] sm:$0xff]
    %v115 = vld [vmem:[#allocation2 + $0x1a8] sm:$0xff]
    %v116 = vld [vmem:[#allocation2 + $0x1b0] sm:$0xff]
    %v117 = vld [vmem:[#allocation2 + $0x1b8] sm:$0xff]
    %v118 = vld [vmem:[#allocation2 + $0x1c0] sm:$0xff]
    %v119 = vld [vmem:[#allocation2 + $0x1c8] sm:$0xff]
    %v120 = vld [vmem:[#allocation2 + $0x1d0] sm:$0xff]
    %v121 = vld [vmem:[#allocation2 + $0x1d8] sm:$0xff]
    %v122 = vld [vmem:[#allocation2 + $0x1e0] sm:$0xff]
    %v123 = vld [vmem:[#allocation2 + $0x1e8] sm:$0xff]
    %v124 = vld [vmem:[#allocation2 + $0x1f0] sm:$0xff]
    %v125 = vld [vmem:[#allocation2 + $0x1f8] sm:$0xff]
    %v126 = vld [vmem:[#allocation2 + $0x200] sm:$0xff]
    %v127 = vld [vmem:[#allocation2 + $0x208] sm:$0xff]
    %v128 = vld [vmem:[#allocation2 + $0x210] sm:$0xff]
    %v129 = vld [vmem:[#allocation2 + $0x218] sm:$0xff]
    %v130 = vld [vmem:[#allocation2 + $0x220] sm:$0xff]
    %v131 = vld [vmem:[#allocation2 + $0x228] sm:$0xff]
    %v132 = vld [vmem:[#allocation2 + $0x230] sm:$0xff]
    %v133 = vld [vmem:[#allocation2 + $0x238] sm:$0xff]
    %v134 = vld [vmem:[#allocation2 + $0x240] sm:$0xff]
    %v135 = vld [vmem:[#allocation2 + $0x248] sm:$0xff]
    %v136 = vld [vmem:[#allocation2 + $0x250] sm:$0xff]
    %v137 = vld [vmem:[#allocation2 + $0x258] sm:$0xff]
    %v138 = vld [vmem:[#allocation2 + $0x260] sm:$0xff]
    %v139 = vld [vmem:[#allocation2 + $0x268] sm:$0xff]
    %v140 = vld [vmem:[#allocation2 + $0x270] sm:$0xff]
    %v141 = vld [vmem:[#allocation2 + $0x278] sm:$0xff]
    %v142 = vld [vmem:[#allocation2 + $0x280] sm:$0xff]
    %v143 = vld [vmem:[#allocation2 + $0x288] sm:$0xff]
    %v144 = vld [vmem:[#allocation2 + $0x290] sm:$0xff]
    %v145 = vld [vmem:[#allocation2 + $0x298] sm:$0xff]
    %v146 = vld [vmem:[#allocation2 + $0x2a0] sm:$0xff]
    %v147 = vld [vmem:[#allocation2 + $0x2a8] sm:$0xff]
    %v148 = vld [vmem:[#allocation2 + $0x2b0] sm:$0xff]
    %v149 = vld [vmem:[#allocation2 + $0x2b8] sm:$0xff]
    %v150 = vld [vmem:[#allocation2 + $0x2c0] sm:$0xff]
    %v151 = vld [vmem:[#allocation2 + $0x2c8] sm:$0xff]
    %v152 = vld [vmem:[#allocation2 + $0x2d0] sm:$0xff]
    %v153 = vld [vmem:[#allocation2 + $0x2d8] sm:$0xff]
    %v154 = vld [vmem:[#allocation2 + $0x2e0] sm:$0xff]
    %v155 = vld [vmem:[#allocation2 + $0x2e8] sm:$0xff]
    %v156 = vld [vmem:[#allocation2 + $0x2f0] sm:$0xff]
    %v157 = vld [vmem:[#allocation2 + $0x2f8] sm:$0xff]
    %v158 = vld [vmem:[#allocation2 + $0x300] sm:$0xff]
    %v159 = vld [vmem:[#allocation2 + $0x308] sm:$0xff]
    %v160 = vld [vmem:[#allocation2 + $0x310] sm:$0xff]
    %v161 = vld [vmem:[#allocation2 + $0x318] sm:$0xff]
    %v162 = vld [vmem:[#allocation2 + $0x320] sm:$0xff]
    %v163 = vld [vmem:[#allocation2 + $0x328] sm:$0xff]
    %v164 = vld [vmem:[#allocation2 + $0x330] sm:$0xff]
    %v165 = vld [vmem:[#allocation2 + $0x338] sm:$0xff]
    %v166 = vld [vmem:[#allocation2 + $0x340] sm:$0xff]
    %v167 = vld [vmem:[#allocation2 + $0x348] sm:$0xff]
    %v168 = vld [vmem:[#allocation2 + $0x350] sm:$0xff]
    %v169 = vld [vmem:[#allocation2 + $0x358] sm:$0xff]
    %v170 = vld [vmem:[#allocation2 + $0x360] sm:$0xff]
    %v171 = vld [vmem:[#allocation2 + $0x368] sm:$0xff]
    %v172 = vld [vmem:[#allocation2 + $0x370] sm:$0xff]
    %v173 = vld [vmem:[#allocation2 + $0x378] sm:$0xff]
    %v174 = vld [vmem:[#allocation2 + $0x380] sm:$0xff]
    %v175 = vld [vmem:[#allocation2 + $0x388] sm:$0xff]
    %v176 = vld [vmem:[#allocation2 + $0x390] sm:$0xff]
    %v177 = vld [vmem:[#allocation2 + $0x398] sm:$0xff]
    %v178 = vld [vmem:[#allocation2 + $0x3a0] sm:$0xff]
    %v179 = vld [vmem:[#allocation2 + $0x3a8] sm:$0xff]
    %v180 = vld [vmem:[#allocation2 + $0x3b0] sm:$0xff]
    %v181 = vld [vmem:[#allocation2 + $0x3b8] sm:$0xff]
    %v182 = vld [vmem:[#allocation2 + $0x3c0] sm:$0xff]
    %v183 = vld [vmem:[#allocation2 + $0x3c8] sm:$0xff]
    %v184 = vld [vmem:[#allocation2 + $0x3d0] sm:$0xff]
    %v185 = vld [vmem:[#allocation2 + $0x3d8] sm:$0xff]
    %v186 = vld [vmem:[#allocation2 + $0x3e0] sm:$0xff]
    %v187 = vld [vmem:[#allocation2 + $0x3e8] sm:$0xff]
    %v188 = vld [vmem:[#allocation2 + $0x3f0] sm:$0xff]
    %v189 = vld [vmem:[#allocation2 + $0x3f8] sm:$0xff]
    %v190 = vld [vmem:[#allocation5] sm:$0xff]
    %v191 = vld [vmem:[#allocation5 + $0x8] sm:$0xff]
    %v192 = vld [vmem:[#allocation5 + $0x10] sm:$0xff]
    %v193 = vld [vmem:[#allocation5 + $0x18] sm:$0xff]
    %v194 = vld [vmem:[#allocation5 + $0x20] sm:$0xff]
    %v195 = vld [vmem:[#allocation5 + $0x28] sm:$0xff]
    %v196 = vld [vmem:[#allocation5 + $0x30] sm:$0xff]
    %v197 = vld [vmem:[#allocation5 + $0x38] sm:$0xff]
    %v198 = vld [vmem:[#allocation5 + $0x40] sm:$0xff]
    %v199 = vld [vmem:[#allocation5 + $0x48] sm:$0xff]
    %v200 = vld [vmem:[#allocation5 + $0x50] sm:$0xff]
    %v201 = vld [vmem:[#allocation5 + $0x58] sm:$0xff]
    %v202 = vld [vmem:[#allocation5 + $0x60] sm:$0xff]
    %v203 = vld [vmem:[#allocation5 + $0x68] sm:$0xff]
    %v204 = vld [vmem:[#allocation5 + $0x70] sm:$0xff]
    %v205 = vld [vmem:[#allocation5 + $0x78] sm:$0xff]
    %v206 = vld [vmem:[%s2] sm:$0x1]
    %v208 = vlaneseq
    %v209 = vshrl.u32 %v208, 7
    %v210 = vsub.s32 0, %v209
    %v211 = vrot.slane %v206, %v210
    %213 = vmatprep.subr.mxu0 0.0
    %214 = vmatpush1.msra.mxu0 %v190
    %215 = vmatprep.subr.mxu0 0.0
    %216 = vmatpush1.msra.mxu0 %v191
    %217 = vmatprep.subr.mxu0 0.0
    %218 = vmatpush1.msra.mxu0 %v192
    %219 = vmatprep.subr.mxu0 0.0
    %220 = vmatpush1.msra.mxu0 %v193
    %221 = vmatprep.subr.mxu0 0.0
    %222 = vmatpush1.msra.mxu0 %v194
    %223 = vmatprep.subr.mxu0 0.0
    %224 = vmatpush1.msra.mxu0 %v195
    %225 = vmatprep.subr.mxu0 0.0
    %226 = vmatpush1.msra.mxu0 %v196
    %227 = vmatprep.subr.mxu0 0.0
    %228 = vmatpush1.msra.mxu0 %v197
    %229 = vmatprep.subr.mxu0 0.0
    %230 = vmatpush1.msra.mxu0 %v198
    %231 = vmatprep.subr.mxu0 0.0
    %232 = vmatpush1.msra.mxu0 %v199
    %233 = vmatprep.subr.mxu0 0.0
    %234 = vmatpush1.msra.mxu0 %v200
    %235 = vmatprep.subr.mxu0 0.0
    %236 = vmatpush1.msra.mxu0 %v201
    %237 = vmatprep.subr.mxu0 0.0
    %238 = vmatpush1.msra.mxu0 %v202
    %239 = vmatprep.subr.mxu0 0.0
    %240 = vmatpush1.msra.mxu0 %v203
    %241 = vmatprep.subr.mxu0 0.0
    %242 = vmatpush1.msra.mxu0 %v204
    %243 = vmatprep.subr.mxu0 0.0
    %244 = vmatpush1.msra.mxu0 %v205
    %245 = vmatprep.subr.mxu0 0.0
    %246 = vmatpush1.msra.mxu0 0.0
    %247 = vmatprep.subr.mxu0 0.0
    %248 = vmatpush1.msra.mxu0 0.0
    %249 = vmatprep.subr.mxu0 0.0
    %250 = vmatpush1.msra.mxu0 0.0
    %251 = vmatprep.subr.mxu0 0.0
    %252 = vmatpush1.msra.mxu0 0.0
    %253 = vmatprep.subr.mxu0 0.0
    %254 = vmatpush1.msra.mxu0 0.0
    %255 = vmatprep.subr.mxu0 0.0
    %256 = vmatpush1.msra.mxu0 0.0
    %257 = vmatprep.subr.mxu0 0.0
    %258 = vmatpush1.msra.mxu0 0.0
    %259 = vmatprep.subr.mxu0 0.0
    %260 = vmatpush1.msra.mxu0 0.0
    %261 = vmatprep.subr.mxu0 0.0
    %262 = vmatpush1.msra.mxu0 0.0
    %263 = vmatprep.subr.mxu0 0.0
    %264 = vmatpush1.msra.mxu0 0.0
    %265 = vmatprep.subr.mxu0 0.0
    %266 = vmatpush1.msra.mxu0 0.0
    %267 = vmatprep.subr.mxu0 0.0
    %268 = vmatpush1.msra.mxu0 0.0
    %269 = vmatprep.subr.mxu0 0.0
    %270 = vmatpush1.msra.mxu0 0.0
    %271 = vmatprep.subr.mxu0 0.0
    %272 = vmatpush1.msra.mxu0 0.0
    %273 = vmatprep.subr.mxu0 0.0
    %274 = vmatpush1.msra.mxu0 0.0
    %275 = vmatprep.subr.mxu0 0.0
    %276 = vmatpush1.msra.mxu0 0.0
    %277 = vmatprep.mubr.f32.mxu0 0.0
    %278 = vmatmul.mubr.f32.gmra.mrb[0].mxu0 %v62
    %v279 = vpop.f32.mrb[0].mxu0
    %v280 = vadd.f32 %v211, %v279
    %v281 = vpop.f32.mrb[0].mxu0
    %282 = vmatprep.mubr.f32.mxu0 0.0
    %283 = vmatmul.mubr.f32.gmra.mrb[0].mxu0 %v63
    %v284 = vpop.f32.mrb[0].mxu0
    %v285 = vadd.f32 %v211, %v284
    %v286 = vpop.f32.mrb[0].mxu0
    %287 = vmatprep.mubr.f32.mxu0 0.0
    %288 = vmatmul.mubr.f32.gmra.mrb[0].mxu0 %v64
    %v289 = vpop.f32.mrb[0].mxu0
    %v290 = vadd.f32 %v211, %v289
    %v291 = vpop.f32.mrb[0].mxu0
    %292 = vmatprep.mubr.f32.mxu0 0.0
    %293 = vmatmul.mubr.f32.gmra.mrb[0].mxu0 %v65
    %v294 = vpop.f32.mrb[0].mxu0
    %v295 = vadd.f32 %v211, %v294
    %v296 = vpop.f32.mrb[0].mxu0
    %297 = vmatprep.mubr.f32.mxu0 0.0
    %298 = vmatmul.mubr.f32.gmra.mrb[0].mxu0 %v66
    %v299 = vpop.f32.mrb[0].mxu0
    %v300 = vadd.f32 %v211, %v299
    %v301 = vpop.f32.mrb[0].mxu0
    %302 = vmatprep.mubr.f32.mxu0 0.0
    %303 = vmatmul.mubr.f32.gmra.mrb[0].mxu0 %v67
    %v304 = vpop.f32.mrb[0].mxu0
    %v305 = vadd.f32 %v211, %v304
    %v306 = vpop.f32.mrb[0].mxu0
    %307 = vmatprep.mubr.f32.mxu0 0.0
    %308 = vmatmul.mubr.f32.gmra.mrb[0].mxu0 %v68
    %v309 = vpop.f32.mrb[0].mxu0
    %v310 = vadd.f32 %v211, %v309
    %v311 = vpop.f32.mrb[0].mxu0
    %312 = vmatprep.mubr.f32.mxu0 0.0
    %313 = vmatmul.mubr.f32.gmra.mrb[0].mxu0 %v69
    %v314 = vpop.f32.mrb[0].mxu0
    %v315 = vadd.f32 %v211, %v314
    %v316 = vpop.f32.mrb[0].mxu0
    %317 = vmatprep.mubr.f32.mxu0 0.0
    %318 = vmatmul.mubr.f32.gmra.mrb[0].mxu0 %v70
    %v319 = vpop.f32.mrb[0].mxu0
    %v320 = vadd.f32 %v211, %v319
    %v321 = vpop.f32.mrb[0].mxu0
    %322 = vmatprep.mubr.f32.mxu0 0.0
    %323 = vmatmul.mubr.f32.gmra.mrb[0].mxu0 %v71
    %v324 = vpop.f32.mrb[0].mxu0
    %v325 = vadd.f32 %v211, %v324
    %v326 = vpop.f32.mrb[0].mxu0
    %327 = vmatprep.mubr.f32.mxu0 0.0
    %328 = vmatmul.mubr.f32.gmra.mrb[0].mxu0 %v72
    %v329 = vpop.f32.mrb[0].mxu0
    %v330 = vadd.f32 %v211, %v329
    %v331 = vpop.f32.mrb[0].mxu0
    %332 = vmatprep.mubr.f32.mxu0 0.0
    %333 = vmatmul.mubr.f32.gmra.mrb[0].mxu0 %v73
    %v334 = vpop.f32.mrb[0].mxu0
    %v335 = vadd.f32 %v211, %v334
    %v336 = vpop.f32.mrb[0].mxu0
    %337 = vmatprep.mubr.f32.mxu0 0.0
    %338 = vmatmul.mubr.f32.gmra.mrb[0].mxu0 %v74
    %v339 = vpop.f32.mrb[0].mxu0
    %v340 = vadd.f32 %v211, %v339
    %v341 = vpop.f32.mrb[0].mxu0
    %342 = vmatprep.mubr.f32.mxu0 0.0
    %343 = vmatmul.mubr.f32.gmra.mrb[0].mxu0 %v75
    %v344 = vpop.f32.mrb[0].mxu0
    %v345 = vadd.f32 %v211, %v344
    %v346 = vpop.f32.mrb[0].mxu0
    %347 = vmatprep.mubr.f32.mxu0 0.0
    %348 = vmatmul.mubr.f32.gmra.mrb[0].mxu0 %v76
    %v349 = vpop.f32.mrb[0].mxu0
    %v350 = vadd.f32 %v211, %v349
    %v351 = vpop.f32.mrb[0].mxu0
    %352 = vmatprep.mubr.f32.mxu0 0.0
    %353 = vmatmul.mubr.f32.gmra.mrb[0].mxu0 %v77
    %v354 = vpop.f32.mrb[0].mxu0
    %v355 = vadd.f32 %v211, %v354
    %v356 = vpop.f32.mrb[0].mxu0
    %357 = vmatprep.mubr.f32.mxu0 0.0
    %358 = vmatmul.mubr.f32.gmra.mrb[0].mxu0 %v78
    %v359 = vpop.f32.mrb[0].mxu0
    %v360 = vadd.f32 %v211, %v359
    %v361 = vpop.f32.mrb[0].mxu0
    %362 = vmatprep.mubr.f32.mxu0 0.0
    %363 = vmatmul.mubr.f32.gmra.mrb[0].mxu0 %v79
    %v364 = vpop.f32.mrb[0].mxu0
    %v365 = vadd.f32 %v211, %v364
    %v366 = vpop.f32.mrb[0].mxu0
    %367 = vmatprep.mubr.f32.mxu0 0.0
    %368 = vmatmul.mubr.f32.gmra.mrb[0].mxu0 %v80
    %v369 = vpop.f32.mrb[0].mxu0
    %v370 = vadd.f32 %v211, %v369
    %v371 = vpop.f32.mrb[0].mxu0
    %372 = vmatprep.mubr.f32.mxu0 0.0
    %373 = vmatmul.mubr.f32.gmra.mrb[0].mxu0 %v81
    %v374 = vpop.f32.mrb[0].mxu0
    %v375 = vadd.f32 %v211, %v374
    %v376 = vpop.f32.mrb[0].mxu0
    %377 = vmatprep.mubr.f32.mxu0 0.0
    %378 = vmatmul.mubr.f32.gmra.mrb[0].mxu0 %v82
    %v379 = vpop.f32.mrb[0].mxu0
    %v380 = vadd.f32 %v211, %v379
    %v381 = vpop.f32.mrb[0].mxu0
    %382 = vmatprep.mubr.f32.mxu0 0.0
    %383 = vmatmul.mubr.f32.gmra.mrb[0].mxu0 %v83
    %v384 = vpop.f32.mrb[0].mxu0
    %v385 = vadd.f32 %v211, %v384
    %v386 = vpop.f32.mrb[0].mxu0
    %387 = vmatprep.mubr.f32.mxu0 0.0
    %388 = vmatmul.mubr.f32.gmra.mrb[0].mxu0 %v84
    %v389 = vpop.f32.mrb[0].mxu0
    %v390 = vadd.f32 %v211, %v389
    %v391 = vpop.f32.mrb[0].mxu0
    %392 = vmatprep.mubr.f32.mxu0 0.0
    %393 = vmatmul.mubr.f32.gmra.mrb[0].mxu0 %v85
    %v394 = vpop.f32.mrb[0].mxu0
    %v395 = vadd.f32 %v211, %v394
    %v396 = vpop.f32.mrb[0].mxu0
    %397 = vmatprep.mubr.f32.mxu0 0.0
    %398 = vmatmul.mubr.f32.gmra.mrb[0].mxu0 %v86
    %v399 = vpop.f32.mrb[0].mxu0
    %v400 = vadd.f32 %v211, %v399
    %v401 = vpop.f32.mrb[0].mxu0
    %402 = vmatprep.mubr.f32.mxu0 0.0
    %403 = vmatmul.mubr.f32.gmra.mrb[0].mxu0 %v87
    %v404 = vpop.f32.mrb[0].mxu0
    %v405 = vadd.f32 %v211, %v404
    %v406 = vpop.f32.mrb[0].mxu0
    %407 = vmatprep.mubr.f32.mxu0 0.0
    %408 = vmatmul.mubr.f32.gmra.mrb[0].mxu0 %v88
    %v409 = vpop.f32.mrb[0].mxu0
    %v410 = vadd.f32 %v211, %v409
    %v411 = vpop.f32.mrb[0].mxu0
    %412 = vmatprep.mubr.f32.mxu0 0.0
    %413 = vmatmul.mubr.f32.gmra.mrb[0].mxu0 %v89
    %v414 = vpop.f32.mrb[0].mxu0
    %v415 = vadd.f32 %v211, %v414
    %v416 = vpop.f32.mrb[0].mxu0
    %417 = vmatprep.mubr.f32.mxu0 0.0
    %418 = vmatmul.mubr.f32.gmra.mrb[0].mxu0 %v90
    %v419 = vpop.f32.mrb[0].mxu0
    %v420 = vadd.f32 %v211, %v419
    %v421 = vpop.f32.mrb[0].mxu0
    %422 = vmatprep.mubr.f32.mxu0 0.0
    %423 = vmatmul.mubr.f32.gmra.mrb[0].mxu0 %v91
    %v424 = vpop.f32.mrb[0].mxu0
    %v425 = vadd.f32 %v211, %v424
    %v426 = vpop.f32.mrb[0].mxu0
    %427 = vmatprep.mubr.f32.mxu0 0.0
    %428 = vmatmul.mubr.f32.gmra.mrb[0].mxu0 %v92
    %v429 = vpop.f32.mrb[0].mxu0
    %v430 = vadd.f32 %v211, %v429
    %v431 = vpop.f32.mrb[0].mxu0
    %432 = vmatprep.mubr.f32.mxu0 0.0
    %433 = vmatmul.mubr.f32.gmra.mrb[0].mxu0 %v93
    %v434 = vpop.f32.mrb[0].mxu0
    %v435 = vadd.f32 %v211, %v434
    %v436 = vpop.f32.mrb[0].mxu0
    %437 = vmatprep.mubr.f32.mxu0 0.0
    %438 = vmatmul.mubr.f32.gmra.mrb[0].mxu0 %v94
    %v439 = vpop.f32.mrb[0].mxu0
    %v440 = vadd.f32 %v211, %v439
    %v441 = vpop.f32.mrb[0].mxu0
    %442 = vmatprep.mubr.f32.mxu0 0.0
    %443 = vmatmul.mubr.f32.gmra.mrb[0].mxu0 %v95
    %v444 = vpop.f32.mrb[0].mxu0
    %v445 = vadd.f32 %v211, %v444
    %v446 = vpop.f32.mrb[0].mxu0
    %447 = vmatprep.mubr.f32.mxu0 0.0
    %448 = vmatmul.mubr.f32.gmra.mrb[0].mxu0 %v96
    %v449 = vpop.f32.mrb[0].mxu0
    %v450 = vadd.f32 %v211, %v449
    %v451 = vpop.f32.mrb[0].mxu0
    %452 = vmatprep.mubr.f32.mxu0 0.0
    %453 = vmatmul.mubr.f32.gmra.mrb[0].mxu0 %v97
    %v454 = vpop.f32.mrb[0].mxu0
    %v455 = vadd.f32 %v211, %v454
    %v456 = vpop.f32.mrb[0].mxu0
    %457 = vmatprep.mubr.f32.mxu0 0.0
    %458 = vmatmul.mubr.f32.gmra.mrb[0].mxu0 %v98
    %v459 = vpop.f32.mrb[0].mxu0
    %v460 = vadd.f32 %v211, %v459
    %v461 = vpop.f32.mrb[0].mxu0
    %462 = vmatprep.mubr.f32.mxu0 0.0
    %463 = vmatmul.mubr.f32.gmra.mrb[0].mxu0 %v99
    %v464 = vpop.f32.mrb[0].mxu0
    %v465 = vadd.f32 %v211, %v464
    %v466 = vpop.f32.mrb[0].mxu0
    %467 = vmatprep.mubr.f32.mxu0 0.0
    %468 = vmatmul.mubr.f32.gmra.mrb[0].mxu0 %v100
    %v469 = vpop.f32.mrb[0].mxu0
    %v470 = vadd.f32 %v211, %v469
    %v471 = vpop.f32.mrb[0].mxu0
    %472 = vmatprep.mubr.f32.mxu0 0.0
    %473 = vmatmul.mubr.f32.gmra.mrb[0].mxu0 %v101
    %v474 = vpop.f32.mrb[0].mxu0
    %v475 = vadd.f32 %v211, %v474
    %v476 = vpop.f32.mrb[0].mxu0
    %477 = vmatprep.mubr.f32.mxu0 0.0
    %478 = vmatmul.mubr.f32.gmra.mrb[0].mxu0 %v102
    %v479 = vpop.f32.mrb[0].mxu0
    %v480 = vadd.f32 %v211, %v479
    %v481 = vpop.f32.mrb[0].mxu0
    %482 = vmatprep.mubr.f32.mxu0 0.0
    %483 = vmatmul.mubr.f32.gmra.mrb[0].mxu0 %v103
    %v484 = vpop.f32.mrb[0].mxu0
    %v485 = vadd.f32 %v211, %v484
    %v486 = vpop.f32.mrb[0].mxu0
    %487 = vmatprep.mubr.f32.mxu0 0.0
    %488 = vmatmul.mubr.f32.gmra.mrb[0].mxu0 %v104
    %v489 = vpop.f32.mrb[0].mxu0
    %v490 = vadd.f32 %v211, %v489
    %v491 = vpop.f32.mrb[0].mxu0
    %492 = vmatprep.mubr.f32.mxu0 0.0
    %493 = vmatmul.mubr.f32.gmra.mrb[0].mxu0 %v105
    %v494 = vpop.f32.mrb[0].mxu0
    %v495 = vadd.f32 %v211, %v494
    %v496 = vpop.f32.mrb[0].mxu0
    %497 = vmatprep.mubr.f32.mxu0 0.0
    %498 = vmatmul.mubr.f32.gmra.mrb[0].mxu0 %v106
    %v499 = vpop.f32.mrb[0].mxu0
    %v500 = vadd.f32 %v211, %v499
    %v501 = vpop.f32.mrb[0].mxu0
    %502 = vmatprep.mubr.f32.mxu0 0.0
    %503 = vmatmul.mubr.f32.gmra.mrb[0].mxu0 %v107
    %v504 = vpop.f32.mrb[0].mxu0
    %v505 = vadd.f32 %v211, %v504
    %v506 = vpop.f32.mrb[0].mxu0
    %507 = vmatprep.mubr.f32.mxu0 0.0
    %508 = vmatmul.mubr.f32.gmra.mrb[0].mxu0 %v108
    %v509 = vpop.f32.mrb[0].mxu0
    %v510 = vadd.f32 %v211, %v509
    %v511 = vpop.f32.mrb[0].mxu0
    %512 = vmatprep.mubr.f32.mxu0 0.0
    %513 = vmatmul.mubr.f32.gmra.mrb[0].mxu0 %v109
    %v514 = vpop.f32.mrb[0].mxu0
    %v515 = vadd.f32 %v211, %v514
    %v516 = vpop.f32.mrb[0].mxu0
    %517 = vmatprep.mubr.f32.mxu0 0.0
    %518 = vmatmul.mubr.f32.gmra.mrb[0].mxu0 %v110
    %v519 = vpop.f32.mrb[0].mxu0
    %v520 = vadd.f32 %v211, %v519
    %v521 = vpop.f32.mrb[0].mxu0
    %522 = vmatprep.mubr.f32.mxu0 0.0
    %523 = vmatmul.mubr.f32.gmra.mrb[0].mxu0 %v111
    %v524 = vpop.f32.mrb[0].mxu0
    %v525 = vadd.f32 %v211, %v524
    %v526 = vpop.f32.mrb[0].mxu0
    %527 = vmatprep.mubr.f32.mxu0 0.0
    %528 = vmatmul.mubr.f32.gmra.mrb[0].mxu0 %v112
    %v529 = vpop.f32.mrb[0].mxu0
    %v530 = vadd.f32 %v211, %v529
    %v531 = vpop.f32.mrb[0].mxu0
    %532 = vmatprep.mubr.f32.mxu0 0.0
    %533 = vmatmul.mubr.f32.gmra.mrb[0].mxu0 %v113
    %v534 = vpop.f32.mrb[0].mxu0
    %v535 = vadd.f32 %v211, %v534
    %v536 = vpop.f32.mrb[0].mxu0
    %537 = vmatprep.mubr.f32.mxu0 0.0
    %538 = vmatmul.mubr.f32.gmra.mrb[0].mxu0 %v114
    %v539 = vpop.f32.mrb[0].mxu0
    %v540 = vadd.f32 %v211, %v539
    %v541 = vpop.f32.mrb[0].mxu0
    %542 = vmatprep.mubr.f32.mxu0 0.0
    %543 = vmatmul.mubr.f32.gmra.mrb[0].mxu0 %v115
    %v544 = vpop.f32.mrb[0].mxu0
    %v545 = vadd.f32 %v211, %v544
    %v546 = vpop.f32.mrb[0].mxu0
    %547 = vmatprep.mubr.f32.mxu0 0.0
    %548 = vmatmul.mubr.f32.gmra.mrb[0].mxu0 %v116
    %v549 = vpop.f32.mrb[0].mxu0
    %v550 = vadd.f32 %v211, %v549
    %v551 = vpop.f32.mrb[0].mxu0
    %552 = vmatprep.mubr.f32.mxu0 0.0
    %553 = vmatmul.mubr.f32.gmra.mrb[0].mxu0 %v117
    %v554 = vpop.f32.mrb[0].mxu0
    %v555 = vadd.f32 %v211, %v554
    %v556 = vpop.f32.mrb[0].mxu0
    %557 = vmatprep.mubr.f32.mxu0 0.0
    %558 = vmatmul.mubr.f32.gmra.mrb[0].mxu0 %v118
    %v559 = vpop.f32.mrb[0].mxu0
    %v560 = vadd.f32 %v211, %v559
    %v561 = vpop.f32.mrb[0].mxu0
    %562 = vmatprep.mubr.f32.mxu0 0.0
    %563 = vmatmul.mubr.f32.gmra.mrb[0].mxu0 %v119
    %v564 = vpop.f32.mrb[0].mxu0
    %v565 = vadd.f32 %v211, %v564
    %v566 = vpop.f32.mrb[0].mxu0
    %567 = vmatprep.mubr.f32.mxu0 0.0
    %568 = vmatmul.mubr.f32.gmra.mrb[0].mxu0 %v120
    %v569 = vpop.f32.mrb[0].mxu0
    %v570 = vadd.f32 %v211, %v569
    %v571 = vpop.f32.mrb[0].mxu0
    %572 = vmatprep.mubr.f32.mxu0 0.0
    %573 = vmatmul.mubr.f32.gmra.mrb[0].mxu0 %v121
    %v574 = vpop.f32.mrb[0].mxu0
    %v575 = vadd.f32 %v211, %v574
    %v576 = vpop.f32.mrb[0].mxu0
    %577 = vmatprep.mubr.f32.mxu0 0.0
    %578 = vmatmul.mubr.f32.gmra.mrb[0].mxu0 %v122
    %v579 = vpop.f32.mrb[0].mxu0
    %v580 = vadd.f32 %v211, %v579
    %v581 = vpop.f32.mrb[0].mxu0
    %582 = vmatprep.mubr.f32.mxu0 0.0
    %583 = vmatmul.mubr.f32.gmra.mrb[0].mxu0 %v123
    %v584 = vpop.f32.mrb[0].mxu0
    %v585 = vadd.f32 %v211, %v584
    %v586 = vpop.f32.mrb[0].mxu0
    %587 = vmatprep.mubr.f32.mxu0 0.0
    %588 = vmatmul.mubr.f32.gmra.mrb[0].mxu0 %v124
    %v589 = vpop.f32.mrb[0].mxu0
    %v590 = vadd.f32 %v211, %v589
    %v591 = vpop.f32.mrb[0].mxu0
    %592 = vmatprep.mubr.f32.mxu0 0.0
    %593 = vmatmul.mubr.f32.gmra.mrb[0].mxu0 %v125
    %v594 = vpop.f32.mrb[0].mxu0
    %v595 = vadd.f32 %v211, %v594
    %v596 = vpop.f32.mrb[0].mxu0
    %597 = vmatprep.mubr.f32.mxu0 0.0
    %598 = vmatmul.mubr.f32.gmra.mrb[0].mxu0 %v126
    %v599 = vpop.f32.mrb[0].mxu0
    %v600 = vadd.f32 %v211, %v599
    %v601 = vpop.f32.mrb[0].mxu0
    %602 = vmatprep.mubr.f32.mxu0 0.0
    %603 = vmatmul.mubr.f32.gmra.mrb[0].mxu0 %v127
    %v604 = vpop.f32.mrb[0].mxu0
    %v605 = vadd.f32 %v211, %v604
    %v606 = vpop.f32.mrb[0].mxu0
    %607 = vmatprep.mubr.f32.mxu0 0.0
    %608 = vmatmul.mubr.f32.gmra.mrb[0].mxu0 %v128
    %v609 = vpop.f32.mrb[0].mxu0
    %v610 = vadd.f32 %v211, %v609
    %v611 = vpop.f32.mrb[0].mxu0
    %612 = vmatprep.mubr.f32.mxu0 0.0
    %613 = vmatmul.mubr.f32.gmra.mrb[0].mxu0 %v129
    %v614 = vpop.f32.mrb[0].mxu0
    %v615 = vadd.f32 %v211, %v614
    %v616 = vpop.f32.mrb[0].mxu0
    %617 = vmatprep.mubr.f32.mxu0 0.0
    %618 = vmatmul.mubr.f32.gmra.mrb[0].mxu0 %v130
    %v619 = vpop.f32.mrb[0].mxu0
    %v620 = vadd.f32 %v211, %v619
    %v621 = vpop.f32.mrb[0].mxu0
    %622 = vmatprep.mubr.f32.mxu0 0.0
    %623 = vmatmul.mubr.f32.gmra.mrb[0].mxu0 %v131
    %v624 = vpop.f32.mrb[0].mxu0
    %v625 = vadd.f32 %v211, %v624
    %v626 = vpop.f32.mrb[0].mxu0
    %627 = vmatprep.mubr.f32.mxu0 0.0
    %628 = vmatmul.mubr.f32.gmra.mrb[0].mxu0 %v132
    %v629 = vpop.f32.mrb[0].mxu0
    %v630 = vadd.f32 %v211, %v629
    %v631 = vpop.f32.mrb[0].mxu0
    %632 = vmatprep.mubr.f32.mxu0 0.0
    %633 = vmatmul.mubr.f32.gmra.mrb[0].mxu0 %v133
    %v634 = vpop.f32.mrb[0].mxu0
    %v635 = vadd.f32 %v211, %v634
    %v636 = vpop.f32.mrb[0].mxu0
    %637 = vmatprep.mubr.f32.mxu0 0.0
    %638 = vmatmul.mubr.f32.gmra.mrb[0].mxu0 %v134
    %v639 = vpop.f32.mrb[0].mxu0
    %v640 = vadd.f32 %v211, %v639
    %v641 = vpop.f32.mrb[0].mxu0
    %642 = vmatprep.mubr.f32.mxu0 0.0
    %643 = vmatmul.mubr.f32.gmra.mrb[0].mxu0 %v135
    %v644 = vpop.f32.mrb[0].mxu0
    %v645 = vadd.f32 %v211, %v644
    %v646 = vpop.f32.mrb[0].mxu0
    %647 = vmatprep.mubr.f32.mxu0 0.0
    %648 = vmatmul.mubr.f32.gmra.mrb[0].mxu0 %v136
    %v649 = vpop.f32.mrb[0].mxu0
    %v650 = vadd.f32 %v211, %v649
    %v651 = vpop.f32.mrb[0].mxu0
    %652 = vmatprep.mubr.f32.mxu0 0.0
    %653 = vmatmul.mubr.f32.gmra.mrb[0].mxu0 %v137
    %v654 = vpop.f32.mrb[0].mxu0
    %v655 = vadd.f32 %v211, %v654
    %v656 = vpop.f32.mrb[0].mxu0
    %657 = vmatprep.mubr.f32.mxu0 0.0
    %658 = vmatmul.mubr.f32.gmra.mrb[0].mxu0 %v138
    %v659 = vpop.f32.mrb[0].mxu0
    %v660 = vadd.f32 %v211, %v659
    %v661 = vpop.f32.mrb[0].mxu0
    %662 = vmatprep.mubr.f32.mxu0 0.0
    %663 = vmatmul.mubr.f32.gmra.mrb[0].mxu0 %v139
    %v664 = vpop.f32.mrb[0].mxu0
    %v665 = vadd.f32 %v211, %v664
    %v666 = vpop.f32.mrb[0].mxu0
    %667 = vmatprep.mubr.f32.mxu0 0.0
    %668 = vmatmul.mubr.f32.gmra.mrb[0].mxu0 %v140
    %v669 = vpop.f32.mrb[0].mxu0
    %v670 = vadd.f32 %v211, %v669
    %v671 = vpop.f32.mrb[0].mxu0
    %672 = vmatprep.mubr.f32.mxu0 0.0
    %673 = vmatmul.mubr.f32.gmra.mrb[0].mxu0 %v141
    %v674 = vpop.f32.mrb[0].mxu0
    %v675 = vadd.f32 %v211, %v674
    %v676 = vpop.f32.mrb[0].mxu0
    %677 = vmatprep.mubr.f32.mxu0 0.0
    %678 = vmatmul.mubr.f32.gmra.mrb[0].mxu0 %v142
    %v679 = vpop.f32.mrb[0].mxu0
    %v680 = vadd.f32 %v211, %v679
    %v681 = vpop.f32.mrb[0].mxu0
    %682 = vmatprep.mubr.f32.mxu0 0.0
    %683 = vmatmul.mubr.f32.gmra.mrb[0].mxu0 %v143
    %v684 = vpop.f32.mrb[0].mxu0
    %v685 = vadd.f32 %v211, %v684
    %v686 = vpop.f32.mrb[0].mxu0
    %687 = vmatprep.mubr.f32.mxu0 0.0
    %688 = vmatmul.mubr.f32.gmra.mrb[0].mxu0 %v144
    %v689 = vpop.f32.mrb[0].mxu0
    %v690 = vadd.f32 %v211, %v689
    %v691 = vpop.f32.mrb[0].mxu0
    %692 = vmatprep.mubr.f32.mxu0 0.0
    %693 = vmatmul.mubr.f32.gmra.mrb[0].mxu0 %v145
    %v694 = vpop.f32.mrb[0].mxu0
    %v695 = vadd.f32 %v211, %v694
    %v696 = vpop.f32.mrb[0].mxu0
    %697 = vmatprep.mubr.f32.mxu0 0.0
    %698 = vmatmul.mubr.f32.gmra.mrb[0].mxu0 %v146
    %v699 = vpop.f32.mrb[0].mxu0
    %v700 = vadd.f32 %v211, %v699
    %v701 = vpop.f32.mrb[0].mxu0
    %702 = vmatprep.mubr.f32.mxu0 0.0
    %703 = vmatmul.mubr.f32.gmra.mrb[0].mxu0 %v147
    %v704 = vpop.f32.mrb[0].mxu0
    %v705 = vadd.f32 %v211, %v704
    %v706 = vpop.f32.mrb[0].mxu0
    %707 = vmatprep.mubr.f32.mxu0 0.0
    %708 = vmatmul.mubr.f32.gmra.mrb[0].mxu0 %v148
    %v709 = vpop.f32.mrb[0].mxu0
    %v710 = vadd.f32 %v211, %v709
    %v711 = vpop.f32.mrb[0].mxu0
    %712 = vmatprep.mubr.f32.mxu0 0.0
    %713 = vmatmul.mubr.f32.gmra.mrb[0].mxu0 %v149
    %v714 = vpop.f32.mrb[0].mxu0
    %v715 = vadd.f32 %v211, %v714
    %v716 = vpop.f32.mrb[0].mxu0
    %717 = vmatprep.mubr.f32.mxu0 0.0
    %718 = vmatmul.mubr.f32.gmra.mrb[0].mxu0 %v150
    %v719 = vpop.f32.mrb[0].mxu0
    %v720 = vadd.f32 %v211, %v719
    %v721 = vpop.f32.mrb[0].mxu0
    %722 = vmatprep.mubr.f32.mxu0 0.0
    %723 = vmatmul.mubr.f32.gmra.mrb[0].mxu0 %v151
    %v724 = vpop.f32.mrb[0].mxu0
    %v725 = vadd.f32 %v211, %v724
    %v726 = vpop.f32.mrb[0].mxu0
    %727 = vmatprep.mubr.f32.mxu0 0.0
    %728 = vmatmul.mubr.f32.gmra.mrb[0].mxu0 %v152
    %v729 = vpop.f32.mrb[0].mxu0
    %v730 = vadd.f32 %v211, %v729
    %v731 = vpop.f32.mrb[0].mxu0
    %732 = vmatprep.mubr.f32.mxu0 0.0
    %733 = vmatmul.mubr.f32.gmra.mrb[0].mxu0 %v153
    %v734 = vpop.f32.mrb[0].mxu0
    %v735 = vadd.f32 %v211, %v734
    %v736 = vpop.f32.mrb[0].mxu0
    %737 = vmatprep.mubr.f32.mxu0 0.0
    %738 = vmatmul.mubr.f32.gmra.mrb[0].mxu0 %v154
    %v739 = vpop.f32.mrb[0].mxu0
    %v740 = vadd.f32 %v211, %v739
    %v741 = vpop.f32.mrb[0].mxu0
    %742 = vmatprep.mubr.f32.mxu0 0.0
    %743 = vmatmul.mubr.f32.gmra.mrb[0].mxu0 %v155
    %v744 = vpop.f32.mrb[0].mxu0
    %v745 = vadd.f32 %v211, %v744
    %v746 = vpop.f32.mrb[0].mxu0
    %747 = vmatprep.mubr.f32.mxu0 0.0
    %748 = vmatmul.mubr.f32.gmra.mrb[0].mxu0 %v156
    %v749 = vpop.f32.mrb[0].mxu0
    %v750 = vadd.f32 %v211, %v749
    %v751 = vpop.f32.mrb[0].mxu0
    %752 = vmatprep.mubr.f32.mxu0 0.0
    %753 = vmatmul.mubr.f32.gmra.mrb[0].mxu0 %v157
    %v754 = vpop.f32.mrb[0].mxu0
    %v755 = vadd.f32 %v211, %v754
    %v756 = vpop.f32.mrb[0].mxu0
    %757 = vmatprep.mubr.f32.mxu0 0.0
    %758 = vmatmul.mubr.f32.gmra.mrb[0].mxu0 %v158
    %v759 = vpop.f32.mrb[0].mxu0
    %v760 = vadd.f32 %v211, %v759
    %v761 = vpop.f32.mrb[0].mxu0
    %762 = vmatprep.mubr.f32.mxu0 0.0
    %763 = vmatmul.mubr.f32.gmra.mrb[0].mxu0 %v159
    %v764 = vpop.f32.mrb[0].mxu0
    %v765 = vadd.f32 %v211, %v764
    %v766 = vpop.f32.mrb[0].mxu0
    %767 = vmatprep.mubr.f32.mxu0 0.0
    %768 = vmatmul.mubr.f32.gmra.mrb[0].mxu0 %v160
    %v769 = vpop.f32.mrb[0].mxu0
    %v770 = vadd.f32 %v211, %v769
    %v771 = vpop.f32.mrb[0].mxu0
    %772 = vmatprep.mubr.f32.mxu0 0.0
    %773 = vmatmul.mubr.f32.gmra.mrb[0].mxu0 %v161
    %v774 = vpop.f32.mrb[0].mxu0
    %v775 = vadd.f32 %v211, %v774
    %v776 = vpop.f32.mrb[0].mxu0
    %777 = vmatprep.mubr.f32.mxu0 0.0
    %778 = vmatmul.mubr.f32.gmra.mrb[0].mxu0 %v162
    %v779 = vpop.f32.mrb[0].mxu0
    %v780 = vadd.f32 %v211, %v779
    %v781 = vpop.f32.mrb[0].mxu0
    %782 = vmatprep.mubr.f32.mxu0 0.0
    %783 = vmatmul.mubr.f32.gmra.mrb[0].mxu0 %v163
    %v784 = vpop.f32.mrb[0].mxu0
    %v785 = vadd.f32 %v211, %v784
    %v786 = vpop.f32.mrb[0].mxu0
    %787 = vmatprep.mubr.f32.mxu0 0.0
    %788 = vmatmul.mubr.f32.gmra.mrb[0].mxu0 %v164
    %v789 = vpop.f32.mrb[0].mxu0
    %v790 = vadd.f32 %v211, %v789
    %v791 = vpop.f32.mrb[0].mxu0
    %792 = vmatprep.mubr.f32.mxu0 0.0
    %793 = vmatmul.mubr.f32.gmra.mrb[0].mxu0 %v165
    %v794 = vpop.f32.mrb[0].mxu0
    %v795 = vadd.f32 %v211, %v794
    %v796 = vpop.f32.mrb[0].mxu0
    %797 = vmatprep.mubr.f32.mxu0 0.0
    %798 = vmatmul.mubr.f32.gmra.mrb[0].mxu0 %v166
    %v799 = vpop.f32.mrb[0].mxu0
    %v800 = vadd.f32 %v211, %v799
    %v801 = vpop.f32.mrb[0].mxu0
    %802 = vmatprep.mubr.f32.mxu0 0.0
    %803 = vmatmul.mubr.f32.gmra.mrb[0].mxu0 %v167
    %v804 = vpop.f32.mrb[0].mxu0
    %v805 = vadd.f32 %v211, %v804
    %v806 = vpop.f32.mrb[0].mxu0
    %807 = vmatprep.mubr.f32.mxu0 0.0
    %808 = vmatmul.mubr.f32.gmra.mrb[0].mxu0 %v168
    %v809 = vpop.f32.mrb[0].mxu0
    %v810 = vadd.f32 %v211, %v809
    %v811 = vpop.f32.mrb[0].mxu0
    %812 = vmatprep.mubr.f32.mxu0 0.0
    %813 = vmatmul.mubr.f32.gmra.mrb[0].mxu0 %v169
    %v814 = vpop.f32.mrb[0].mxu0
    %v815 = vadd.f32 %v211, %v814
    %v816 = vpop.f32.mrb[0].mxu0
    %817 = vmatprep.mubr.f32.mxu0 0.0
    %818 = vmatmul.mubr.f32.gmra.mrb[0].mxu0 %v170
    %v819 = vpop.f32.mrb[0].mxu0
    %v820 = vadd.f32 %v211, %v819
    %v821 = vpop.f32.mrb[0].mxu0
    %822 = vmatprep.mubr.f32.mxu0 0.0
    %823 = vmatmul.mubr.f32.gmra.mrb[0].mxu0 %v171
    %v824 = vpop.f32.mrb[0].mxu0
    %v825 = vadd.f32 %v211, %v824
    %v826 = vpop.f32.mrb[0].mxu0
    %827 = vmatprep.mubr.f32.mxu0 0.0
    %828 = vmatmul.mubr.f32.gmra.mrb[0].mxu0 %v172
    %v829 = vpop.f32.mrb[0].mxu0
    %v830 = vadd.f32 %v211, %v829
    %v831 = vpop.f32.mrb[0].mxu0
    %832 = vmatprep.mubr.f32.mxu0 0.0
    %833 = vmatmul.mubr.f32.gmra.mrb[0].mxu0 %v173
    %v834 = vpop.f32.mrb[0].mxu0
    %v835 = vadd.f32 %v211, %v834
    %v836 = vpop.f32.mrb[0].mxu0
    %837 = vmatprep.mubr.f32.mxu0 0.0
    %838 = vmatmul.mubr.f32.gmra.mrb[0].mxu0 %v174
    %v839 = vpop.f32.mrb[0].mxu0
    %v840 = vadd.f32 %v211, %v839
    %v841 = vpop.f32.mrb[0].mxu0
    %842 = vmatprep.mubr.f32.mxu0 0.0
    %843 = vmatmul.mubr.f32.gmra.mrb[0].mxu0 %v175
    %v844 = vpop.f32.mrb[0].mxu0
    %v845 = vadd.f32 %v211, %v844
    %v846 = vpop.f32.mrb[0].mxu0
    %847 = vmatprep.mubr.f32.mxu0 0.0
    %848 = vmatmul.mubr.f32.gmra.mrb[0].mxu0 %v176
    %v849 = vpop.f32.mrb[0].mxu0
    %v850 = vadd.f32 %v211, %v849
    %v851 = vpop.f32.mrb[0].mxu0
    %852 = vmatprep.mubr.f32.mxu0 0.0
    %853 = vmatmul.mubr.f32.gmra.mrb[0].mxu0 %v177
    %v854 = vpop.f32.mrb[0].mxu0
    %v855 = vadd.f32 %v211, %v854
    %v856 = vpop.f32.mrb[0].mxu0
    %857 = vmatprep.mubr.f32.mxu0 0.0
    %858 = vmatmul.mubr.f32.gmra.mrb[0].mxu0 %v178
    %v859 = vpop.f32.mrb[0].mxu0
    %v860 = vadd.f32 %v211, %v859
    %v861 = vpop.f32.mrb[0].mxu0
    %862 = vmatprep.mubr.f32.mxu0 0.0
    %863 = vmatmul.mubr.f32.gmra.mrb[0].mxu0 %v179
    %v864 = vpop.f32.mrb[0].mxu0
    %v865 = vadd.f32 %v211, %v864
    %v866 = vpop.f32.mrb[0].mxu0
    %867 = vmatprep.mubr.f32.mxu0 0.0
    %868 = vmatmul.mubr.f32.gmra.mrb[0].mxu0 %v180
    %v869 = vpop.f32.mrb[0].mxu0
    %v870 = vadd.f32 %v211, %v869
    %v871 = vpop.f32.mrb[0].mxu0
    %872 = vmatprep.mubr.f32.mxu0 0.0
    %873 = vmatmul.mubr.f32.gmra.mrb[0].mxu0 %v181
    %v874 = vpop.f32.mrb[0].mxu0
    %v875 = vadd.f32 %v211, %v874
    %v876 = vpop.f32.mrb[0].mxu0
    %877 = vmatprep.mubr.f32.mxu0 0.0
    %878 = vmatmul.mubr.f32.gmra.mrb[0].mxu0 %v182
    %v879 = vpop.f32.mrb[0].mxu0
    %v880 = vadd.f32 %v211, %v879
    %v881 = vpop.f32.mrb[0].mxu0
    %882 = vmatprep.mubr.f32.mxu0 0.0
    %883 = vmatmul.mubr.f32.gmra.mrb[0].mxu0 %v183
    %v884 = vpop.f32.mrb[0].mxu0
    %v885 = vadd.f32 %v211, %v884
    %v886 = vpop.f32.mrb[0].mxu0
    %887 = vmatprep.mubr.f32.mxu0 0.0
    %888 = vmatmul.mubr.f32.gmra.mrb[0].mxu0 %v184
    %v889 = vpop.f32.mrb[0].mxu0
    %v890 = vadd.f32 %v211, %v889
    %v891 = vpop.f32.mrb[0].mxu0
    %892 = vmatprep.mubr.f32.mxu0 0.0
    %893 = vmatmul.mubr.f32.gmra.mrb[0].mxu0 %v185
    %v894 = vpop.f32.mrb[0].mxu0
    %v895 = vadd.f32 %v211, %v894
    %v896 = vpop.f32.mrb[0].mxu0
    %897 = vmatprep.mubr.f32.mxu0 0.0
    %898 = vmatmul.mubr.f32.gmra.mrb[0].mxu0 %v186
    %v899 = vpop.f32.mrb[0].mxu0
    %v900 = vadd.f32 %v211, %v899
    %v901 = vpop.f32.mrb[0].mxu0
    %902 = vmatprep.mubr.f32.mxu0 0.0
    %903 = vmatmul.mubr.f32.gmra.mrb[0].mxu0 %v187
    %v904 = vpop.f32.mrb[0].mxu0
    %v905 = vadd.f32 %v211, %v904
    %v906 = vpop.f32.mrb[0].mxu0
    %907 = vmatprep.mubr.f32.mxu0 0.0
    %908 = vmatmul.mubr.f32.gmra.mrb[0].mxu0 %v188
    %v909 = vpop.f32.mrb[0].mxu0
    %v910 = vadd.f32 %v211, %v909
    %v911 = vpop.f32.mrb[0].mxu0
    %912 = vmatprep.mubr.f32.mxu0 0.0
    %913 = vmatmul.mubr.f32.gmra.mrb[0].mxu0 %v189
    %v914 = vpop.f32.mrb[0].mxu0
    %v915 = vadd.f32 %v211, %v914
    %v916 = vpop.f32.mrb[0].mxu0
    %917 = vdwg.mxu0
    %v918 = vmax.f32 %v280, 0.0
    %v919 = vmax.f32 %v285, 0.0
    %v920 = vmax.f32 %v290, 0.0
    %v921 = vmax.f32 %v295, 0.0
    %v922 = vmax.f32 %v300, 0.0
    %v923 = vmax.f32 %v305, 0.0
    %v924 = vmax.f32 %v310, 0.0
    %v925 = vmax.f32 %v315, 0.0
    %v926 = vmax.f32 %v320, 0.0
    %v927 = vmax.f32 %v325, 0.0
    %v928 = vmax.f32 %v330, 0.0
    %v929 = vmax.f32 %v335, 0.0
    %v930 = vmax.f32 %v340, 0.0
    %v931 = vmax.f32 %v345, 0.0
    %v932 = vmax.f32 %v350, 0.0
    %v933 = vmax.f32 %v355, 0.0
    %v934 = vmax.f32 %v360, 0.0
    %v935 = vmax.f32 %v365, 0.0
    %v936 = vmax.f32 %v370, 0.0
    %v937 = vmax.f32 %v375, 0.0
    %v938 = vmax.f32 %v380, 0.0
    %v939 = vmax.f32 %v385, 0.0
    %v940 = vmax.f32 %v390, 0.0
    %v941 = vmax.f32 %v395, 0.0
    %v942 = vmax.f32 %v400, 0.0
    %v943 = vmax.f32 %v405, 0.0
    %v944 = vmax.f32 %v410, 0.0
    %v945 = vmax.f32 %v415, 0.0
    %v946 = vmax.f32 %v420, 0.0
    %v947 = vmax.f32 %v425, 0.0
    %v948 = vmax.f32 %v430, 0.0
    %v949 = vmax.f32 %v435, 0.0
    %v950 = vmax.f32 %v440, 0.0
    %v951 = vmax.f32 %v445, 0.0
    %v952 = vmax.f32 %v450, 0.0
    %v953 = vmax.f32 %v455, 0.0
    %v954 = vmax.f32 %v460, 0.0
    %v955 = vmax.f32 %v465, 0.0
    %v956 = vmax.f32 %v470, 0.0
    %v957 = vmax.f32 %v475, 0.0
    %v958 = vmax.f32 %v480, 0.0
    %v959 = vmax.f32 %v485, 0.0
    %v960 = vmax.f32 %v490, 0.0
    %v961 = vmax.f32 %v495, 0.0
    %v962 = vmax.f32 %v500, 0.0
    %v963 = vmax.f32 %v505, 0.0
    %v964 = vmax.f32 %v510, 0.0
    %v965 = vmax.f32 %v515, 0.0
    %v966 = vmax.f32 %v520, 0.0
    %v967 = vmax.f32 %v525, 0.0
    %v968 = vmax.f32 %v530, 0.0
    %v969 = vmax.f32 %v535, 0.0
    %v970 = vmax.f32 %v540, 0.0
    %v971 = vmax.f32 %v545, 0.0
    %v972 = vmax.f32 %v550, 0.0
    %v973 = vmax.f32 %v555, 0.0
    %v974 = vmax.f32 %v560, 0.0
    %v975 = vmax.f32 %v565, 0.0
    %v976 = vmax.f32 %v570, 0.0
    %v977 = vmax.f32 %v575, 0.0
    %v978 = vmax.f32 %v580, 0.0
    %v979 = vmax.f32 %v585, 0.0
    %v980 = vmax.f32 %v590, 0.0
    %v981 = vmax.f32 %v595, 0.0
    %v982 = vmax.f32 %v600, 0.0
    %v983 = vmax.f32 %v605, 0.0
    %v984 = vmax.f32 %v610, 0.0
    %v985 = vmax.f32 %v615, 0.0
    %v986 = vmax.f32 %v620, 0.0
    %v987 = vmax.f32 %v625, 0.0
    %v988 = vmax.f32 %v630, 0.0
    %v989 = vmax.f32 %v635, 0.0
    %v990 = vmax.f32 %v640, 0.0
    %v991 = vmax.f32 %v645, 0.0
    %v992 = vmax.f32 %v650, 0.0
    %v993 = vmax.f32 %v655, 0.0
    %v994 = vmax.f32 %v660, 0.0
    %v995 = vmax.f32 %v665, 0.0
    %v996 = vmax.f32 %v670, 0.0
    %v997 = vmax.f32 %v675, 0.0
    %v998 = vmax.f32 %v680, 0.0
    %v999 = vmax.f32 %v685, 0.0
    %v1000 = vmax.f32 %v690, 0.0
    %v1001 = vmax.f32 %v695, 0.0
    %v1002 = vmax.f32 %v700, 0.0
    %v1003 = vmax.f32 %v705, 0.0
    %v1004 = vmax.f32 %v710, 0.0
    %v1005 = vmax.f32 %v715, 0.0
    %v1006 = vmax.f32 %v720, 0.0
    %v1007 = vmax.f32 %v725, 0.0
    %v1008 = vmax.f32 %v730, 0.0
    %v1009 = vmax.f32 %v735, 0.0
    %v1010 = vmax.f32 %v740, 0.0
    %v1011 = vmax.f32 %v745, 0.0
    %v1012 = vmax.f32 %v750, 0.0
    %v1013 = vmax.f32 %v755, 0.0
    %v1014 = vmax.f32 %v760, 0.0
    %v1015 = vmax.f32 %v765, 0.0
    %v1016 = vmax.f32 %v770, 0.0
    %v1017 = vmax.f32 %v775, 0.0
    %v1018 = vmax.f32 %v780, 0.0
    %v1019 = vmax.f32 %v785, 0.0
    %v1020 = vmax.f32 %v790, 0.0
    %v1021 = vmax.f32 %v795, 0.0
    %v1022 = vmax.f32 %v800, 0.0
    %v1023 = vmax.f32 %v805, 0.0
    %v1024 = vmax.f32 %v810, 0.0
    %v1025 = vmax.f32 %v815, 0.0
    %v1026 = vmax.f32 %v820, 0.0
    %v1027 = vmax.f32 %v825, 0.0
    %v1028 = vmax.f32 %v830, 0.0
    %v1029 = vmax.f32 %v835, 0.0
    %v1030 = vmax.f32 %v840, 0.0
    %v1031 = vmax.f32 %v845, 0.0
    %v1032 = vmax.f32 %v850, 0.0
    %v1033 = vmax.f32 %v855, 0.0
    %v1034 = vmax.f32 %v860, 0.0
    %v1035 = vmax.f32 %v865, 0.0
    %v1036 = vmax.f32 %v870, 0.0
    %v1037 = vmax.f32 %v875, 0.0
    %v1038 = vmax.f32 %v880, 0.0
    %v1039 = vmax.f32 %v885, 0.0
    %v1040 = vmax.f32 %v890, 0.0
    %v1041 = vmax.f32 %v895, 0.0
    %v1042 = vmax.f32 %v900, 0.0
    %v1043 = vmax.f32 %v905, 0.0
    %v1044 = vmax.f32 %v910, 0.0
    %v1045 = vmax.f32 %v915, 0.0
    %v1046 = vld [vmem:[#allocation7] sm:$0xff]
    %v1047 = vld [vmem:[#allocation7 + $0x8] sm:$0xff]
    %v1048 = vld [vmem:[#allocation7 + $0x10] sm:$0xff]
    %v1049 = vld [vmem:[#allocation7 + $0x18] sm:$0xff]
    %v1050 = vld [vmem:[#allocation7 + $0x20] sm:$0xff]
    %v1051 = vld [vmem:[#allocation7 + $0x28] sm:$0xff]
    %v1052 = vld [vmem:[#allocation7 + $0x30] sm:$0xff]
    %v1053 = vld [vmem:[#allocation7 + $0x38] sm:$0xff]
    %v1054 = vld [vmem:[#allocation7 + $0x40] sm:$0xff]
    %v1055 = vld [vmem:[#allocation7 + $0x48] sm:$0xff]
    %v1056 = vld [vmem:[#allocation7 + $0x50] sm:$0xff]
    %v1057 = vld [vmem:[#allocation7 + $0x58] sm:$0xff]
    %v1058 = vld [vmem:[#allocation7 + $0x60] sm:$0xff]
    %v1059 = vld [vmem:[#allocation7 + $0x68] sm:$0xff]
    %v1060 = vld [vmem:[#allocation7 + $0x70] sm:$0xff]
    %v1061 = vld [vmem:[#allocation7 + $0x78] sm:$0xff]
    %v1062 = vld [vmem:[%s4] sm:$0x1]
    %v1064 = vlaneseq
    %v1065 = vshrl.u32 %v1064, 7
    %v1066 = vsub.s32 0, %v1065
    %v1067 = vrot.slane %v1062, %v1066
    %1069 = vmatprep.subr.mxu0 0.0
    %1070 = vmatpush1.msra.mxu0 %v1046
    %1071 = vmatprep.subr.mxu0 0.0
    %1072 = vmatpush1.msra.mxu0 %v1047
    %1073 = vmatprep.subr.mxu0 0.0
    %1074 = vmatpush1.msra.mxu0 %v1048
    %1075 = vmatprep.subr.mxu0 0.0
    %1076 = vmatpush1.msra.mxu0 %v1049
    %1077 = vmatprep.subr.mxu0 0.0
    %1078 = vmatpush1.msra.mxu0 %v1050
    %1079 = vmatprep.subr.mxu0 0.0
    %1080 = vmatpush1.msra.mxu0 %v1051
    %1081 = vmatprep.subr.mxu0 0.0
    %1082 = vmatpush1.msra.mxu0 %v1052
    %1083 = vmatprep.subr.mxu0 0.0
    %1084 = vmatpush1.msra.mxu0 %v1053
    %1085 = vmatprep.subr.mxu0 0.0
    %1086 = vmatpush1.msra.mxu0 %v1054
    %1087 = vmatprep.subr.mxu0 0.0
    %1088 = vmatpush1.msra.mxu0 %v1055
    %1089 = vmatprep.subr.mxu0 0.0
    %1090 = vmatpush1.msra.mxu0 %v1056
    %1091 = vmatprep.subr.mxu0 0.0
    %1092 = vmatpush1.msra.mxu0 %v1057
    %1093 = vmatprep.subr.mxu0 0.0
    %1094 = vmatpush1.msra.mxu0 %v1058
    %1095 = vmatprep.subr.mxu0 0.0
    %1096 = vmatpush1.msra.mxu0 %v1059
    %1097 = vmatprep.subr.mxu0 0.0
    %1098 = vmatpush1.msra.mxu0 %v1060
    %1099 = vmatprep.subr.mxu0 0.0
    %1100 = vmatpush1.msra.mxu0 %v1061
    %1101 = vmatprep.subr.mxu0 0.0
    %1102 = vmatpush1.msra.mxu0 0.0
    %1103 = vmatprep.subr.mxu0 0.0
    %1104 = vmatpush1.msra.mxu0 0.0
    %1105 = vmatprep.subr.mxu0 0.0
    %1106 = vmatpush1.msra.mxu0 0.0
    %1107 = vmatprep.subr.mxu0 0.0
    %1108 = vmatpush1.msra.mxu0 0.0
    %1109 = vmatprep.subr.mxu0 0.0
    %1110 = vmatpush1.msra.mxu0 0.0
    %1111 = vmatprep.subr.mxu0 0.0
    %1112 = vmatpush1.msra.mxu0 0.0
    %1113 = vmatprep.subr.mxu0 0.0
    %1114 = vmatpush1.msra.mxu0 0.0
    %1115 = vmatprep.subr.mxu0 0.0
    %1116 = vmatpush1.msra.mxu0 0.0
    %1117 = vmatprep.subr.mxu0 0.0
    %1118 = vmatpush1.msra.mxu0 0.0
    %1119 = vmatprep.subr.mxu0 0.0
    %1120 = vmatpush1.msra.mxu0 0.0
    %1121 = vmatprep.subr.mxu0 0.0
    %1122 = vmatpush1.msra.mxu0 0.0
    %1123 = vmatprep.subr.mxu0 0.0
    %1124 = vmatpush1.msra.mxu0 0.0
    %1125 = vmatprep.subr.mxu0 0.0
    %1126 = vmatpush1.msra.mxu0 0.0
    %1127 = vmatprep.subr.mxu0 0.0
    %1128 = vmatpush1.msra.mxu0 0.0
    %1129 = vmatprep.subr.mxu0 0.0
    %1130 = vmatpush1.msra.mxu0 0.0
    %1131 = vmatprep.subr.mxu0 0.0
    %1132 = vmatpush1.msra.mxu0 0.0
    %1133 = vmatprep.mubr.f32.mxu0 0.0
    %1134 = vmatmul.mubr.f32.gmra.mrb[0].mxu0 %v918
    %v1135 = vpop.f32.mrb[0].mxu0
    %v1136 = vadd.f32 %v1067, %v1135
    %v1137 = vpop.f32.mrb[0].mxu0
    %1138 = vmatprep.mubr.f32.mxu0 0.0
    %1139 = vmatmul.mubr.f32.gmra.mrb[0].mxu0 %v919
    %v1140 = vpop.f32.mrb[0].mxu0
    %v1141 = vadd.f32 %v1067, %v1140
    %v1142 = vpop.f32.mrb[0].mxu0
    %1143 = vmatprep.mubr.f32.mxu0 0.0
    %1144 = vmatmul.mubr.f32.gmra.mrb[0].mxu0 %v920
    %v1145 = vpop.f32.mrb[0].mxu0
    %v1146 = vadd.f32 %v1067, %v1145
    %v1147 = vpop.f32.mrb[0].mxu0
    %1148 = vmatprep.mubr.f32.mxu0 0.0
    %1149 = vmatmul.mubr.f32.gmra.mrb[0].mxu0 %v921
    %v1150 = vpop.f32.mrb[0].mxu0
    %v1151 = vadd.f32 %v1067, %v1150
    %v1152 = vpop.f32.mrb[0].mxu0
    %1153 = vmatprep.mubr.f32.mxu0 0.0
    %1154 = vmatmul.mubr.f32.gmra.mrb[0].mxu0 %v922
    %v1155 = vpop.f32.mrb[0].mxu0
    %v1156 = vadd.f32 %v1067, %v1155
    %v1157 = vpop.f32.mrb[0].mxu0
    %1158 = vmatprep.mubr.f32.mxu0 0.0
    %1159 = vmatmul.mubr.f32.gmra.mrb[0].mxu0 %v923
    %v1160 = vpop.f32.mrb[0].mxu0
    %v1161 = vadd.f32 %v1067, %v1160
    %v1162 = vpop.f32.mrb[0].mxu0
    %1163 = vmatprep.mubr.f32.mxu0 0.0
    %1164 = vmatmul.mubr.f32.gmra.mrb[0].mxu0 %v924
    %v1165 = vpop.f32.mrb[0].mxu0
    %v1166 = vadd.f32 %v1067, %v1165
    %v1167 = vpop.f32.mrb[0].mxu0
    %1168 = vmatprep.mubr.f32.mxu0 0.0
    %1169 = vmatmul.mubr.f32.gmra.mrb[0].mxu0 %v925
    %v1170 = vpop.f32.mrb[0].mxu0
    %v1171 = vadd.f32 %v1067, %v1170
    %v1172 = vpop.f32.mrb[0].mxu0
    %1173 = vmatprep.mubr.f32.mxu0 0.0
    %1174 = vmatmul.mubr.f32.gmra.mrb[0].mxu0 %v926
    %v1175 = vpop.f32.mrb[0].mxu0
    %v1176 = vadd.f32 %v1067, %v1175
    %v1177 = vpop.f32.mrb[0].mxu0
    %1178 = vmatprep.mubr.f32.mxu0 0.0
    %1179 = vmatmul.mubr.f32.gmra.mrb[0].mxu0 %v927
    %v1180 = vpop.f32.mrb[0].mxu0
    %v1181 = vadd.f32 %v1067, %v1180
    %v1182 = vpop.f32.mrb[0].mxu0
    %1183 = vmatprep.mubr.f32.mxu0 0.0
    %1184 = vmatmul.mubr.f32.gmra.mrb[0].mxu0 %v928
    %v1185 = vpop.f32.mrb[0].mxu0
    %v1186 = vadd.f32 %v1067, %v1185
    %v1187 = vpop.f32.mrb[0].mxu0
    %1188 = vmatprep.mubr.f32.mxu0 0.0
    %1189 = vmatmul.mubr.f32.gmra.mrb[0].mxu0 %v929
    %v1190 = vpop.f32.mrb[0].mxu0
    %v1191 = vadd.f32 %v1067, %v1190
    %v1192 = vpop.f32.mrb[0].mxu0
    %1193 = vmatprep.mubr.f32.mxu0 0.0
    %1194 = vmatmul.mubr.f32.gmra.mrb[0].mxu0 %v930
    %v1195 = vpop.f32.mrb[0].mxu0
    %v1196 = vadd.f32 %v1067, %v1195
    %v1197 = vpop.f32.mrb[0].mxu0
    %1198 = vmatprep.mubr.f32.mxu0 0.0
    %1199 = vmatmul.mubr.f32.gmra.mrb[0].mxu0 %v931
    %v1200 = vpop.f32.mrb[0].mxu0
    %v1201 = vadd.f32 %v1067, %v1200
    %v1202 = vpop.f32.mrb[0].mxu0
    %1203 = vmatprep.mubr.f32.mxu0 0.0
    %1204 = vmatmul.mubr.f32.gmra.mrb[0].mxu0 %v932
    %v1205 = vpop.f32.mrb[0].mxu0
    %v1206 = vadd.f32 %v1067, %v1205
    %v1207 = vpop.f32.mrb[0].mxu0
    %1208 = vmatprep.mubr.f32.mxu0 0.0
    %1209 = vmatmul.mubr.f32.gmra.mrb[0].mxu0 %v933
    %v1210 = vpop.f32.mrb[0].mxu0
    %v1211 = vadd.f32 %v1067, %v1210
    %v1212 = vpop.f32.mrb[0].mxu0
    %1213 = vmatprep.mubr.f32.mxu0 0.0
    %1214 = vmatmul.mubr.f32.gmra.mrb[0].mxu0 %v934
    %v1215 = vpop.f32.mrb[0].mxu0
    %v1216 = vadd.f32 %v1067, %v1215
    %v1217 = vpop.f32.mrb[0].mxu0
    %1218 = vmatprep.mubr.f32.mxu0 0.0
    %1219 = vmatmul.mubr.f32.gmra.mrb[0].mxu0 %v935
    %v1220 = vpop.f32.mrb[0].mxu0
    %v1221 = vadd.f32 %v1067, %v1220
    %v1222 = vpop.f32.mrb[0].mxu0
    %1223 = vmatprep.mubr.f32.mxu0 0.0
    %1224 = vmatmul.mubr.f32.gmra.mrb[0].mxu0 %v936
    %v1225 = vpop.f32.mrb[0].mxu0
    %v1226 = vadd.f32 %v1067, %v1225
    %v1227 = vpop.f32.mrb[0].mxu0
    %1228 = vmatprep.mubr.f32.mxu0 0.0
    %1229 = vmatmul.mubr.f32.gmra.mrb[0].mxu0 %v937
    %v1230 = vpop.f32.mrb[0].mxu0
    %v1231 = vadd.f32 %v1067, %v1230
    %v1232 = vpop.f32.mrb[0].mxu0
    %1233 = vmatprep.mubr.f32.mxu0 0.0
    %1234 = vmatmul.mubr.f32.gmra.mrb[0].mxu0 %v938
    %v1235 = vpop.f32.mrb[0].mxu0
    %v1236 = vadd.f32 %v1067, %v1235
    %v1237 = vpop.f32.mrb[0].mxu0
    %1238 = vmatprep.mubr.f32.mxu0 0.0
    %1239 = vmatmul.mubr.f32.gmra.mrb[0].mxu0 %v939
    %v1240 = vpop.f32.mrb[0].mxu0
    %v1241 = vadd.f32 %v1067, %v1240
    %v1242 = vpop.f32.mrb[0].mxu0
    %1243 = vmatprep.mubr.f32.mxu0 0.0
    %1244 = vmatmul.mubr.f32.gmra.mrb[0].mxu0 %v940
    %v1245 = vpop.f32.mrb[0].mxu0
    %v1246 = vadd.f32 %v1067, %v1245
    %v1247 = vpop.f32.mrb[0].mxu0
    %1248 = vmatprep.mubr.f32.mxu0 0.0
    %1249 = vmatmul.mubr.f32.gmra.mrb[0].mxu0 %v941
    %v1250 = vpop.f32.mrb[0].mxu0
    %v1251 = vadd.f32 %v1067, %v1250
    %v1252 = vpop.f32.mrb[0].mxu0
    %1253 = vmatprep.mubr.f32.mxu0 0.0
    %1254 = vmatmul.mubr.f32.gmra.mrb[0].mxu0 %v942
    %v1255 = vpop.f32.mrb[0].mxu0
    %v1256 = vadd.f32 %v1067, %v1255
    %v1257 = vpop.f32.mrb[0].mxu0
    %1258 = vmatprep.mubr.f32.mxu0 0.0
    %1259 = vmatmul.mubr.f32.gmra.mrb[0].mxu0 %v943
    %v1260 = vpop.f32.mrb[0].mxu0
    %v1261 = vadd.f32 %v1067, %v1260
    %v1262 = vpop.f32.mrb[0].mxu0
    %1263 = vmatprep.mubr.f32.mxu0 0.0
    %1264 = vmatmul.mubr.f32.gmra.mrb[0].mxu0 %v944
    %v1265 = vpop.f32.mrb[0].mxu0
    %v1266 = vadd.f32 %v1067, %v1265
    %v1267 = vpop.f32.mrb[0].mxu0
    %1268 = vmatprep.mubr.f32.mxu0 0.0
    %1269 = vmatmul.mubr.f32.gmra.mrb[0].mxu0 %v945
    %v1270 = vpop.f32.mrb[0].mxu0
    %v1271 = vadd.f32 %v1067, %v1270
    %v1272 = vpop.f32.mrb[0].mxu0
    %1273 = vmatprep.mubr.f32.mxu0 0.0
    %1274 = vmatmul.mubr.f32.gmra.mrb[0].mxu0 %v946
    %v1275 = vpop.f32.mrb[0].mxu0
    %v1276 = vadd.f32 %v1067, %v1275
    %v1277 = vpop.f32.mrb[0].mxu0
    %1278 = vmatprep.mubr.f32.mxu0 0.0
    %1279 = vmatmul.mubr.f32.gmra.mrb[0].mxu0 %v947
    %v1280 = vpop.f32.mrb[0].mxu0
    %v1281 = vadd.f32 %v1067, %v1280
    %v1282 = vpop.f32.mrb[0].mxu0
    %1283 = vmatprep.mubr.f32.mxu0 0.0
    %1284 = vmatmul.mubr.f32.gmra.mrb[0].mxu0 %v948
    %v1285 = vpop.f32.mrb[0].mxu0
    %v1286 = vadd.f32 %v1067, %v1285
    %v1287 = vpop.f32.mrb[0].mxu0
    %1288 = vmatprep.mubr.f32.mxu0 0.0
    %1289 = vmatmul.mubr.f32.gmra.mrb[0].mxu0 %v949
    %v1290 = vpop.f32.mrb[0].mxu0
    %v1291 = vadd.f32 %v1067, %v1290
    %v1292 = vpop.f32.mrb[0].mxu0
    %1293 = vmatprep.mubr.f32.mxu0 0.0
    %1294 = vmatmul.mubr.f32.gmra.mrb[0].mxu0 %v950
    %v1295 = vpop.f32.mrb[0].mxu0
    %v1296 = vadd.f32 %v1067, %v1295
    %v1297 = vpop.f32.mrb[0].mxu0
    %1298 = vmatprep.mubr.f32.mxu0 0.0
    %1299 = vmatmul.mubr.f32.gmra.mrb[0].mxu0 %v951
    %v1300 = vpop.f32.mrb[0].mxu0
    %v1301 = vadd.f32 %v1067, %v1300
    %v1302 = vpop.f32.mrb[0].mxu0
    %1303 = vmatprep.mubr.f32.mxu0 0.0
    %1304 = vmatmul.mubr.f32.gmra.mrb[0].mxu0 %v952
    %v1305 = vpop.f32.mrb[0].mxu0
    %v1306 = vadd.f32 %v1067, %v1305
    %v1307 = vpop.f32.mrb[0].mxu0
    %1308 = vmatprep.mubr.f32.mxu0 0.0
    %1309 = vmatmul.mubr.f32.gmra.mrb[0].mxu0 %v953
    %v1310 = vpop.f32.mrb[0].mxu0
    %v1311 = vadd.f32 %v1067, %v1310
    %v1312 = vpop.f32.mrb[0].mxu0
    %1313 = vmatprep.mubr.f32.mxu0 0.0
    %1314 = vmatmul.mubr.f32.gmra.mrb[0].mxu0 %v954
    %v1315 = vpop.f32.mrb[0].mxu0
    %v1316 = vadd.f32 %v1067, %v1315
    %v1317 = vpop.f32.mrb[0].mxu0
    %1318 = vmatprep.mubr.f32.mxu0 0.0
    %1319 = vmatmul.mubr.f32.gmra.mrb[0].mxu0 %v955
    %v1320 = vpop.f32.mrb[0].mxu0
    %v1321 = vadd.f32 %v1067, %v1320
    %v1322 = vpop.f32.mrb[0].mxu0
    %1323 = vmatprep.mubr.f32.mxu0 0.0
    %1324 = vmatmul.mubr.f32.gmra.mrb[0].mxu0 %v956
    %v1325 = vpop.f32.mrb[0].mxu0
    %v1326 = vadd.f32 %v1067, %v1325
    %v1327 = vpop.f32.mrb[0].mxu0
    %1328 = vmatprep.mubr.f32.mxu0 0.0
    %1329 = vmatmul.mubr.f32.gmra.mrb[0].mxu0 %v957
    %v1330 = vpop.f32.mrb[0].mxu0
    %v1331 = vadd.f32 %v1067, %v1330
    %v1332 = vpop.f32.mrb[0].mxu0
    %1333 = vmatprep.mubr.f32.mxu0 0.0
    %1334 = vmatmul.mubr.f32.gmra.mrb[0].mxu0 %v958
    %v1335 = vpop.f32.mrb[0].mxu0
    %v1336 = vadd.f32 %v1067, %v1335
    %v1337 = vpop.f32.mrb[0].mxu0
    %1338 = vmatprep.mubr.f32.mxu0 0.0
    %1339 = vmatmul.mubr.f32.gmra.mrb[0].mxu0 %v959
    %v1340 = vpop.f32.mrb[0].mxu0
    %v1341 = vadd.f32 %v1067, %v1340
    %v1342 = vpop.f32.mrb[0].mxu0
    %1343 = vmatprep.mubr.f32.mxu0 0.0
    %1344 = vmatmul.mubr.f32.gmra.mrb[0].mxu0 %v960
    %v1345 = vpop.f32.mrb[0].mxu0
    %v1346 = vadd.f32 %v1067, %v1345
    %v1347 = vpop.f32.mrb[0].mxu0
    %1348 = vmatprep.mubr.f32.mxu0 0.0
    %1349 = vmatmul.mubr.f32.gmra.mrb[0].mxu0 %v961
    %v1350 = vpop.f32.mrb[0].mxu0
    %v1351 = vadd.f32 %v1067, %v1350
    %v1352 = vpop.f32.mrb[0].mxu0
    %1353 = vmatprep.mubr.f32.mxu0 0.0
    %1354 = vmatmul.mubr.f32.gmra.mrb[0].mxu0 %v962
    %v1355 = vpop.f32.mrb[0].mxu0
    %v1356 = vadd.f32 %v1067, %v1355
    %v1357 = vpop.f32.mrb[0].mxu0
    %1358 = vmatprep.mubr.f32.mxu0 0.0
    %1359 = vmatmul.mubr.f32.gmra.mrb[0].mxu0 %v963
    %v1360 = vpop.f32.mrb[0].mxu0
    %v1361 = vadd.f32 %v1067, %v1360
    %v1362 = vpop.f32.mrb[0].mxu0
    %1363 = vmatprep.mubr.f32.mxu0 0.0
    %1364 = vmatmul.mubr.f32.gmra.mrb[0].mxu0 %v964
    %v1365 = vpop.f32.mrb[0].mxu0
    %v1366 = vadd.f32 %v1067, %v1365
    %v1367 = vpop.f32.mrb[0].mxu0
    %1368 = vmatprep.mubr.f32.mxu0 0.0
    %1369 = vmatmul.mubr.f32.gmra.mrb[0].mxu0 %v965
    %v1370 = vpop.f32.mrb[0].mxu0
    %v1371 = vadd.f32 %v1067, %v1370
    %v1372 = vpop.f32.mrb[0].mxu0
    %1373 = vmatprep.mubr.f32.mxu0 0.0
    %1374 = vmatmul.mubr.f32.gmra.mrb[0].mxu0 %v966
    %v1375 = vpop.f32.mrb[0].mxu0
    %v1376 = vadd.f32 %v1067, %v1375
    %v1377 = vpop.f32.mrb[0].mxu0
    %1378 = vmatprep.mubr.f32.mxu0 0.0
    %1379 = vmatmul.mubr.f32.gmra.mrb[0].mxu0 %v967
    %v1380 = vpop.f32.mrb[0].mxu0
    %v1381 = vadd.f32 %v1067, %v1380
    %v1382 = vpop.f32.mrb[0].mxu0
    %1383 = vmatprep.mubr.f32.mxu0 0.0
    %1384 = vmatmul.mubr.f32.gmra.mrb[0].mxu0 %v968
    %v1385 = vpop.f32.mrb[0].mxu0
    %v1386 = vadd.f32 %v1067, %v1385
    %v1387 = vpop.f32.mrb[0].mxu0
    %1388 = vmatprep.mubr.f32.mxu0 0.0
    %1389 = vmatmul.mubr.f32.gmra.mrb[0].mxu0 %v969
    %v1390 = vpop.f32.mrb[0].mxu0
    %v1391 = vadd.f32 %v1067, %v1390
    %v1392 = vpop.f32.mrb[0].mxu0
    %1393 = vmatprep.mubr.f32.mxu0 0.0
    %1394 = vmatmul.mubr.f32.gmra.mrb[0].mxu0 %v970
    %v1395 = vpop.f32.mrb[0].mxu0
    %v1396 = vadd.f32 %v1067, %v1395
    %v1397 = vpop.f32.mrb[0].mxu0
    %1398 = vmatprep.mubr.f32.mxu0 0.0
    %1399 = vmatmul.mubr.f32.gmra.mrb[0].mxu0 %v971
    %v1400 = vpop.f32.mrb[0].mxu0
    %v1401 = vadd.f32 %v1067, %v1400
    %v1402 = vpop.f32.mrb[0].mxu0
    %1403 = vmatprep.mubr.f32.mxu0 0.0
    %1404 = vmatmul.mubr.f32.gmra.mrb[0].mxu0 %v972
    %v1405 = vpop.f32.mrb[0].mxu0
    %v1406 = vadd.f32 %v1067, %v1405
    %v1407 = vpop.f32.mrb[0].mxu0
    %1408 = vmatprep.mubr.f32.mxu0 0.0
    %1409 = vmatmul.mubr.f32.gmra.mrb[0].mxu0 %v973
    %v1410 = vpop.f32.mrb[0].mxu0
    %v1411 = vadd.f32 %v1067, %v1410
    %v1412 = vpop.f32.mrb[0].mxu0
    %1413 = vmatprep.mubr.f32.mxu0 0.0
    %1414 = vmatmul.mubr.f32.gmra.mrb[0].mxu0 %v974
    %v1415 = vpop.f32.mrb[0].mxu0
    %v1416 = vadd.f32 %v1067, %v1415
    %v1417 = vpop.f32.mrb[0].mxu0
    %1418 = vmatprep.mubr.f32.mxu0 0.0
    %1419 = vmatmul.mubr.f32.gmra.mrb[0].mxu0 %v975
    %v1420 = vpop.f32.mrb[0].mxu0
    %v1421 = vadd.f32 %v1067, %v1420
    %v1422 = vpop.f32.mrb[0].mxu0
    %1423 = vmatprep.mubr.f32.mxu0 0.0
    %1424 = vmatmul.mubr.f32.gmra.mrb[0].mxu0 %v976
    %v1425 = vpop.f32.mrb[0].mxu0
    %v1426 = vadd.f32 %v1067, %v1425
    %v1427 = vpop.f32.mrb[0].mxu0
    %1428 = vmatprep.mubr.f32.mxu0 0.0
    %1429 = vmatmul.mubr.f32.gmra.mrb[0].mxu0 %v977
    %v1430 = vpop.f32.mrb[0].mxu0
    %v1431 = vadd.f32 %v1067, %v1430
    %v1432 = vpop.f32.mrb[0].mxu0
    %1433 = vmatprep.mubr.f32.mxu0 0.0
    %1434 = vmatmul.mubr.f32.gmra.mrb[0].mxu0 %v978
    %v1435 = vpop.f32.mrb[0].mxu0
    %v1436 = vadd.f32 %v1067, %v1435
    %v1437 = vpop.f32.mrb[0].mxu0
    %1438 = vmatprep.mubr.f32.mxu0 0.0
    %1439 = vmatmul.mubr.f32.gmra.mrb[0].mxu0 %v979
    %v1440 = vpop.f32.mrb[0].mxu0
    %v1441 = vadd.f32 %v1067, %v1440
    %v1442 = vpop.f32.mrb[0].mxu0
    %1443 = vmatprep.mubr.f32.mxu0 0.0
    %1444 = vmatmul.mubr.f32.gmra.mrb[0].mxu0 %v980
    %v1445 = vpop.f32.mrb[0].mxu0
    %v1446 = vadd.f32 %v1067, %v1445
    %v1447 = vpop.f32.mrb[0].mxu0
    %1448 = vmatprep.mubr.f32.mxu0 0.0
    %1449 = vmatmul.mubr.f32.gmra.mrb[0].mxu0 %v981
    %v1450 = vpop.f32.mrb[0].mxu0
    %v1451 = vadd.f32 %v1067, %v1450
    %v1452 = vpop.f32.mrb[0].mxu0
    %1453 = vmatprep.mubr.f32.mxu0 0.0
    %1454 = vmatmul.mubr.f32.gmra.mrb[0].mxu0 %v982
    %v1455 = vpop.f32.mrb[0].mxu0
    %v1456 = vadd.f32 %v1067, %v1455
    %v1457 = vpop.f32.mrb[0].mxu0
    %1458 = vmatprep.mubr.f32.mxu0 0.0
    %1459 = vmatmul.mubr.f32.gmra.mrb[0].mxu0 %v983
    %v1460 = vpop.f32.mrb[0].mxu0
    %v1461 = vadd.f32 %v1067, %v1460
    %v1462 = vpop.f32.mrb[0].mxu0
    %1463 = vmatprep.mubr.f32.mxu0 0.0
    %1464 = vmatmul.mubr.f32.gmra.mrb[0].mxu0 %v984
    %v1465 = vpop.f32.mrb[0].mxu0
    %v1466 = vadd.f32 %v1067, %v1465
    %v1467 = vpop.f32.mrb[0].mxu0
    %1468 = vmatprep.mubr.f32.mxu0 0.0
    %1469 = vmatmul.mubr.f32.gmra.mrb[0].mxu0 %v985
    %v1470 = vpop.f32.mrb[0].mxu0
    %v1471 = vadd.f32 %v1067, %v1470
    %v1472 = vpop.f32.mrb[0].mxu0
    %1473 = vmatprep.mubr.f32.mxu0 0.0
    %1474 = vmatmul.mubr.f32.gmra.mrb[0].mxu0 %v986
    %v1475 = vpop.f32.mrb[0].mxu0
    %v1476 = vadd.f32 %v1067, %v1475
    %v1477 = vpop.f32.mrb[0].mxu0
    %1478 = vmatprep.mubr.f32.mxu0 0.0
    %1479 = vmatmul.mubr.f32.gmra.mrb[0].mxu0 %v987
    %v1480 = vpop.f32.mrb[0].mxu0
    %v1481 = vadd.f32 %v1067, %v1480
    %v1482 = vpop.f32.mrb[0].mxu0
    %1483 = vmatprep.mubr.f32.mxu0 0.0
    %1484 = vmatmul.mubr.f32.gmra.mrb[0].mxu0 %v988
    %v1485 = vpop.f32.mrb[0].mxu0
    %v1486 = vadd.f32 %v1067, %v1485
    %v1487 = vpop.f32.mrb[0].mxu0
    %1488 = vmatprep.mubr.f32.mxu0 0.0
    %1489 = vmatmul.mubr.f32.gmra.mrb[0].mxu0 %v989
    %v1490 = vpop.f32.mrb[0].mxu0
    %v1491 = vadd.f32 %v1067, %v1490
    %v1492 = vpop.f32.mrb[0].mxu0
    %1493 = vmatprep.mubr.f32.mxu0 0.0
    %1494 = vmatmul.mubr.f32.gmra.mrb[0].mxu0 %v990
    %v1495 = vpop.f32.mrb[0].mxu0
    %v1496 = vadd.f32 %v1067, %v1495
    %v1497 = vpop.f32.mrb[0].mxu0
    %1498 = vmatprep.mubr.f32.mxu0 0.0
    %1499 = vmatmul.mubr.f32.gmra.mrb[0].mxu0 %v991
    %v1500 = vpop.f32.mrb[0].mxu0
    %v1501 = vadd.f32 %v1067, %v1500
    %v1502 = vpop.f32.mrb[0].mxu0
    %1503 = vmatprep.mubr.f32.mxu0 0.0
    %1504 = vmatmul.mubr.f32.gmra.mrb[0].mxu0 %v992
    %v1505 = vpop.f32.mrb[0].mxu0
    %v1506 = vadd.f32 %v1067, %v1505
    %v1507 = vpop.f32.mrb[0].mxu0
    %1508 = vmatprep.mubr.f32.mxu0 0.0
    %1509 = vmatmul.mubr.f32.gmra.mrb[0].mxu0 %v993
    %v1510 = vpop.f32.mrb[0].mxu0
    %v1511 = vadd.f32 %v1067, %v1510
    %v1512 = vpop.f32.mrb[0].mxu0
    %1513 = vmatprep.mubr.f32.mxu0 0.0
    %1514 = vmatmul.mubr.f32.gmra.mrb[0].mxu0 %v994
    %v1515 = vpop.f32.mrb[0].mxu0
    %v1516 = vadd.f32 %v1067, %v1515
    %v1517 = vpop.f32.mrb[0].mxu0
    %1518 = vmatprep.mubr.f32.mxu0 0.0
    %1519 = vmatmul.mubr.f32.gmra.mrb[0].mxu0 %v995
    %v1520 = vpop.f32.mrb[0].mxu0
    %v1521 = vadd.f32 %v1067, %v1520
    %v1522 = vpop.f32.mrb[0].mxu0
    %1523 = vmatprep.mubr.f32.mxu0 0.0
    %1524 = vmatmul.mubr.f32.gmra.mrb[0].mxu0 %v996
    %v1525 = vpop.f32.mrb[0].mxu0
    %v1526 = vadd.f32 %v1067, %v1525
    %v1527 = vpop.f32.mrb[0].mxu0
    %1528 = vmatprep.mubr.f32.mxu0 0.0
    %1529 = vmatmul.mubr.f32.gmra.mrb[0].mxu0 %v997
    %v1530 = vpop.f32.mrb[0].mxu0
    %v1531 = vadd.f32 %v1067, %v1530
    %v1532 = vpop.f32.mrb[0].mxu0
    %1533 = vmatprep.mubr.f32.mxu0 0.0
    %1534 = vmatmul.mubr.f32.gmra.mrb[0].mxu0 %v998
    %v1535 = vpop.f32.mrb[0].mxu0
    %v1536 = vadd.f32 %v1067, %v1535
    %v1537 = vpop.f32.mrb[0].mxu0
    %1538 = vmatprep.mubr.f32.mxu0 0.0
    %1539 = vmatmul.mubr.f32.gmra.mrb[0].mxu0 %v999
    %v1540 = vpop.f32.mrb[0].mxu0
    %v1541 = vadd.f32 %v1067, %v1540
    %v1542 = vpop.f32.mrb[0].mxu0
    %1543 = vmatprep.mubr.f32.mxu0 0.0
    %1544 = vmatmul.mubr.f32.gmra.mrb[0].mxu0 %v1000
    %v1545 = vpop.f32.mrb[0].mxu0
    %v1546 = vadd.f32 %v1067, %v1545
    %v1547 = vpop.f32.mrb[0].mxu0
    %1548 = vmatprep.mubr.f32.mxu0 0.0
    %1549 = vmatmul.mubr.f32.gmra.mrb[0].mxu0 %v1001
    %v1550 = vpop.f32.mrb[0].mxu0
    %v1551 = vadd.f32 %v1067, %v1550
    %v1552 = vpop.f32.mrb[0].mxu0
    %1553 = vmatprep.mubr.f32.mxu0 0.0
    %1554 = vmatmul.mubr.f32.gmra.mrb[0].mxu0 %v1002
    %v1555 = vpop.f32.mrb[0].mxu0
    %v1556 = vadd.f32 %v1067, %v1555
    %v1557 = vpop.f32.mrb[0].mxu0
    %1558 = vmatprep.mubr.f32.mxu0 0.0
    %1559 = vmatmul.mubr.f32.gmra.mrb[0].mxu0 %v1003
    %v1560 = vpop.f32.mrb[0].mxu0
    %v1561 = vadd.f32 %v1067, %v1560
    %v1562 = vpop.f32.mrb[0].mxu0
    %1563 = vmatprep.mubr.f32.mxu0 0.0
    %1564 = vmatmul.mubr.f32.gmra.mrb[0].mxu0 %v1004
    %v1565 = vpop.f32.mrb[0].mxu0
    %v1566 = vadd.f32 %v1067, %v1565
    %v1567 = vpop.f32.mrb[0].mxu0
    %1568 = vmatprep.mubr.f32.mxu0 0.0
    %1569 = vmatmul.mubr.f32.gmra.mrb[0].mxu0 %v1005
    %v1570 = vpop.f32.mrb[0].mxu0
    %v1571 = vadd.f32 %v1067, %v1570
    %v1572 = vpop.f32.mrb[0].mxu0
    %1573 = vmatprep.mubr.f32.mxu0 0.0
    %1574 = vmatmul.mubr.f32.gmra.mrb[0].mxu0 %v1006
    %v1575 = vpop.f32.mrb[0].mxu0
    %v1576 = vadd.f32 %v1067, %v1575
    %v1577 = vpop.f32.mrb[0].mxu0
    %1578 = vmatprep.mubr.f32.mxu0 0.0
    %1579 = vmatmul.mubr.f32.gmra.mrb[0].mxu0 %v1007
    %v1580 = vpop.f32.mrb[0].mxu0
    %v1581 = vadd.f32 %v1067, %v1580
    %v1582 = vpop.f32.mrb[0].mxu0
    %1583 = vmatprep.mubr.f32.mxu0 0.0
    %1584 = vmatmul.mubr.f32.gmra.mrb[0].mxu0 %v1008
    %v1585 = vpop.f32.mrb[0].mxu0
    %v1586 = vadd.f32 %v1067, %v1585
    %v1587 = vpop.f32.mrb[0].mxu0
    %1588 = vmatprep.mubr.f32.mxu0 0.0
    %1589 = vmatmul.mubr.f32.gmra.mrb[0].mxu0 %v1009
    %v1590 = vpop.f32.mrb[0].mxu0
    %v1591 = vadd.f32 %v1067, %v1590
    %v1592 = vpop.f32.mrb[0].mxu0
    %1593 = vmatprep.mubr.f32.mxu0 0.0
    %1594 = vmatmul.mubr.f32.gmra.mrb[0].mxu0 %v1010
    %v1595 = vpop.f32.mrb[0].mxu0
    %v1596 = vadd.f32 %v1067, %v1595
    %v1597 = vpop.f32.mrb[0].mxu0
    %1598 = vmatprep.mubr.f32.mxu0 0.0
    %1599 = vmatmul.mubr.f32.gmra.mrb[0].mxu0 %v1011
    %v1600 = vpop.f32.mrb[0].mxu0
    %v1601 = vadd.f32 %v1067, %v1600
    %v1602 = vpop.f32.mrb[0].mxu0
    %1603 = vmatprep.mubr.f32.mxu0 0.0
    %1604 = vmatmul.mubr.f32.gmra.mrb[0].mxu0 %v1012
    %v1605 = vpop.f32.mrb[0].mxu0
    %v1606 = vadd.f32 %v1067, %v1605
    %v1607 = vpop.f32.mrb[0].mxu0
    %1608 = vmatprep.mubr.f32.mxu0 0.0
    %1609 = vmatmul.mubr.f32.gmra.mrb[0].mxu0 %v1013
    %v1610 = vpop.f32.mrb[0].mxu0
    %v1611 = vadd.f32 %v1067, %v1610
    %v1612 = vpop.f32.mrb[0].mxu0
    %1613 = vmatprep.mubr.f32.mxu0 0.0
    %1614 = vmatmul.mubr.f32.gmra.mrb[0].mxu0 %v1014
    %v1615 = vpop.f32.mrb[0].mxu0
    %v1616 = vadd.f32 %v1067, %v1615
    %v1617 = vpop.f32.mrb[0].mxu0
    %1618 = vmatprep.mubr.f32.mxu0 0.0
    %1619 = vmatmul.mubr.f32.gmra.mrb[0].mxu0 %v1015
    %v1620 = vpop.f32.mrb[0].mxu0
    %v1621 = vadd.f32 %v1067, %v1620
    %v1622 = vpop.f32.mrb[0].mxu0
    %1623 = vmatprep.mubr.f32.mxu0 0.0
    %1624 = vmatmul.mubr.f32.gmra.mrb[0].mxu0 %v1016
    %v1625 = vpop.f32.mrb[0].mxu0
    %v1626 = vadd.f32 %v1067, %v1625
    %v1627 = vpop.f32.mrb[0].mxu0
    %1628 = vmatprep.mubr.f32.mxu0 0.0
    %1629 = vmatmul.mubr.f32.gmra.mrb[0].mxu0 %v1017
    %v1630 = vpop.f32.mrb[0].mxu0
    %v1631 = vadd.f32 %v1067, %v1630
    %v1632 = vpop.f32.mrb[0].mxu0
    %1633 = vmatprep.mubr.f32.mxu0 0.0
    %1634 = vmatmul.mubr.f32.gmra.mrb[0].mxu0 %v1018
    %v1635 = vpop.f32.mrb[0].mxu0
    %v1636 = vadd.f32 %v1067, %v1635
    %v1637 = vpop.f32.mrb[0].mxu0
    %1638 = vmatprep.mubr.f32.mxu0 0.0
    %1639 = vmatmul.mubr.f32.gmra.mrb[0].mxu0 %v1019
    %v1640 = vpop.f32.mrb[0].mxu0
    %v1641 = vadd.f32 %v1067, %v1640
    %v1642 = vpop.f32.mrb[0].mxu0
    %1643 = vmatprep.mubr.f32.mxu0 0.0
    %1644 = vmatmul.mubr.f32.gmra.mrb[0].mxu0 %v1020
    %v1645 = vpop.f32.mrb[0].mxu0
    %v1646 = vadd.f32 %v1067, %v1645
    %v1647 = vpop.f32.mrb[0].mxu0
    %1648 = vmatprep.mubr.f32.mxu0 0.0
    %1649 = vmatmul.mubr.f32.gmra.mrb[0].mxu0 %v1021
    %v1650 = vpop.f32.mrb[0].mxu0
    %v1651 = vadd.f32 %v1067, %v1650
    %v1652 = vpop.f32.mrb[0].mxu0
    %1653 = vmatprep.mubr.f32.mxu0 0.0
    %1654 = vmatmul.mubr.f32.gmra.mrb[0].mxu0 %v1022
    %v1655 = vpop.f32.mrb[0].mxu0
    %v1656 = vadd.f32 %v1067, %v1655
    %v1657 = vpop.f32.mrb[0].mxu0
    %1658 = vmatprep.mubr.f32.mxu0 0.0
    %1659 = vmatmul.mubr.f32.gmra.mrb[0].mxu0 %v1023
    %v1660 = vpop.f32.mrb[0].mxu0
    %v1661 = vadd.f32 %v1067, %v1660
    %v1662 = vpop.f32.mrb[0].mxu0
    %1663 = vmatprep.mubr.f32.mxu0 0.0
    %1664 = vmatmul.mubr.f32.gmra.mrb[0].mxu0 %v1024
    %v1665 = vpop.f32.mrb[0].mxu0
    %v1666 = vadd.f32 %v1067, %v1665
    %v1667 = vpop.f32.mrb[0].mxu0
    %1668 = vmatprep.mubr.f32.mxu0 0.0
    %1669 = vmatmul.mubr.f32.gmra.mrb[0].mxu0 %v1025
    %v1670 = vpop.f32.mrb[0].mxu0
    %v1671 = vadd.f32 %v1067, %v1670
    %v1672 = vpop.f32.mrb[0].mxu0
    %1673 = vmatprep.mubr.f32.mxu0 0.0
    %1674 = vmatmul.mubr.f32.gmra.mrb[0].mxu0 %v1026
    %v1675 = vpop.f32.mrb[0].mxu0
    %v1676 = vadd.f32 %v1067, %v1675
    %v1677 = vpop.f32.mrb[0].mxu0
    %1678 = vmatprep.mubr.f32.mxu0 0.0
    %1679 = vmatmul.mubr.f32.gmra.mrb[0].mxu0 %v1027
    %v1680 = vpop.f32.mrb[0].mxu0
    %v1681 = vadd.f32 %v1067, %v1680
    %v1682 = vpop.f32.mrb[0].mxu0
    %1683 = vmatprep.mubr.f32.mxu0 0.0
    %1684 = vmatmul.mubr.f32.gmra.mrb[0].mxu0 %v1028
    %v1685 = vpop.f32.mrb[0].mxu0
    %v1686 = vadd.f32 %v1067, %v1685
    %v1687 = vpop.f32.mrb[0].mxu0
    %1688 = vmatprep.mubr.f32.mxu0 0.0
    %1689 = vmatmul.mubr.f32.gmra.mrb[0].mxu0 %v1029
    %v1690 = vpop.f32.mrb[0].mxu0
    %v1691 = vadd.f32 %v1067, %v1690
    %v1692 = vpop.f32.mrb[0].mxu0
    %1693 = vmatprep.mubr.f32.mxu0 0.0
    %1694 = vmatmul.mubr.f32.gmra.mrb[0].mxu0 %v1030
    %v1695 = vpop.f32.mrb[0].mxu0
    %v1696 = vadd.f32 %v1067, %v1695
    %v1697 = vpop.f32.mrb[0].mxu0
    %1698 = vmatprep.mubr.f32.mxu0 0.0
    %1699 = vmatmul.mubr.f32.gmra.mrb[0].mxu0 %v1031
    %v1700 = vpop.f32.mrb[0].mxu0
    %v1701 = vadd.f32 %v1067, %v1700
    %v1702 = vpop.f32.mrb[0].mxu0
    %1703 = vmatprep.mubr.f32.mxu0 0.0
    %1704 = vmatmul.mubr.f32.gmra.mrb[0].mxu0 %v1032
    %v1705 = vpop.f32.mrb[0].mxu0
    %v1706 = vadd.f32 %v1067, %v1705
    %v1707 = vpop.f32.mrb[0].mxu0
    %1708 = vmatprep.mubr.f32.mxu0 0.0
    %1709 = vmatmul.mubr.f32.gmra.mrb[0].mxu0 %v1033
    %v1710 = vpop.f32.mrb[0].mxu0
    %v1711 = vadd.f32 %v1067, %v1710
    %v1712 = vpop.f32.mrb[0].mxu0
    %1713 = vmatprep.mubr.f32.mxu0 0.0
    %1714 = vmatmul.mubr.f32.gmra.mrb[0].mxu0 %v1034
    %v1715 = vpop.f32.mrb[0].mxu0
    %v1716 = vadd.f32 %v1067, %v1715
    %v1717 = vpop.f32.mrb[0].mxu0
    %1718 = vmatprep.mubr.f32.mxu0 0.0
    %1719 = vmatmul.mubr.f32.gmra.mrb[0].mxu0 %v1035
    %v1720 = vpop.f32.mrb[0].mxu0
    %v1721 = vadd.f32 %v1067, %v1720
    %v1722 = vpop.f32.mrb[0].mxu0
    %1723 = vmatprep.mubr.f32.mxu0 0.0
    %1724 = vmatmul.mubr.f32.gmra.mrb[0].mxu0 %v1036
    %v1725 = vpop.f32.mrb[0].mxu0
    %v1726 = vadd.f32 %v1067, %v1725
    %v1727 = vpop.f32.mrb[0].mxu0
    %1728 = vmatprep.mubr.f32.mxu0 0.0
    %1729 = vmatmul.mubr.f32.gmra.mrb[0].mxu0 %v1037
    %v1730 = vpop.f32.mrb[0].mxu0
    %v1731 = vadd.f32 %v1067, %v1730
    %v1732 = vpop.f32.mrb[0].mxu0
    %1733 = vmatprep.mubr.f32.mxu0 0.0
    %1734 = vmatmul.mubr.f32.gmra.mrb[0].mxu0 %v1038
    %v1735 = vpop.f32.mrb[0].mxu0
    %v1736 = vadd.f32 %v1067, %v1735
    %v1737 = vpop.f32.mrb[0].mxu0
    %1738 = vmatprep.mubr.f32.mxu0 0.0
    %1739 = vmatmul.mubr.f32.gmra.mrb[0].mxu0 %v1039
    %v1740 = vpop.f32.mrb[0].mxu0
    %v1741 = vadd.f32 %v1067, %v1740
    %v1742 = vpop.f32.mrb[0].mxu0
    %1743 = vmatprep.mubr.f32.mxu0 0.0
    %1744 = vmatmul.mubr.f32.gmra.mrb[0].mxu0 %v1040
    %v1745 = vpop.f32.mrb[0].mxu0
    %v1746 = vadd.f32 %v1067, %v1745
    %v1747 = vpop.f32.mrb[0].mxu0
    %1748 = vmatprep.mubr.f32.mxu0 0.0
    %1749 = vmatmul.mubr.f32.gmra.mrb[0].mxu0 %v1041
    %v1750 = vpop.f32.mrb[0].mxu0
    %v1751 = vadd.f32 %v1067, %v1750
    %v1752 = vpop.f32.mrb[0].mxu0
    %1753 = vmatprep.mubr.f32.mxu0 0.0
    %1754 = vmatmul.mubr.f32.gmra.mrb[0].mxu0 %v1042
    %v1755 = vpop.f32.mrb[0].mxu0
    %v1756 = vadd.f32 %v1067, %v1755
    %v1757 = vpop.f32.mrb[0].mxu0
    %1758 = vmatprep.mubr.f32.mxu0 0.0
    %1759 = vmatmul.mubr.f32.gmra.mrb[0].mxu0 %v1043
    %v1760 = vpop.f32.mrb[0].mxu0
    %v1761 = vadd.f32 %v1067, %v1760
    %v1762 = vpop.f32.mrb[0].mxu0
    %1763 = vmatprep.mubr.f32.mxu0 0.0
    %1764 = vmatmul.mubr.f32.gmra.mrb[0].mxu0 %v1044
    %v1765 = vpop.f32.mrb[0].mxu0
    %v1766 = vadd.f32 %v1067, %v1765
    %v1767 = vpop.f32.mrb[0].mxu0
    %1768 = vmatprep.mubr.f32.mxu0 0.0
    %1769 = vmatmul.mubr.f32.gmra.mrb[0].mxu0 %v1045
    %v1770 = vpop.f32.mrb[0].mxu0
    %v1771 = vadd.f32 %v1067, %v1770
    %v1772 = vpop.f32.mrb[0].mxu0
    %1773 = vdwg.mxu0
    %v1774 = vmax.f32 %v1136, 1e-06
    %v1775 = vmax.f32 %v1141, 1e-06
    %v1776 = vmax.f32 %v1146, 1e-06
    %v1777 = vmax.f32 %v1151, 1e-06
    %v1778 = vmax.f32 %v1156, 1e-06
    %v1779 = vmax.f32 %v1161, 1e-06
    %v1780 = vmax.f32 %v1166, 1e-06
    %v1781 = vmax.f32 %v1171, 1e-06
    %v1782 = vmax.f32 %v1176, 1e-06
    %v1783 = vmax.f32 %v1181, 1e-06
    %v1784 = vmax.f32 %v1186, 1e-06
    %v1785 = vmax.f32 %v1191, 1e-06
    %v1786 = vmax.f32 %v1196, 1e-06
    %v1787 = vmax.f32 %v1201, 1e-06
    %v1788 = vmax.f32 %v1206, 1e-06
    %v1789 = vmax.f32 %v1211, 1e-06
    %v1790 = vmax.f32 %v1216, 1e-06
    %v1791 = vmax.f32 %v1221, 1e-06
    %v1792 = vmax.f32 %v1226, 1e-06
    %v1793 = vmax.f32 %v1231, 1e-06
    %v1794 = vmax.f32 %v1236, 1e-06
    %v1795 = vmax.f32 %v1241, 1e-06
    %v1796 = vmax.f32 %v1246, 1e-06
    %v1797 = vmax.f32 %v1251, 1e-06
    %v1798 = vmax.f32 %v1256, 1e-06
    %v1799 = vmax.f32 %v1261, 1e-06
    %v1800 = vmax.f32 %v1266, 1e-06
    %v1801 = vmax.f32 %v1271, 1e-06
    %v1802 = vmax.f32 %v1276, 1e-06
    %v1803 = vmax.f32 %v1281, 1e-06
    %v1804 = vmax.f32 %v1286, 1e-06
    %v1805 = vmax.f32 %v1291, 1e-06
    %v1806 = vmax.f32 %v1296, 1e-06
    %v1807 = vmax.f32 %v1301, 1e-06
    %v1808 = vmax.f32 %v1306, 1e-06
    %v1809 = vmax.f32 %v1311, 1e-06
    %v1810 = vmax.f32 %v1316, 1e-06
    %v1811 = vmax.f32 %v1321, 1e-06
    %v1812 = vmax.f32 %v1326, 1e-06
    %v1813 = vmax.f32 %v1331, 1e-06
    %v1814 = vmax.f32 %v1336, 1e-06
    %v1815 = vmax.f32 %v1341, 1e-06
    %v1816 = vmax.f32 %v1346, 1e-06
    %v1817 = vmax.f32 %v1351, 1e-06
    %v1818 = vmax.f32 %v1356, 1e-06
    %v1819 = vmax.f32 %v1361, 1e-06
    %v1820 = vmax.f32 %v1366, 1e-06
    %v1821 = vmax.f32 %v1371, 1e-06
    %v1822 = vmax.f32 %v1376, 1e-06
    %v1823 = vmax.f32 %v1381, 1e-06
    %v1824 = vmax.f32 %v1386, 1e-06
    %v1825 = vmax.f32 %v1391, 1e-06
    %v1826 = vmax.f32 %v1396, 1e-06
    %v1827 = vmax.f32 %v1401, 1e-06
    %v1828 = vmax.f32 %v1406, 1e-06
    %v1829 = vmax.f32 %v1411, 1e-06
    %v1830 = vmax.f32 %v1416, 1e-06
    %v1831 = vmax.f32 %v1421, 1e-06
    %v1832 = vmax.f32 %v1426, 1e-06
    %v1833 = vmax.f32 %v1431, 1e-06
    %v1834 = vmax.f32 %v1436, 1e-06
    %v1835 = vmax.f32 %v1441, 1e-06
    %v1836 = vmax.f32 %v1446, 1e-06
    %v1837 = vmax.f32 %v1451, 1e-06
    %v1838 = vmax.f32 %v1456, 1e-06
    %v1839 = vmax.f32 %v1461, 1e-06
    %v1840 = vmax.f32 %v1466, 1e-06
    %v1841 = vmax.f32 %v1471, 1e-06
    %v1842 = vmax.f32 %v1476, 1e-06
    %v1843 = vmax.f32 %v1481, 1e-06
    %v1844 = vmax.f32 %v1486, 1e-06
    %v1845 = vmax.f32 %v1491, 1e-06
    %v1846 = vmax.f32 %v1496, 1e-06
    %v1847 = vmax.f32 %v1501, 1e-06
    %v1848 = vmax.f32 %v1506, 1e-06
    %v1849 = vmax.f32 %v1511, 1e-06
    %v1850 = vmax.f32 %v1516, 1e-06
    %v1851 = vmax.f32 %v1521, 1e-06
    %v1852 = vmax.f32 %v1526, 1e-06
    %v1853 = vmax.f32 %v1531, 1e-06
    %v1854 = vmax.f32 %v1536, 1e-06
    %v1855 = vmax.f32 %v1541, 1e-06
    %v1856 = vmax.f32 %v1546, 1e-06
    %v1857 = vmax.f32 %v1551, 1e-06
    %v1858 = vmax.f32 %v1556, 1e-06
    %v1859 = vmax.f32 %v1561, 1e-06
    %v1860 = vmax.f32 %v1566, 1e-06
    %v1861 = vmax.f32 %v1571, 1e-06
    %v1862 = vmax.f32 %v1576, 1e-06
    %v1863 = vmax.f32 %v1581, 1e-06
    %v1864 = vmax.f32 %v1586, 1e-06
    %v1865 = vmax.f32 %v1591, 1e-06
    %v1866 = vmax.f32 %v1596, 1e-06
    %v1867 = vmax.f32 %v1601, 1e-06
    %v1868 = vmax.f32 %v1606, 1e-06
    %v1869 = vmax.f32 %v1611, 1e-06
    %v1870 = vmax.f32 %v1616, 1e-06
    %v1871 = vmax.f32 %v1621, 1e-06
    %v1872 = vmax.f32 %v1626, 1e-06
    %v1873 = vmax.f32 %v1631, 1e-06
    %v1874 = vmax.f32 %v1636, 1e-06
    %v1875 = vmax.f32 %v1641, 1e-06
    %v1876 = vmax.f32 %v1646, 1e-06
    %v1877 = vmax.f32 %v1651, 1e-06
    %v1878 = vmax.f32 %v1656, 1e-06
    %v1879 = vmax.f32 %v1661, 1e-06
    %v1880 = vmax.f32 %v1666, 1e-06
    %v1881 = vmax.f32 %v1671, 1e-06
    %v1882 = vmax.f32 %v1676, 1e-06
    %v1883 = vmax.f32 %v1681, 1e-06
    %v1884 = vmax.f32 %v1686, 1e-06
    %v1885 = vmax.f32 %v1691, 1e-06
    %v1886 = vmax.f32 %v1696, 1e-06
    %v1887 = vmax.f32 %v1701, 1e-06
    %v1888 = vmax.f32 %v1706, 1e-06
    %v1889 = vmax.f32 %v1711, 1e-06
    %v1890 = vmax.f32 %v1716, 1e-06
    %v1891 = vmax.f32 %v1721, 1e-06
    %v1892 = vmax.f32 %v1726, 1e-06
    %v1893 = vmax.f32 %v1731, 1e-06
    %v1894 = vmax.f32 %v1736, 1e-06
    %v1895 = vmax.f32 %v1741, 1e-06
    %v1896 = vmax.f32 %v1746, 1e-06
    %v1897 = vmax.f32 %v1751, 1e-06
    %v1898 = vmax.f32 %v1756, 1e-06
    %v1899 = vmax.f32 %v1761, 1e-06
    %v1900 = vmax.f32 %v1766, 1e-06
    %v1901 = vmax.f32 %v1771, 1e-06
    %v1902 = vmul.f32 %v1774, %v1774
    %v1903 = vmul.f32 %v1775, %v1775
    %v1904 = vmul.f32 %v1776, %v1776
    %v1905 = vmul.f32 %v1777, %v1777
    %v1906 = vmul.f32 %v1778, %v1778
    %v1907 = vmul.f32 %v1779, %v1779
    %v1908 = vmul.f32 %v1780, %v1780
    %v1909 = vmul.f32 %v1781, %v1781
    %v1910 = vmul.f32 %v1782, %v1782
    %v1911 = vmul.f32 %v1783, %v1783
    %v1912 = vmul.f32 %v1784, %v1784
    %v1913 = vmul.f32 %v1785, %v1785
    %v1914 = vmul.f32 %v1786, %v1786
    %v1915 = vmul.f32 %v1787, %v1787
    %v1916 = vmul.f32 %v1788, %v1788
    %v1917 = vmul.f32 %v1789, %v1789
    %v1918 = vmul.f32 %v1790, %v1790
    %v1919 = vmul.f32 %v1791, %v1791
    %v1920 = vmul.f32 %v1792, %v1792
    %v1921 = vmul.f32 %v1793, %v1793
    %v1922 = vmul.f32 %v1794, %v1794
    %v1923 = vmul.f32 %v1795, %v1795
    %v1924 = vmul.f32 %v1796, %v1796
    %v1925 = vmul.f32 %v1797, %v1797
    %v1926 = vmul.f32 %v1798, %v1798
    %v1927 = vmul.f32 %v1799, %v1799
    %v1928 = vmul.f32 %v1800, %v1800
    %v1929 = vmul.f32 %v1801, %v1801
    %v1930 = vmul.f32 %v1802, %v1802
    %v1931 = vmul.f32 %v1803, %v1803
    %v1932 = vmul.f32 %v1804, %v1804
    %v1933 = vmul.f32 %v1805, %v1805
    %v1934 = vmul.f32 %v1806, %v1806
    %v1935 = vmul.f32 %v1807, %v1807
    %v1936 = vmul.f32 %v1808, %v1808
    %v1937 = vmul.f32 %v1809, %v1809
    %v1938 = vmul.f32 %v1810, %v1810
    %v1939 = vmul.f32 %v1811, %v1811
    %v1940 = vmul.f32 %v1812, %v1812
    %v1941 = vmul.f32 %v1813, %v1813
    %v1942 = vmul.f32 %v1814, %v1814
    %v1943 = vmul.f32 %v1815, %v1815
    %v1944 = vmul.f32 %v1816, %v1816
    %v1945 = vmul.f32 %v1817, %v1817
    %v1946 = vmul.f32 %v1818, %v1818
    %v1947 = vmul.f32 %v1819, %v1819
    %v1948 = vmul.f32 %v1820, %v1820
    %v1949 = vmul.f32 %v1821, %v1821
    %v1950 = vmul.f32 %v1822, %v1822
    %v1951 = vmul.f32 %v1823, %v1823
    %v1952 = vmul.f32 %v1824, %v1824
    %v1953 = vmul.f32 %v1825, %v1825
    %v1954 = vmul.f32 %v1826, %v1826
    %v1955 = vmul.f32 %v1827, %v1827
    %v1956 = vmul.f32 %v1828, %v1828
    %v1957 = vmul.f32 %v1829, %v1829
    %v1958 = vmul.f32 %v1830, %v1830
    %v1959 = vmul.f32 %v1831, %v1831
    %v1960 = vmul.f32 %v1832, %v1832
    %v1961 = vmul.f32 %v1833, %v1833
    %v1962 = vmul.f32 %v1834, %v1834
    %v1963 = vmul.f32 %v1835, %v1835
    %v1964 = vmul.f32 %v1836, %v1836
    %v1965 = vmul.f32 %v1837, %v1837
    %v1966 = vmul.f32 %v1838, %v1838
    %v1967 = vmul.f32 %v1839, %v1839
    %v1968 = vmul.f32 %v1840, %v1840
    %v1969 = vmul.f32 %v1841, %v1841
    %v1970 = vmul.f32 %v1842, %v1842
    %v1971 = vmul.f32 %v1843, %v1843
    %v1972 = vmul.f32 %v1844, %v1844
    %v1973 = vmul.f32 %v1845, %v1845
    %v1974 = vmul.f32 %v1846, %v1846
    %v1975 = vmul.f32 %v1847, %v1847
    %v1976 = vmul.f32 %v1848, %v1848
    %v1977 = vmul.f32 %v1849, %v1849
    %v1978 = vmul.f32 %v1850, %v1850
    %v1979 = vmul.f32 %v1851, %v1851
    %v1980 = vmul.f32 %v1852, %v1852
    %v1981 = vmul.f32 %v1853, %v1853
    %v1982 = vmul.f32 %v1854, %v1854
    %v1983 = vmul.f32 %v1855, %v1855
    %v1984 = vmul.f32 %v1856, %v1856
    %v1985 = vmul.f32 %v1857, %v1857
    %v1986 = vmul.f32 %v1858, %v1858
    %v1987 = vmul.f32 %v1859, %v1859
    %v1988 = vmul.f32 %v1860, %v1860
    %v1989 = vmul.f32 %v1861, %v1861
    %v1990 = vmul.f32 %v1862, %v1862
    %v1991 = vmul.f32 %v1863, %v1863
    %v1992 = vmul.f32 %v1864, %v1864
    %v1993 = vmul.f32 %v1865, %v1865
    %v1994 = vmul.f32 %v1866, %v1866
    %v1995 = vmul.f32 %v1867, %v1867
    %v1996 = vmul.f32 %v1868, %v1868
    %v1997 = vmul.f32 %v1869, %v1869
    %v1998 = vmul.f32 %v1870, %v1870
    %v1999 = vmul.f32 %v1871, %v1871
    %v2000 = vmul.f32 %v1872, %v1872
    %v2001 = vmul.f32 %v1873, %v1873
    %v2002 = vmul.f32 %v1874, %v1874
    %v2003 = vmul.f32 %v1875, %v1875
    %v2004 = vmul.f32 %v1876, %v1876
    %v2005 = vmul.f32 %v1877, %v1877
    %v2006 = vmul.f32 %v1878, %v1878
    %v2007 = vmul.f32 %v1879, %v1879
    %v2008 = vmul.f32 %v1880, %v1880
    %v2009 = vmul.f32 %v1881, %v1881
    %v2010 = vmul.f32 %v1882, %v1882
    %v2011 = vmul.f32 %v1883, %v1883
    %v2012 = vmul.f32 %v1884, %v1884
    %v2013 = vmul.f32 %v1885, %v1885
    %v2014 = vmul.f32 %v1886, %v1886
    %v2015 = vmul.f32 %v1887, %v1887
    %v2016 = vmul.f32 %v1888, %v1888
    %v2017 = vmul.f32 %v1889, %v1889
    %v2018 = vmul.f32 %v1890, %v1890
    %v2019 = vmul.f32 %v1891, %v1891
    %v2020 = vmul.f32 %v1892, %v1892
    %v2021 = vmul.f32 %v1893, %v1893
    %v2022 = vmul.f32 %v1894, %v1894
    %v2023 = vmul.f32 %v1895, %v1895
    %v2024 = vmul.f32 %v1896, %v1896
    %v2025 = vmul.f32 %v1897, %v1897
    %v2026 = vmul.f32 %v1898, %v1898
    %v2027 = vmul.f32 %v1899, %v1899
    %v2028 = vmul.f32 %v1900, %v1900
    %v2029 = vmul.f32 %v1901, %v1901
    %v2030 = vmul.f32 %v1902, %v1774
    %v2031 = vmul.f32 %v1903, %v1775
    %v2032 = vmul.f32 %v1904, %v1776
    %v2033 = vmul.f32 %v1905, %v1777
    %v2034 = vmul.f32 %v1906, %v1778
    %v2035 = vmul.f32 %v1907, %v1779
    %v2036 = vmul.f32 %v1908, %v1780
    %v2037 = vmul.f32 %v1909, %v1781
    %v2038 = vmul.f32 %v1910, %v1782
    %v2039 = vmul.f32 %v1911, %v1783
    %v2040 = vmul.f32 %v1912, %v1784
    %v2041 = vmul.f32 %v1913, %v1785
    %v2042 = vmul.f32 %v1914, %v1786
    %v2043 = vmul.f32 %v1915, %v1787
    %v2044 = vmul.f32 %v1916, %v1788
    %v2045 = vmul.f32 %v1917, %v1789
    %v2046 = vmul.f32 %v1918, %v1790
    %v2047 = vmul.f32 %v1919, %v1791
    %v2048 = vmul.f32 %v1920, %v1792
    %v2049 = vmul.f32 %v1921, %v1793
    %v2050 = vmul.f32 %v1922, %v1794
    %v2051 = vmul.f32 %v1923, %v1795
    %v2052 = vmul.f32 %v1924, %v1796
    %v2053 = vmul.f32 %v1925, %v1797
    %v2054 = vmul.f32 %v1926, %v1798
    %v2055 = vmul.f32 %v1927, %v1799
    %v2056 = vmul.f32 %v1928, %v1800
    %v2057 = vmul.f32 %v1929, %v1801
    %v2058 = vmul.f32 %v1930, %v1802
    %v2059 = vmul.f32 %v1931, %v1803
    %v2060 = vmul.f32 %v1932, %v1804
    %v2061 = vmul.f32 %v1933, %v1805
    %v2062 = vmul.f32 %v1934, %v1806
    %v2063 = vmul.f32 %v1935, %v1807
    %v2064 = vmul.f32 %v1936, %v1808
    %v2065 = vmul.f32 %v1937, %v1809
    %v2066 = vmul.f32 %v1938, %v1810
    %v2067 = vmul.f32 %v1939, %v1811
    %v2068 = vmul.f32 %v1940, %v1812
    %v2069 = vmul.f32 %v1941, %v1813
    %v2070 = vmul.f32 %v1942, %v1814
    %v2071 = vmul.f32 %v1943, %v1815
    %v2072 = vmul.f32 %v1944, %v1816
    %v2073 = vmul.f32 %v1945, %v1817
    %v2074 = vmul.f32 %v1946, %v1818
    %v2075 = vmul.f32 %v1947, %v1819
    %v2076 = vmul.f32 %v1948, %v1820
    %v2077 = vmul.f32 %v1949, %v1821
    %v2078 = vmul.f32 %v1950, %v1822
    %v2079 = vmul.f32 %v1951, %v1823
    %v2080 = vmul.f32 %v1952, %v1824
    %v2081 = vmul.f32 %v1953, %v1825
    %v2082 = vmul.f32 %v1954, %v1826
    %v2083 = vmul.f32 %v1955, %v1827
    %v2084 = vmul.f32 %v1956, %v1828
    %v2085 = vmul.f32 %v1957, %v1829
    %v2086 = vmul.f32 %v1958, %v1830
    %v2087 = vmul.f32 %v1959, %v1831
    %v2088 = vmul.f32 %v1960, %v1832
    %v2089 = vmul.f32 %v1961, %v1833
    %v2090 = vmul.f32 %v1962, %v1834
    %v2091 = vmul.f32 %v1963, %v1835
    %v2092 = vmul.f32 %v1964, %v1836
    %v2093 = vmul.f32 %v1965, %v1837
    %v2094 = vmul.f32 %v1966, %v1838
    %v2095 = vmul.f32 %v1967, %v1839
    %v2096 = vmul.f32 %v1968, %v1840
    %v2097 = vmul.f32 %v1969, %v1841
    %v2098 = vmul.f32 %v1970, %v1842
    %v2099 = vmul.f32 %v1971, %v1843
    %v2100 = vmul.f32 %v1972, %v1844
    %v2101 = vmul.f32 %v1973, %v1845
    %v2102 = vmul.f32 %v1974, %v1846
    %v2103 = vmul.f32 %v1975, %v1847
    %v2104 = vmul.f32 %v1976, %v1848
    %v2105 = vmul.f32 %v1977, %v1849
    %v2106 = vmul.f32 %v1978, %v1850
    %v2107 = vmul.f32 %v1979, %v1851
    %v2108 = vmul.f32 %v1980, %v1852
    %v2109 = vmul.f32 %v1981, %v1853
    %v2110 = vmul.f32 %v1982, %v1854
    %v2111 = vmul.f32 %v1983, %v1855
    %v2112 = vmul.f32 %v1984, %v1856
    %v2113 = vmul.f32 %v1985, %v1857
    %v2114 = vmul.f32 %v1986, %v1858
    %v2115 = vmul.f32 %v1987, %v1859
    %v2116 = vmul.f32 %v1988, %v1860
    %v2117 = vmul.f32 %v1989, %v1861
    %v2118 = vmul.f32 %v1990, %v1862
    %v2119 = vmul.f32 %v1991, %v1863
    %v2120 = vmul.f32 %v1992, %v1864
    %v2121 = vmul.f32 %v1993, %v1865
    %v2122 = vmul.f32 %v1994, %v1866
    %v2123 = vmul.f32 %v1995, %v1867
    %v2124 = vmul.f32 %v1996, %v1868
    %v2125 = vmul.f32 %v1997, %v1869
    %v2126 = vmul.f32 %v1998, %v1870
    %v2127 = vmul.f32 %v1999, %v1871
    %v2128 = vmul.f32 %v2000, %v1872
    %v2129 = vmul.f32 %v2001, %v1873
    %v2130 = vmul.f32 %v2002, %v1874
    %v2131 = vmul.f32 %v2003, %v1875
    %v2132 = vmul.f32 %v2004, %v1876
    %v2133 = vmul.f32 %v2005, %v1877
    %v2134 = vmul.f32 %v2006, %v1878
    %v2135 = vmul.f32 %v2007, %v1879
    %v2136 = vmul.f32 %v2008, %v1880
    %v2137 = vmul.f32 %v2009, %v1881
    %v2138 = vmul.f32 %v2010, %v1882
    %v2139 = vmul.f32 %v2011, %v1883
    %v2140 = vmul.f32 %v2012, %v1884
    %v2141 = vmul.f32 %v2013, %v1885
    %v2142 = vmul.f32 %v2014, %v1886
    %v2143 = vmul.f32 %v2015, %v1887
    %v2144 = vmul.f32 %v2016, %v1888
    %v2145 = vmul.f32 %v2017, %v1889
    %v2146 = vmul.f32 %v2018, %v1890
    %v2147 = vmul.f32 %v2019, %v1891
    %v2148 = vmul.f32 %v2020, %v1892
    %v2149 = vmul.f32 %v2021, %v1893
    %v2150 = vmul.f32 %v2022, %v1894
    %v2151 = vmul.f32 %v2023, %v1895
    %v2152 = vmul.f32 %v2024, %v1896
    %v2153 = vmul.f32 %v2025, %v1897
    %v2154 = vmul.f32 %v2026, %v1898
    %v2155 = vmul.f32 %v2027, %v1899
    %v2156 = vmul.f32 %v2028, %v1900
    %v2157 = vmul.f32 %v2029, %v1901
    %v2158 = vadd.f32 %v2030, %v2031
    %v2159 = vadd.f32 %v2158, %v2032
    %v2160 = vadd.f32 %v2159, %v2033
    %v2161 = vadd.f32 %v2160, %v2034
    %v2162 = vadd.f32 %v2161, %v2035
    %v2163 = vadd.f32 %v2162, %v2036
    %v2164 = vadd.f32 %v2163, %v2037
    %v2165 = vrot.slane %v2164, 4
    %v2166 = vadd.f32 %v2164, %v2165
    %v2167 = vrot.slane %v2166, 2
    %v2168 = vadd.f32 %v2166, %v2167
    %v2169 = vrot.slane %v2168, 1
    %v2170 = vadd.f32 %v2168, %v2169
    %v2171 = vadd.f32 %v2038, %v2039
    %v2172 = vadd.f32 %v2171, %v2040
    %v2173 = vadd.f32 %v2172, %v2041
    %v2174 = vadd.f32 %v2173, %v2042
    %v2175 = vadd.f32 %v2174, %v2043
    %v2176 = vadd.f32 %v2175, %v2044
    %v2177 = vadd.f32 %v2176, %v2045
    %v2178 = vrot.slane %v2177, 4
    %v2179 = vadd.f32 %v2177, %v2178
    %v2180 = vrot.slane %v2179, 2
    %v2181 = vadd.f32 %v2179, %v2180
    %v2182 = vrot.slane %v2181, 1
    %v2183 = vadd.f32 %v2181, %v2182
    %v2184 = vadd.f32 %v2046, %v2047
    %v2185 = vadd.f32 %v2184, %v2048
    %v2186 = vadd.f32 %v2185, %v2049
    %v2187 = vadd.f32 %v2186, %v2050
    %v2188 = vadd.f32 %v2187, %v2051
    %v2189 = vadd.f32 %v2188, %v2052
    %v2190 = vadd.f32 %v2189, %v2053
    %v2191 = vrot.slane %v2190, 4
    %v2192 = vadd.f32 %v2190, %v2191
    %v2193 = vrot.slane %v2192, 2
    %v2194 = vadd.f32 %v2192, %v2193
    %v2195 = vrot.slane %v2194, 1
    %v2196 = vadd.f32 %v2194, %v2195
    %v2197 = vadd.f32 %v2054, %v2055
    %v2198 = vadd.f32 %v2197, %v2056
    %v2199 = vadd.f32 %v2198, %v2057
    %v2200 = vadd.f32 %v2199, %v2058
    %v2201 = vadd.f32 %v2200, %v2059
    %v2202 = vadd.f32 %v2201, %v2060
    %v2203 = vadd.f32 %v2202, %v2061
    %v2204 = vrot.slane %v2203, 4
    %v2205 = vadd.f32 %v2203, %v2204
    %v2206 = vrot.slane %v2205, 2
    %v2207 = vadd.f32 %v2205, %v2206
    %v2208 = vrot.slane %v2207, 1
    %v2209 = vadd.f32 %v2207, %v2208
    %v2210 = vadd.f32 %v2062, %v2063
    %v2211 = vadd.f32 %v2210, %v2064
    %v2212 = vadd.f32 %v2211, %v2065
    %v2213 = vadd.f32 %v2212, %v2066
    %v2214 = vadd.f32 %v2213, %v2067
    %v2215 = vadd.f32 %v2214, %v2068
    %v2216 = vadd.f32 %v2215, %v2069
    %v2217 = vrot.slane %v2216, 4
    %v2218 = vadd.f32 %v2216, %v2217
    %v2219 = vrot.slane %v2218, 2
    %v2220 = vadd.f32 %v2218, %v2219
    %v2221 = vrot.slane %v2220, 1
    %v2222 = vadd.f32 %v2220, %v2221
    %v2223 = vadd.f32 %v2070, %v2071
    %v2224 = vadd.f32 %v2223, %v2072
    %v2225 = vadd.f32 %v2224, %v2073
    %v2226 = vadd.f32 %v2225, %v2074
    %v2227 = vadd.f32 %v2226, %v2075
    %v2228 = vadd.f32 %v2227, %v2076
    %v2229 = vadd.f32 %v2228, %v2077
    %v2230 = vrot.slane %v2229, 4
    %v2231 = vadd.f32 %v2229, %v2230
    %v2232 = vrot.slane %v2231, 2
    %v2233 = vadd.f32 %v2231, %v2232
    %v2234 = vrot.slane %v2233, 1
    %v2235 = vadd.f32 %v2233, %v2234
    %v2236 = vadd.f32 %v2078, %v2079
    %v2237 = vadd.f32 %v2236, %v2080
    %v2238 = vadd.f32 %v2237, %v2081
    %v2239 = vadd.f32 %v2238, %v2082
    %v2240 = vadd.f32 %v2239, %v2083
    %v2241 = vadd.f32 %v2240, %v2084
    %v2242 = vadd.f32 %v2241, %v2085
    %v2243 = vrot.slane %v2242, 4
    %v2244 = vadd.f32 %v2242, %v2243
    %v2245 = vrot.slane %v2244, 2
    %v2246 = vadd.f32 %v2244, %v2245
    %v2247 = vrot.slane %v2246, 1
    %v2248 = vadd.f32 %v2246, %v2247
    %v2249 = vadd.f32 %v2086, %v2087
    %v2250 = vadd.f32 %v2249, %v2088
    %v2251 = vadd.f32 %v2250, %v2089
    %v2252 = vadd.f32 %v2251, %v2090
    %v2253 = vadd.f32 %v2252, %v2091
    %v2254 = vadd.f32 %v2253, %v2092
    %v2255 = vadd.f32 %v2254, %v2093
    %v2256 = vrot.slane %v2255, 4
    %v2257 = vadd.f32 %v2255, %v2256
    %v2258 = vrot.slane %v2257, 2
    %v2259 = vadd.f32 %v2257, %v2258
    %v2260 = vrot.slane %v2259, 1
    %v2261 = vadd.f32 %v2259, %v2260
    %v2262 = vadd.f32 %v2094, %v2095
    %v2263 = vadd.f32 %v2262, %v2096
    %v2264 = vadd.f32 %v2263, %v2097
    %v2265 = vadd.f32 %v2264, %v2098
    %v2266 = vadd.f32 %v2265, %v2099
    %v2267 = vadd.f32 %v2266, %v2100
    %v2268 = vadd.f32 %v2267, %v2101
    %v2269 = vrot.slane %v2268, 4
    %v2270 = vadd.f32 %v2268, %v2269
    %v2271 = vrot.slane %v2270, 2
    %v2272 = vadd.f32 %v2270, %v2271
    %v2273 = vrot.slane %v2272, 1
    %v2274 = vadd.f32 %v2272, %v2273
    %v2275 = vadd.f32 %v2102, %v2103
    %v2276 = vadd.f32 %v2275, %v2104
    %v2277 = vadd.f32 %v2276, %v2105
    %v2278 = vadd.f32 %v2277, %v2106
    %v2279 = vadd.f32 %v2278, %v2107
    %v2280 = vadd.f32 %v2279, %v2108
    %v2281 = vadd.f32 %v2280, %v2109
    %v2282 = vrot.slane %v2281, 4
    %v2283 = vadd.f32 %v2281, %v2282
    %v2284 = vrot.slane %v2283, 2
    %v2285 = vadd.f32 %v2283, %v2284
    %v2286 = vrot.slane %v2285, 1
    %v2287 = vadd.f32 %v2285, %v2286
    %v2288 = vadd.f32 %v2110, %v2111
    %v2289 = vadd.f32 %v2288, %v2112
    %v2290 = vadd.f32 %v2289, %v2113
    %v2291 = vadd.f32 %v2290, %v2114
    %v2292 = vadd.f32 %v2291, %v2115
    %v2293 = vadd.f32 %v2292, %v2116
    %v2294 = vadd.f32 %v2293, %v2117
    %v2295 = vrot.slane %v2294, 4
    %v2296 = vadd.f32 %v2294, %v2295
    %v2297 = vrot.slane %v2296, 2
    %v2298 = vadd.f32 %v2296, %v2297
    %v2299 = vrot.slane %v2298, 1
    %v2300 = vadd.f32 %v2298, %v2299
    %v2301 = vadd.f32 %v2118, %v2119
    %v2302 = vadd.f32 %v2301, %v2120
    %v2303 = vadd.f32 %v2302, %v2121
    %v2304 = vadd.f32 %v2303, %v2122
    %v2305 = vadd.f32 %v2304, %v2123
    %v2306 = vadd.f32 %v2305, %v2124
    %v2307 = vadd.f32 %v2306, %v2125
    %v2308 = vrot.slane %v2307, 4
    %v2309 = vadd.f32 %v2307, %v2308
    %v2310 = vrot.slane %v2309, 2
    %v2311 = vadd.f32 %v2309, %v2310
    %v2312 = vrot.slane %v2311, 1
    %v2313 = vadd.f32 %v2311, %v2312
    %v2314 = vadd.f32 %v2126, %v2127
    %v2315 = vadd.f32 %v2314, %v2128
    %v2316 = vadd.f32 %v2315, %v2129
    %v2317 = vadd.f32 %v2316, %v2130
    %v2318 = vadd.f32 %v2317, %v2131
    %v2319 = vadd.f32 %v2318, %v2132
    %v2320 = vadd.f32 %v2319, %v2133
    %v2321 = vrot.slane %v2320, 4
    %v2322 = vadd.f32 %v2320, %v2321
    %v2323 = vrot.slane %v2322, 2
    %v2324 = vadd.f32 %v2322, %v2323
    %v2325 = vrot.slane %v2324, 1
    %v2326 = vadd.f32 %v2324, %v2325
    %v2327 = vadd.f32 %v2134, %v2135
    %v2328 = vadd.f32 %v2327, %v2136
    %v2329 = vadd.f32 %v2328, %v2137
    %v2330 = vadd.f32 %v2329, %v2138
    %v2331 = vadd.f32 %v2330, %v2139
    %v2332 = vadd.f32 %v2331, %v2140
    %v2333 = vadd.f32 %v2332, %v2141
    %v2334 = vrot.slane %v2333, 4
    %v2335 = vadd.f32 %v2333, %v2334
    %v2336 = vrot.slane %v2335, 2
    %v2337 = vadd.f32 %v2335, %v2336
    %v2338 = vrot.slane %v2337, 1
    %v2339 = vadd.f32 %v2337, %v2338
    %v2340 = vadd.f32 %v2142, %v2143
    %v2341 = vadd.f32 %v2340, %v2144
    %v2342 = vadd.f32 %v2341, %v2145
    %v2343 = vadd.f32 %v2342, %v2146
    %v2344 = vadd.f32 %v2343, %v2147
    %v2345 = vadd.f32 %v2344, %v2148
    %v2346 = vadd.f32 %v2345, %v2149
    %v2347 = vrot.slane %v2346, 4
    %v2348 = vadd.f32 %v2346, %v2347
    %v2349 = vrot.slane %v2348, 2
    %v2350 = vadd.f32 %v2348, %v2349
    %v2351 = vrot.slane %v2350, 1
    %v2352 = vadd.f32 %v2350, %v2351
    %v2353 = vadd.f32 %v2150, %v2151
    %v2354 = vadd.f32 %v2353, %v2152
    %v2355 = vadd.f32 %v2354, %v2153
    %v2356 = vadd.f32 %v2355, %v2154
    %v2357 = vadd.f32 %v2356, %v2155
    %v2358 = vadd.f32 %v2357, %v2156
    %v2359 = vadd.f32 %v2358, %v2157
    %v2360 = vrot.slane %v2359, 4
    %v2361 = vadd.f32 %v2359, %v2360
    %v2362 = vrot.slane %v2361, 2
    %v2363 = vadd.f32 %v2361, %v2362
    %v2364 = vrot.slane %v2363, 1
    %v2365 = vadd.f32 %v2363, %v2364
    %v2366 = vrcp.pop 64.0
    %v2367 = vmul.f32 %v2170, %v2366
    %v2368 = vmul.f32 %v2183, %v2366
    %v2369 = vmul.f32 %v2196, %v2366
    %v2370 = vmul.f32 %v2209, %v2366
    %v2371 = vmul.f32 %v2222, %v2366
    %v2372 = vmul.f32 %v2235, %v2366
    %v2373 = vmul.f32 %v2248, %v2366
    %v2374 = vmul.f32 %v2261, %v2366
    %v2375 = vmul.f32 %v2274, %v2366
    %v2376 = vmul.f32 %v2287, %v2366
    %v2377 = vmul.f32 %v2300, %v2366
    %v2378 = vmul.f32 %v2313, %v2366
    %v2379 = vmul.f32 %v2326, %v2366
    %v2380 = vmul.f32 %v2339, %v2366
    %v2381 = vmul.f32 %v2352, %v2366
    %v2382 = vmul.f32 %v2365, %v2366
    %v2383 = vpow.f32 %v2367, 0.33333334
    %v2384 = vpow.f32 %v2368, 0.33333334
    %v2385 = vpow.f32 %v2369, 0.33333334
    %v2386 = vpow.f32 %v2370, 0.33333334
    %v2387 = vpow.f32 %v2371, 0.33333334
    %v2388 = vpow.f32 %v2372, 0.33333334
    %v2389 = vpow.f32 %v2373, 0.33333334
    %v2390 = vpow.f32 %v2374, 0.33333334
    %v2391 = vpow.f32 %v2375, 0.33333334
    %v2392 = vpow.f32 %v2376, 0.33333334
    %v2393 = vpow.f32 %v2377, 0.33333334
    %v2394 = vpow.f32 %v2378, 0.33333334
    %v2395 = vpow.f32 %v2379, 0.33333334
    %v2396 = vpow.f32 %v2380, 0.33333334
    %v2397 = vpow.f32 %v2381, 0.33333334
    %v2398 = vpow.f32 %v2382, 0.33333334
    %v2399 = vlaneseq
    %v2400 = vand.u32 %v2399, 127
    %vm2401 = vcmp.lt.s32.totalorder %v2400, 32
    %vm2418 = vcmask 1041409
    %v2419 = vsel %vm2418, %v2384, %v2383
    %vm2420 = vcmask 1042434
    %v2421 = vsel %vm2420, %v2385, %v2419
    %vm2422 = vcmask 1043459
    %v2423 = vsel %vm2422, %v2386, %v2421
    %vm2424 = vcmask 1044484
    %v2425 = vsel %vm2424, %v2387, %v2423
    %vm2426 = vcmask 1045509
    %v2427 = vsel %vm2426, %v2388, %v2425
    %vm2428 = vcmask 1046534
    %v2429 = vsel %vm2428, %v2389, %v2427
    %vm2430 = vcmask 1047559
    %v2431 = vsel %vm2430, %v2390, %v2429
    %v2432 = vsel %vm2418, %v2392, %v2391
    %v2433 = vsel %vm2420, %v2393, %v2432
    %v2434 = vsel %vm2422, %v2394, %v2433
    %v2435 = vsel %vm2424, %v2395, %v2434
    %v2436 = vsel %vm2426, %v2396, %v2435
    %v2437 = vsel %vm2428, %v2397, %v2436
    %v2438 = vsel %vm2430, %v2398, %v2437
    %v2441 = vsel %vm2401, %v2431, 0.0
    %v2442 = vsel %vm2401, %v2438, 0.0
    %v2443 = vmul.f32 %v2441, %v2441
    %v2444 = vmul.f32 %v2442, %v2442
    %2445 = vadd.xlane.f32.xlu0 %v2443
    %v2446 = vpop.xlane.xlu0 %2445
    %2447 = vadd.xlane.f32.xlu0 %v2444
    %v2448 = vpop.xlane.xlu0 %2447
    %v2449 = vadd.f32 %v2446, 1e-12
    %v2450 = vadd.f32 %v2448, 1e-12
    %v2451 = vrsqrt.pop %v2449
    %v2452 = vrsqrt.pop %v2450
    %v2453 = vmul.f32 %v2441, %v2451
    %v2454 = vmul.f32 %v2442, %v2452
    %2455 = vst [vmem:[#allocation8] sm:$0xff] %v2453
    %2456 = vst [vmem:[#allocation8 + $0x8] sm:$0xff] %v2454
    // Predicated region
    $region34: #{tpu_custom_call.1} parent=1 // pred_check
      _
    $region35: #{tpu_custom_call.1} parent=1 // pred_check_branch
      %2458 = sbr.rel (0) target = $region37
    $region36: #{tpu_custom_call.1} parent=1 // pred_region
      %s2460 = ssub.s32 256, 256
      %2461 = vsyncadd [#allocation4], %s2460
      %s2462 = sshll.u32 [#allocation8], 4
      %s2463 = int_to_ptr.vmem [resolvable:$true] %s2462
      %2468 = dma.vmem_to_hbm [thread:$0]  %s2463, 256, %s5, [#allocation4], 128, 128, 8
    $region37: #{tpu_custom_call.1} parent=1 // pred_fallthru
      _
    // Predicated region
    $region38: #{tpu_custom_call.1} parent=1 // pred_check
      _
    $region39: #{tpu_custom_call.1} parent=1 // pred_check_branch
      %2470 = sbr.rel (0) target = $region41
    $region40: #{tpu_custom_call.1} parent=1 // pred_region
      %2471 = dma.done [#allocation4], 256
    $region41: #{tpu_custom_call.1} parent=1 // pred_fallthru
      _
    %2472 = vsyncpa [#allocation3], 1
    %2473 = vsyncpa [#allocation6], 1
    %2474 = vsyncpa [#allocation4], 1

</llo_original>
